<compile_context>
chip_gen: v6e
topology: v6e:2x2x1
jax: 0.10.0
libtpu: 0.0.40
codegen_flags: <defaults>
</compile_context>

<pallas_src>
import functools

import jax
import jax.numpy as jnp
from jax.experimental import pallas as pl
from jax.experimental.pallas import tpu as pltpu

C_PAD = 128  # lane-dense width of the fused backbone output slab


# ---------------------------------------------------------------------------
# Kernel 1: fused backbone + generator head.
#   out[:,  0:cl           ] = x @ wl + bl                        (logits)
#   out[:, cl:cl+cg        ] = relu(x @ wg + bg)                  (generator feats)
#   out[:, cl+cg:cl+cg+cr  ] = relu(x @ wr + br)                  (rewarder feats)
#   out[:, gc0:gc0+cl      ] = relu(x @ wg + bg) @ w_gen + b_gen  (generate cube)
# Head weights are packed column-wise into one (Cin, 128) slab so a single
# lane-dense MXU matmul produces everything; biases are added in-kernel
# (VPU broadcast add, no augmented-input array needed).
# ---------------------------------------------------------------------------
def backbone_kernel(x_ref, w_ref, b_ref, wg_ref, bg_ref, wgen_pad_ref,
                    out_ref, *, cl, cg, cr):
    x = x_ref[...]                                               # (TM, Cin)
    # one lane-dense MXU matmul -> [logits | gen | rew | (b_gen) | zeros]
    h = jnp.dot(x, w_ref[...], preferred_element_type=jnp.float32) + b_ref[...]
    col = jax.lax.broadcasted_iota(jnp.int32, h.shape, 1)
    relu_cols = jnp.logical_and(col >= cl, col < cl + cg + cr)
    h = jnp.where(relu_cols, jnp.maximum(h, 0.0), h)
    # fused generator head (tiny in-register matmul, never touches HBM twice)
    g = jnp.maximum(
        jnp.dot(x, wg_ref[...], preferred_element_type=jnp.float32)
        + bg_ref[...], 0.0)
    out_ref[...] = h + jnp.dot(g, wgen_pad_ref[...],
                               preferred_element_type=jnp.float32)


def backbone_pallas(rows, w_pack, b_pack, wg, bg, wgen_pad, *, cl, cg, cr, tm):
    n, cin = rows.shape
    assert n % tm == 0 and tm % 8 == 0
    kernel = functools.partial(backbone_kernel, cl=cl, cg=cg, cr=cr)
    return pl.pallas_call(
        kernel,
        out_shape=jax.ShapeDtypeStruct((n, C_PAD), jnp.float32),
        grid=(n // tm,),
        in_specs=[pl.BlockSpec((tm, cin), lambda i: (i, 0)),
                  pl.BlockSpec((cin, C_PAD), lambda i: (0, 0)),
                  pl.BlockSpec((1, C_PAD), lambda i: (0, 0)),
                  pl.BlockSpec((cin, cg), lambda i: (0, 0)),
                  pl.BlockSpec((1, cg), lambda i: (0, 0)),
                  pl.BlockSpec((cg, C_PAD), lambda i: (0, 0))],
        out_specs=pl.BlockSpec((tm, C_PAD), lambda i: (i, 0)),
        compiler_params=pltpu.CompilerParams(
            dimension_semantics=("parallel",)),
    )(rows, w_pack, b_pack, wg, bg, wgen_pad)


# ---------------------------------------------------------------------------
# Kernel 2: masked-MSE reduction (the synthesized lambda_loss), single block:
#           sum((pred - tgt)^2 * [tgt != -999]) and the valid-element count.
# ---------------------------------------------------------------------------
def masked_mse_kernel(pred_ref, tgt_ref, sum_ref, cnt_ref):
    p = pred_ref[...]
    t = tgt_ref[...]
    mask = (t != -999.0).astype(jnp.float32)   # exact f32 sentinel compare
    d = (p - t) * mask
    sum_ref[...] = jnp.zeros_like(sum_ref) + jnp.sum(d * d)
    cnt_ref[...] = jnp.zeros_like(cnt_ref) + jnp.sum(mask)


def masked_mse_pallas(pred_flat, tgt_flat):
    r, c = pred_flat.shape
    s, n = pl.pallas_call(
        masked_mse_kernel,
        out_shape=(jax.ShapeDtypeStruct((1, 1), jnp.float32),
                   jax.ShapeDtypeStruct((1, 1), jnp.float32)),
        grid=(1,),
        in_specs=[pl.BlockSpec((r, c), lambda i: (0, 0)),
                  pl.BlockSpec((r, c), lambda i: (0, 0))],
        out_specs=(pl.BlockSpec((1, 1), lambda i: (0, 0)),
                   pl.BlockSpec((1, 1), lambda i: (0, 0))),
    )(pred_flat, tgt_flat)
    return s[0, 0] / jnp.maximum(n[0, 0], 1.0)


# ---------------------------------------------------------------------------
# layout / packing helpers (glue)
# ---------------------------------------------------------------------------
def nchw_to_rows(x):                       # (B,C,H,W) -> (B*H*W, C)
    b, c, h, w = x.shape
    return jnp.transpose(x, (0, 2, 3, 1)).reshape(b * h * w, c)


def pack_backbone_params(params, cin, cl, cg, cr):
    """Pack the three head weights + biases (+ generator head) into lane-dense slabs."""
    c_log = params["w_gen"].shape[1]
    gc0 = cl + cg + cr
    w_pack = jnp.zeros((cin, C_PAD), jnp.float32)
    w_pack = w_pack.at[:, 0:cl].set(params["wl"])
    w_pack = w_pack.at[:, cl:cl + cg].set(params["wg"])
    w_pack = w_pack.at[:, cl + cg:gc0].set(params["wr"])
    b_pack = jnp.zeros((1, C_PAD), jnp.float32)
    b_pack = b_pack.at[:, 0:cl].set(params["bl"])
    b_pack = b_pack.at[:, cl:cl + cg].set(params["bg"])
    b_pack = b_pack.at[:, cl + cg:gc0].set(params["br"])
    b_pack = b_pack.at[:, gc0:gc0 + c_log].set(params["b_gen"])  # generator outer bias
    wgen_pad = jnp.zeros((cg, C_PAD), jnp.float32)
    wgen_pad = wgen_pad.at[:, gc0:gc0 + c_log].set(params["w_gen"])
    return w_pack, b_pack, wgen_pad


# ---------------------------------------------------------------------------
# FixMatch forward
# ---------------------------------------------------------------------------
@functools.partial(jax.jit,
                   static_argnames=("epoch", "batch_size", "start_timing"))
def fixmatch_forward(params, x, log_cube, *, epoch, batch_size, start_timing):
    b, cin, h, w = x.shape
    cl = params["wl"].shape[1]
    cg = params["wg"].shape[1]
    cr = params["wr"].shape[1]
    c_log = cl
    gc0 = cl + cg + cr
    assert gc0 + c_log <= C_PAD

    n = b * h * w
    n_lb = batch_size * h * w

    # ---- backbone + fused generator head (Pallas kernel 1) --------------
    rows = nchw_to_rows(x)                                       # (N, Cin)
    w_pack, b_pack, wgen_pad = pack_backbone_params(params, cin, cl, cg, cr)
    # two parallel grid steps: trivial overhead on v5e/v6e, feeds both TCs on v7x
    tm = n // 2 if (n % 2 == 0 and (n // 2) % 8 == 0) else n
    slab = backbone_pallas(rows, w_pack, b_pack, params["wg"], params["bg"],
                           wgen_pad, cl=cl, cg=cg, cr=cr, tm=tm)  # (N, 128)

    logits_rows = slab[:, 0:cl]                       # "outputs"
    rew_rows = slab[:, cl + cg:gc0]                   # "x_torewarder"
    gencube_rows = slab[:, gc0:gc0 + c_log]           # generator(gen_feats)

    # ---- chunking exactly as in the reference (rows are b-major) --------
    logits_lb_rows = logits_rows[:n_lb]
    logits_ulb_w_rows, logits_ulb_s_rows = jnp.split(logits_rows[n_lb:], 2, axis=0)
    probs_x_ulb_w = jax.lax.stop_gradient(logits_ulb_w_rows)     # .detach()
    _ = (logits_ulb_s_rows, probs_x_ulb_w)   # unused downstream (matches reference)
    # flatten(start_dim=1) of rewarder features; element order is (h,w,c) instead
    # of torch's (c,h,w) — equivalent since the Rewarder weights are synthesized.
    torewarder_x_lb = rew_rows[:n_lb].reshape(batch_size, h * w * cr)

    # logCube to rows layout once (only boundary transpose needed)
    log_cube_rows = jnp.transpose(log_cube[:, 0], (0, 2, 3, 1)).reshape(n_lb, c_log)

    # ---- supervised loss (Pallas kernel 2, masked MSE vs logCube) -------
    total = n_lb * c_log
    assert total % 128 == 0
    sup_loss = masked_mse_pallas(
        logits_lb_rows.reshape(total // 128, 128),
        log_cube_rows.reshape(total // 128, 128))

    # ---- epoch > 0 branch (generator / rewarder forward passes) ---------
    if epoch > 0:
        gencube_lb_rows = jax.lax.stop_gradient(gencube_rows[:n_lb])   # .detach()

        # vectorized find_valid_coordinates: first (a,b) whose channel-mean != -999
        avg = jnp.mean(log_cube_rows.reshape(batch_size, h * w, c_log), axis=2)
        pix = jnp.argmax(avg != -999.0, axis=1)          # row-major first valid
        row_idx = jnp.arange(batch_size) * (h * w) + pix
        real_labels = log_cube_rows[row_idx]             # (B_lb, C_log)
        generated_labels = gencube_lb_rows[row_idx]      # (B_lb, C_log)

        feat = jnp.concatenate(
            [jax.lax.stop_gradient(torewarder_x_lb), generated_labels], axis=1)
        reward = jax.nn.sigmoid(feat @ params["w_rewarder"] + params["b_rewarder"])

        if epoch < start_timing:
            num = jnp.sum(generated_labels * real_labels, axis=1)
            den = (jnp.linalg.norm(generated_labels, axis=1)
                   * jnp.linalg.norm(real_labels, axis=1))
            cos = num / jnp.maximum(den, 1e-8)
            cos_score = ((cos + 1.0) / 2.0).reshape(-1, 1)
            generator_loss = jnp.mean((reward - jnp.ones_like(reward)) ** 2)
            rewarder_loss = jnp.mean((reward - cos_score) ** 2)
            # TODO(synk): .backward() + Adam optimizer steps on rewarder/generator
            # have no forward-pass Pallas equivalent; losses computed, not applied.
            del generator_loss, rewarder_loss

    # TODO(synk): `unsup_loss` is undefined in the reference forward (NameError);
    # treated as 0.0 here.
    unsup_loss = jnp.float32(0.0)
    total_loss = sup_loss + unsup_loss
    return total_loss, sup_loss, unsup_loss


# ---------------------------------------------------------------------------
# deterministic parameter construction (synthesized backbone / heads)
# ---------------------------------------------------------------------------
def make_params(key, cin, c_log, c_gen, c_rew, h, w):
    ks = jax.random.split(key, 6)
    return {
        "wl": 0.1 * jax.random.normal(ks[0], (cin, c_log), jnp.float32),
        "bl": jnp.zeros((1, c_log), jnp.float32),
        "wg": 0.1 * jax.random.normal(ks[1], (cin, c_gen), jnp.float32),
        "bg": jnp.zeros((1, c_gen), jnp.float32),
        "wr": 0.1 * jax.random.normal(ks[2], (cin, c_rew), jnp.float32),
        "br": jnp.zeros((1, c_rew), jnp.float32),
        # Generator head: per-pixel features -> cube channels
        "w_gen": 0.1 * jax.random.normal(ks[3], (c_gen, c_log), jnp.float32),
        "b_gen": jnp.zeros((1, c_log), jnp.float32),
        # Rewarder: [flattened rewarder feats ; generated label] -> scalar reward
        "w_rewarder": 0.01 * jax.random.normal(
            ks[4], (c_rew * h * w + c_log, 1), jnp.float32),
        "b_rewarder": jnp.zeros((1,), jnp.float32),
    }


if __name__ == "__main__":
    batch_size = 2          # labeled batch
    n_ulb = 2               # unlabeled pairs (weak + strong)
    B_total = batch_size + 2 * n_ulb        # 6
    Cin, H, W = 4, 16, 16
    C_log, C_gen, C_rew = 4, 8, 8
    start_timing, epoch = 5, 1

    key = jax.random.PRNGKey(0)
    kx, kc, kp = jax.random.split(key, 3)

    x = jax.random.normal(kx, (B_total, Cin, H, W), jnp.float32)

    # logCube: mostly -999 (invalid), with one valid well-log column at (3, 5)
    log_cube = jnp.full((batch_size, 1, C_log, H, W), -999.0, jnp.float32)
    log_vals = jax.random.normal(kc, (batch_size, 1, C_log), jnp.float32)
    log_cube = log_cube.at[:, :, :, 3, 5].set(log_vals)

    params = make_params(kp, Cin, C_log, C_gen, C_rew, H, W)

    total_loss, sup_loss, unsup_loss = fixmatch_forward(
        params, x, log_cube,
        epoch=epoch, batch_size=batch_size, start_timing=start_timing)

    jax.block_until_ready(total_loss)
    jax.block_until_ready(sup_loss)
    jax.block_until_ready(unsup_loss)
    print("KERNEL_OK")
</pallas_src>

<mosaic_0001>
module attributes {stable_mosaic.version = 11 : i64} {
  func.func @backbone_kernel(%arg0: i32, %arg1: memref<768x4xf32, #tpu.memory_space<vmem>>, %arg2: memref<4x128xf32, #tpu.memory_space<vmem>>, %arg3: memref<1x128xf32, #tpu.memory_space<vmem>>, %arg4: memref<4x8xf32, #tpu.memory_space<vmem>>, %arg5: memref<1x8xf32, #tpu.memory_space<vmem>>, %arg6: memref<8x128xf32, #tpu.memory_space<vmem>>, %arg7: memref<768x128xf32, #tpu.memory_space<vmem>>) attributes {dimension_semantics = [#tpu.dimension_semantics<parallel>], iteration_bounds = array<i64: 2>, scalar_prefetch = 0 : i64, scratch_operands = 0 : i64, tpu.core_type = #tpu.core_type<tc>, window_params = [{transform_indices = @transform_0, window_bounds = array<i64: 768, 4>}, {pipeline_mode = #tpu.pipeline_mode<synchronous>, transform_indices = @transform_1, window_bounds = array<i64: 4, 128>}, {pipeline_mode = #tpu.pipeline_mode<synchronous>, transform_indices = @transform_2, window_bounds = array<i64: 1, 128>}, {pipeline_mode = #tpu.pipeline_mode<synchronous>, transform_indices = @transform_3, window_bounds = array<i64: 4, 8>}, {pipeline_mode = #tpu.pipeline_mode<synchronous>, transform_indices = @transform_4, window_bounds = array<i64: 1, 8>}, {pipeline_mode = #tpu.pipeline_mode<synchronous>, transform_indices = @transform_5, window_bounds = array<i64: 8, 128>}, {transform_indices = @transform_6, window_bounds = array<i64: 768, 128>}]} {
    %c0 = arith.constant 0 : index
    %c0_0 = arith.constant 0 : index
    %0 = vector.load %arg1[%c0, %c0_0] : memref<768x4xf32, #tpu.memory_space<vmem>>, vector<768x4xf32>
    %c0_1 = arith.constant 0 : index
    %c0_2 = arith.constant 0 : index
    %1 = vector.load %arg2[%c0_1, %c0_2] : memref<4x128xf32, #tpu.memory_space<vmem>>, vector<4x128xf32>
    %cst = arith.constant dense<0.000000e+00> : vector<768x128xf32>
    %2 = tpu.matmul %0, %1, %cst {dimension_numbers = #tpu.dot_dimension_numbers<[1], [0], [0], [1], [0, 0, 1, 1], [], []>} : vector<768x4xf32>, vector<4x128xf32>, vector<768x128xf32> -> vector<768x128xf32>
    %c0_3 = arith.constant 0 : index
    %c0_4 = arith.constant 0 : index
    %3 = vector.load %arg3[%c0_3, %c0_4] : memref<1x128xf32, #tpu.memory_space<vmem>>, vector<1x128xf32>
    %4 = vector.broadcast %3 : vector<1x128xf32> to vector<768x128xf32>
    %5 = arith.addf %2, %4 : vector<768x128xf32>
    %6 = tpu.iota {dimensions = array<i32: 1>} : vector<768x128xi32>
    %c4_i32 = arith.constant 4 : i32
    %7 = vector.broadcast %c4_i32 : i32 to vector<768x128xi32>
    %8 = arith.cmpi sge, %6, %7 : vector<768x128xi32>
    %c20_i32 = arith.constant 20 : i32
    %9 = vector.broadcast %c20_i32 : i32 to vector<768x128xi32>
    %10 = arith.cmpi slt, %6, %9 : vector<768x128xi32>
    %11 = arith.andi %8, %10 : vector<768x128xi1>
    %cst_5 = arith.constant 0.000000e+00 : f32
    %12 = vector.broadcast %cst_5 : f32 to vector<768x128xf32>
    %13 = arith.maximumf %5, %12 : vector<768x128xf32>
    %14 = arith.select %11, %13, %5 : vector<768x128xi1>, vector<768x128xf32>
    %c0_6 = arith.constant 0 : index
    %c0_7 = arith.constant 0 : index
    %15 = vector.load %arg4[%c0_6, %c0_7] : memref<4x8xf32, #tpu.memory_space<vmem>>, vector<4x8xf32>
    %cst_8 = arith.constant dense<0.000000e+00> : vector<768x8xf32>
    %16 = tpu.matmul %0, %15, %cst_8 {dimension_numbers = #tpu.dot_dimension_numbers<[1], [0], [0], [1], [0, 0, 1, 1], [], []>} : vector<768x4xf32>, vector<4x8xf32>, vector<768x8xf32> -> vector<768x8xf32>
    %c0_9 = arith.constant 0 : index
    %c0_10 = arith.constant 0 : index
    %17 = vector.load %arg5[%c0_9, %c0_10] : memref<1x8xf32, #tpu.memory_space<vmem>>, vector<1x8xf32>
    %18 = vector.broadcast %17 : vector<1x8xf32> to vector<768x8xf32>
    %19 = arith.addf %16, %18 : vector<768x8xf32>
    %cst_11 = arith.constant 0.000000e+00 : f32
    %20 = vector.broadcast %cst_11 : f32 to vector<768x8xf32>
    %21 = arith.maximumf %19, %20 : vector<768x8xf32>
    %c0_12 = arith.constant 0 : index
    %c0_13 = arith.constant 0 : index
    %22 = vector.load %arg6[%c0_12, %c0_13] : memref<8x128xf32, #tpu.memory_space<vmem>>, vector<8x128xf32>
    %cst_14 = arith.constant dense<0.000000e+00> : vector<768x128xf32>
    %23 = tpu.matmul %21, %22, %cst_14 {dimension_numbers = #tpu.dot_dimension_numbers<[1], [0], [0], [1], [0, 0, 1, 1], [], []>} : vector<768x8xf32>, vector<8x128xf32>, vector<768x128xf32> -> vector<768x128xf32>
    %24 = arith.addf %14, %23 : vector<768x128xf32>
    %c0_15 = arith.constant 0 : index
    %c0_16 = arith.constant 0 : index
    %25 = vector.load %arg7[%c0_15, %c0_16] : memref<768x128xf32, #tpu.memory_space<vmem>>, vector<768x128xf32>
    tpu.vector_store %arg7[%c0_15, %c0_16], %24 {strides = array<i32>} : memref<768x128xf32, #tpu.memory_space<vmem>>, vector<768x128xf32>,
    return
  }
  func.func @transform_0(%arg0: i32) -> (i32, i32) {
    %c0_i32 = arith.constant 0 : i32
    %c0_i32_0 = arith.constant 0 : i32
    return %arg0, %c0_i32 : i32, i32
  }
  func.func @transform_1(%arg0: i32) -> (i32, i32) {
    %c0_i32 = arith.constant 0 : i32
    %c0_i32_0 = arith.constant 0 : i32
    %c0_i32_1 = arith.constant 0 : i32
    return %c0_i32, %c0_i32_0 : i32, i32
  }
  func.func @transform_2(%arg0: i32) -> (i32, i32) {
    %c0_i32 = arith.constant 0 : i32
    %c0_i32_0 = arith.constant 0 : i32
    %c0_i32_1 = arith.constant 0 : i32
    return %c0_i32, %c0_i32_0 : i32, i32
  }
  func.func @transform_3(%arg0: i32) -> (i32, i32) {
    %c0_i32 = arith.constant 0 : i32
    %c0_i32_0 = arith.constant 0 : i32
    %c0_i32_1 = arith.constant 0 : i32
    return %c0_i32, %c0_i32_0 : i32, i32
  }
  func.func @transform_4(%arg0: i32) -> (i32, i32) {
    %c0_i32 = arith.constant 0 : i32
    %c0_i32_0 = arith.constant 0 : i32
    %c0_i32_1 = arith.constant 0 : i32
    return %c0_i32, %c0_i32_0 : i32, i32
  }
  func.func @transform_5(%arg0: i32) -> (i32, i32) {
    %c0_i32 = arith.constant 0 : i32
    %c0_i32_0 = arith.constant 0 : i32
    %c0_i32_1 = arith.constant 0 : i32
    return %c0_i32, %c0_i32_0 : i32, i32
  }
  func.func @transform_6(%arg0: i32) -> (i32, i32) {
    %c0_i32 = arith.constant 0 : i32
    %c0_i32_0 = arith.constant 0 : i32
    return %arg0, %c0_i32 : i32, i32
  }
}

module attributes {stable_mosaic.version = 11 : i64} {
  func.func @masked_mse_kernel(%arg0: i32, %arg1: memref<16x128xf32, #tpu.memory_space<vmem>>, %arg2: memref<16x128xf32, #tpu.memory_space<vmem>>, %arg3: memref<1x1xf32, #tpu.memory_space<vmem>>, %arg4: memref<1x1xf32, #tpu.memory_space<vmem>>) attributes {dimension_semantics = [#tpu.dimension_semantics<arbitrary>], iteration_bounds = array<i64: 1>, scalar_prefetch = 0 : i64, scratch_operands = 0 : i64, tpu.core_type = #tpu.core_type<tc>, window_params = [{pipeline_mode = #tpu.pipeline_mode<synchronous>, transform_indices = @transform_0, window_bounds = array<i64: 16, 128>}, {pipeline_mode = #tpu.pipeline_mode<synchronous>, transform_indices = @transform_1, window_bounds = array<i64: 16, 128>}, {pipeline_mode = #tpu.pipeline_mode<synchronous>, transform_indices = @transform_2, window_bounds = array<i64: 1, 1>}, {pipeline_mode = #tpu.pipeline_mode<synchronous>, transform_indices = @transform_3, window_bounds = array<i64: 1, 1>}]} {
    %c0 = arith.constant 0 : index
    %c0_0 = arith.constant 0 : index
    %0 = vector.load %arg1[%c0, %c0_0] : memref<16x128xf32, #tpu.memory_space<vmem>>, vector<16x128xf32>
    %c0_1 = arith.constant 0 : index
    %c0_2 = arith.constant 0 : index
    %1 = vector.load %arg2[%c0_1, %c0_2] : memref<16x128xf32, #tpu.memory_space<vmem>>, vector<16x128xf32>
    %cst = arith.constant -9.990000e+02 : f32
    %2 = vector.broadcast %cst : f32 to vector<16x128xf32>
    %3 = arith.cmpf one, %1, %2 : vector<16x128xf32>
    %4 = arith.extui %3 : vector<16x128xi1> to vector<16x128xi32>
    %5 = arith.sitofp %4 : vector<16x128xi32> to vector<16x128xf32>
    %6 = arith.subf %0, %1 : vector<16x128xf32>
    %7 = arith.mulf %6, %5 : vector<16x128xf32>
    %cst_3 = arith.constant 0.000000e+00 : f32
    %8 = vector.broadcast %cst_3 : f32 to vector<1x1xf32>
    %9 = arith.mulf %7, %7 : vector<16x128xf32>
    %10 = vector.shape_cast %9 : vector<16x128xf32> to vector<1x16x128xf32>
    %cst_4 = arith.constant dense<0.000000e+00> : vector<1xf32>
    %11 = vector.multi_reduction <add>, %10, %cst_4 [1, 2] : vector<1x16x128xf32> to vector<1xf32>
    %12 = vector.shape_cast %11 : vector<1xf32> to vector<1x1x1xf32>
    %13 = vector.extract %12[0, 0, 0] : f32 from vector<1x1x1xf32>
    %14 = vector.broadcast %13 : f32 to vector<1x1xf32>
    %15 = arith.addf %8, %14 : vector<1x1xf32>
    %c0_5 = arith.constant 0 : index
    %c0_6 = arith.constant 0 : index
    %16 = vector.load %arg3[%c0_5, %c0_6] : memref<1x1xf32, #tpu.memory_space<vmem>>, vector<1x1xf32>
    tpu.vector_store %arg3[%c0_5, %c0_6], %15 {strides = array<i32>} : memref<1x1xf32, #tpu.memory_space<vmem>>, vector<1x1xf32>,
    %cst_7 = arith.constant 0.000000e+00 : f32
    %17 = vector.broadcast %cst_7 : f32 to vector<1x1xf32>
    %18 = vector.shape_cast %5 : vector<16x128xf32> to vector<1x16x128xf32>
    %cst_8 = arith.constant dense<0.000000e+00> : vector<1xf32>
    %19 = vector.multi_reduction <add>, %18, %cst_8 [1, 2] : vector<1x16x128xf32> to vector<1xf32>
    %20 = vector.shape_cast %19 : vector<1xf32> to vector<1x1x1xf32>
    %21 = vector.extract %20[0, 0, 0] : f32 from vector<1x1x1xf32>
    %22 = vector.broadcast %21 : f32 to vector<1x1xf32>
    %23 = arith.addf %17, %22 : vector<1x1xf32>
    %c0_9 = arith.constant 0 : index
    %c0_10 = arith.constant 0 : index
    %24 = vector.load %arg4[%c0_9, %c0_10] : memref<1x1xf32, #tpu.memory_space<vmem>>, vector<1x1xf32>
    tpu.vector_store %arg4[%c0_9, %c0_10], %23 {strides = array<i32>} : memref<1x1xf32, #tpu.memory_space<vmem>>, vector<1x1xf32>,
    return
  }
  func.func @transform_0(%arg0: i32) -> (i32, i32) {
    %c0_i32 = arith.constant 0 : i32
    %c0_i32_0 = arith.constant 0 : i32
    %c0_i32_1 = arith.constant 0 : i32
    return %c0_i32, %c0_i32_0 : i32, i32
  }
  func.func @transform_1(%arg0: i32) -> (i32, i32) {
    %c0_i32 = arith.constant 0 : i32
    %c0_i32_0 = arith.constant 0 : i32
    %c0_i32_1 = arith.constant 0 : i32
    return %c0_i32, %c0_i32_0 : i32, i32
  }
  func.func @transform_2(%arg0: i32) -> (i32, i32) {
    %c0_i32 = arith.constant 0 : i32
    %c0_i32_0 = arith.constant 0 : i32
    %c0_i32_1 = arith.constant 0 : i32
    return %c0_i32, %c0_i32_0 : i32, i32
  }
  func.func @transform_3(%arg0: i32) -> (i32, i32) {
    %c0_i32 = arith.constant 0 : i32
    %c0_i32_0 = arith.constant 0 : i32
    %c0_i32_1 = arith.constant 0 : i32
    return %c0_i32, %c0_i32_0 : i32, i32
  }
}

</mosaic_0001>

<llo_original>
// kernel: fixmatch_forward.3
$region0: #{fixmatch_forward.3}
  #allocation0 [shape = 'u32[]', space=smem, size = 0x4, offset = 0x4, fixed_abs, tag = 'smem constant byte address 0x4 - core index']
  #allocation1 [shape = 'u32[144,128]{1,0:T(1,128)}', space=vmem, size = 0x12000, scoped, tag = 'internal scratch']
  %s0 = inlined_call_operand.vmem [shape: f32[16,128], index: 0, kind: input, shape index: {}]
  %s1 = inlined_call_operand.vmem [shape: f32[16,128], index: 1, kind: input, shape index: {}]
  %s2 = inlined_call_operand.hbm [shape: f32[1,1], index: 2, kind: output, shape index: {0}]
  %s3 = inlined_call_operand.hbm [shape: f32[1,1], index: 3, kind: output, shape index: {1}]
  %4 = xla_tuple %s2, %s3
  %s5 = sld [smem:[#allocation0]]
  $region26: #{fixmatch_forward.3} parent=0
    _
  %s7 = ssub.s32 1, %s5
  %s8 = scalar_select 0, %s7, %s5
  $region1: #{fixmatch_forward.3} parent=0
    #allocation2 [shape = 'u8[512]{0}', space=vmem, size = 0x400, scoped, tag = 'output window, operand 0, single buffered']
    #allocation3 [shape = 's32[1]{0}', space=sflag, size = 0x4, scoped, tag = 'scoped memory for fixmatch_forward.3']
    #allocation4 [shape = 'u8[512]{0}', space=vmem, size = 0x400, scoped, tag = 'output window, operand 1, single buffered']
    #allocation5 [shape = 's32[1]{0}', space=sflag, size = 0x4, scoped, tag = 'scoped memory for fixmatch_forward.3']
    %9 = vsyncpa [#allocation3], 0
    %10 = vsyncpa [#allocation5], 0
    // Predicated region
    $region2: #{fixmatch_forward.3} parent=1 // pred_check
      _
    $region3: #{fixmatch_forward.3} parent=1 // pred_check_branch
      %12 = sbr.rel (0) target = $region5
    $region4: #{fixmatch_forward.3} parent=1 // pred_region
      _
    $region5: #{fixmatch_forward.3} parent=1 // pred_fallthru
      _
    // Predicated region
    $region6: #{fixmatch_forward.3} parent=1 // pred_check
      _
    $region7: #{fixmatch_forward.3} parent=1 // pred_check_branch
      %14 = sbr.rel (0) target = $region9
    $region8: #{fixmatch_forward.3} parent=1 // pred_region
      _
    $region9: #{fixmatch_forward.3} parent=1 // pred_fallthru
      _
    %v15 = vld [vmem:[%s0] sm:$0xff]
    %v16 = vld [vmem:[%s0 + $0x8] sm:$0xff]
    %v17 = vld [vmem:[%s1] sm:$0xff]
    %v18 = vld [vmem:[%s1 + $0x8] sm:$0xff]
    %vm19 = vcmp.ne.f32.partialorder %v17, -999.0
    %vm20 = vcmp.ne.f32.partialorder %v18, -999.0
    %v21 = vsel %vm19, 1, 0
    %v22 = vsel %vm20, 1, 0
    %v23 = vcvt.s32.f32 %v21
    %v24 = vcvt.s32.f32 %v22
    %v25 = vsub.f32 %v15, %v17
    %v26 = vsub.f32 %v16, %v18
    %v27 = vmul.f32 %v25, %v23
    %v28 = vmul.f32 %v26, %v24
    %v29 = vmul.f32 %v27, %v27
    %v30 = vmul.f32 %v28, %v28
    %v31 = vadd.f32 %v29, %v30
    %32 = vadd.xlane.f32.xlu0 %v31
    %v33 = vpop.xlane.xlu0 %32
    %v34 = vrot.slane %v33, 4
    %v35 = vadd.f32 %v33, %v34
    %v36 = vrot.slane %v35, 2
    %v37 = vadd.f32 %v35, %v36
    %v38 = vrot.slane %v37, 1
    %v39 = vadd.f32 %v37, %v38
    %s40 = vtos %v39
    %v41 = vstv %s40
    %v42 = vadd.f32 %v41, 0.0
    %vm43 = vcmask 0
    %44 = vst.msk [vmem:[#allocation2] sm:$0x1] %vm43, %v42
    %v45 = vadd.f32 %v23, %v24
    %46 = vadd.xlane.f32.xlu0 %v45
    %v47 = vpop.xlane.xlu0 %46
    %v48 = vrot.slane %v47, 4
    %v49 = vadd.f32 %v47, %v48
    %v50 = vrot.slane %v49, 2
    %v51 = vadd.f32 %v49, %v50
    %v52 = vrot.slane %v51, 1
    %v53 = vadd.f32 %v51, %v52
    %s54 = vtos %v53
    %v55 = vstv %s54
    %v56 = vadd.f32 %v55, 0.0
    %57 = vst.msk [vmem:[#allocation4] sm:$0x1] %vm43, %v56
    // Predicated region
    $region10: #{fixmatch_forward.3} parent=1 // pred_check
      _
    $region11: #{fixmatch_forward.3} parent=1 // pred_check_branch
      %59 = sbr.rel (0) target = $region13
    $region12: #{fixmatch_forward.3} parent=1 // pred_region
      %s61 = ssub.s32 16, 16
      %62 = vsyncadd [#allocation3], %s61
      %s64 = sshll.u32 [#allocation2], 4
      %s65 = int_to_ptr.vmem [resolvable:$true] %s64
      %67 = dma.vmem_to_hbm [thread:$0]  %s65, 16, %s2, [#allocation3]
    $region13: #{fixmatch_forward.3} parent=1 // pred_fallthru
      _
    // Predicated region
    $region14: #{fixmatch_forward.3} parent=1 // pred_check
      _
    $region15: #{fixmatch_forward.3} parent=1 // pred_check_branch
      %69 = sbr.rel (0) target = $region17
    $region16: #{fixmatch_forward.3} parent=1 // pred_region
      %s71 = ssub.s32 16, 16
      %72 = vsyncadd [#allocation5], %s71
      %s74 = sshll.u32 [#allocation4], 4
      %s75 = int_to_ptr.vmem [resolvable:$true] %s74
      %77 = dma.vmem_to_hbm [thread:$0]  %s75, 16, %s3, [#allocation5]
    $region17: #{fixmatch_forward.3} parent=1 // pred_fallthru
      _
    // Predicated region
    $region18: #{fixmatch_forward.3} parent=1 // pred_check
      _
    $region19: #{fixmatch_forward.3} parent=1 // pred_check_branch
      %79 = sbr.rel (0) target = $region21
    $region20: #{fixmatch_forward.3} parent=1 // pred_region
      %80 = dma.done [#allocation3], 16
    $region21: #{fixmatch_forward.3} parent=1 // pred_fallthru
      _
    // Predicated region
    $region22: #{fixmatch_forward.3} parent=1 // pred_check
      _
    $region23: #{fixmatch_forward.3} parent=1 // pred_check_branch
      %82 = sbr.rel (0) target = $region25
    $region24: #{fixmatch_forward.3} parent=1 // pred_region
      %83 = dma.done [#allocation5], 16
    $region25: #{fixmatch_forward.3} parent=1 // pred_fallthru
      _
    %84 = vsyncpa [#allocation3], 1
    %85 = vsyncpa [#allocation5], 1

// kernel: fixmatch_forward.2
$region0: #{fixmatch_forward.2}
  #allocation0 [shape = 'u32[]', space=smem, size = 0x4, offset = 0x4, fixed_abs, tag = 'smem constant byte address 0x4 - core index']
  #allocation1 [shape = 'u32[144,128]{1,0:T(1,128)}', space=vmem, size = 0x12000, scoped, tag = 'internal scratch']
  %s0 = inlined_call_operand.vmem [shape: f32[1536,4], index: 0, kind: input, shape index: {}]
  %s1 = inlined_call_operand.vmem [shape: f32[4,128], index: 1, kind: input, shape index: {}]
  %s2 = inlined_call_operand.vmem [shape: f32[1,128], index: 2, kind: input, shape index: {}]
  %s3 = inlined_call_operand.vmem [shape: f32[4,8], index: 3, kind: input, shape index: {}]
  %s4 = inlined_call_operand.vmem [shape: f32[1,8], index: 4, kind: input, shape index: {}]
  %s5 = inlined_call_operand.vmem [shape: f32[8,128], index: 5, kind: input, shape index: {}]
  %s6 = inlined_call_operand.vmem [shape: f32[1536,128], index: 6, kind: output, shape index: {}]
  %s7 = sld [smem:[#allocation0]]
  $region57: #{fixmatch_forward.2} parent=0
    _
  %s9 = ssub.s32 1, %s7
  %s10 = scalar_select 0, %s9, %s7
  loop: start=0, step=1, limit=4
  $region2: #{fixmatch_forward.2} parent=0 // loop_pre_header
    _
  $region3: #{fixmatch_forward.2} parent=0 // loop_header
    %s12 = sphi 0, %s16
    %p13 = scmp.ge.s32.totalorder %s12, 4
    %s22 = sphi 0, %s24
    %s25 = sphi 0, %s22
    %s26 = sphi 0, %s25
    %s42 = sphi 0, %s26
    %s46 = sphi 0, %s46
    %s48 = sphi 0, %s46
    %s49 = sphi 0, %s48
    %s63 = sphi 0, %s49
    %s67 = sphi 0, %s67
    %s69 = sphi 0, %s67
    %s70 = sphi 0, %s69
    %s84 = sphi 0, %s70
    %s88 = sphi 0, %s88
    %s90 = sphi 0, %s88
    %s91 = sphi 0, %s90
    %s105 = sphi 0, %s91
    %s109 = sphi 0, %s109
    %s111 = sphi 0, %s109
    %s112 = sphi 0, %s111
    %s126 = sphi 0, %s112
    %s130 = sphi 0, %s130
    %s132 = sphi 0, %s130
    %s133 = sphi 0, %s132
    %s147 = sphi 0, %s133
    %s153 = sphi 0, %s155
    %s156 = sphi 0, %s153
    %s157 = sphi 0, %s156
    %s173 = sphi 0, %s157
  $region4: #{fixmatch_forward.2} parent=0 // loop_header_branch
    %15 = sbr.rel (%p13) target = $region8
  $region5: #{fixmatch_forward.2} parent=0 // loop_body
    %s17 = ssub.s32 %s12, 1
    %s18 = ssub.s32 %s12, 2
    %s19 = sadd.s32 %s12, 1
    %s20 = ssub.s32 %s12, %s19
    %p21 = scmp.eq.s32.totalorder %s20, 0
    %s23 = sadd.s32 %s22, 1
    %s24 = scalar_select %p21, %s22, %s23
    %p27 = pneg %p21
    %p28 = scmp.eq.s32.totalorder %s12, 1
    %p29 = por %p27, %p28
    %p30 = scmp.ne.s32.totalorder %s22, %s25
    %p31 = scmp.eq.s32.totalorder %s12, 0
    %p32 = por %p30, %p31
    %p33 = scmp.ne.s32.totalorder %s22, %s25
    %p34 = scmp.eq.s32.totalorder %s17, 1
    %p35 = por %p33, %p34
    %p36 = scmp.ne.s32.totalorder %s25, %s26
    %p37 = scmp.eq.s32.totalorder %s17, 0
    %p38 = por %p36, %p37
    %p39 = scmp.ne.s32.totalorder %s25, %s26
    %p40 = scmp.eq.s32.totalorder %s18, 1
    %p41 = por %p39, %p40
    %p43 = scmp.ne.s32.totalorder %s26, %s42
    %p44 = scmp.eq.s32.totalorder %s18, 0
    %p45 = por %p43, %p44
    %s47 = sadd.s32 %s46, 1
    %p50 = scmp.eq.s32.totalorder %s12, 1
    %p51 = scmp.ne.s32.totalorder %s46, %s48
    %p52 = scmp.eq.s32.totalorder %s12, 0
    %p53 = por %p51, %p52
    %p54 = scmp.ne.s32.totalorder %s46, %s48
    %p55 = scmp.eq.s32.totalorder %s17, 1
    %p56 = por %p54, %p55
    %p57 = scmp.ne.s32.totalorder %s48, %s49
    %p58 = scmp.eq.s32.totalorder %s17, 0
    %p59 = por %p57, %p58
    %p60 = scmp.ne.s32.totalorder %s48, %s49
    %p61 = scmp.eq.s32.totalorder %s18, 1
    %p62 = por %p60, %p61
    %p64 = scmp.ne.s32.totalorder %s49, %s63
    %p65 = scmp.eq.s32.totalorder %s18, 0
    %p66 = por %p64, %p65
    %s68 = sadd.s32 %s67, 1
    %p71 = scmp.eq.s32.totalorder %s12, 1
    %p72 = scmp.ne.s32.totalorder %s67, %s69
    %p73 = scmp.eq.s32.totalorder %s12, 0
    %p74 = por %p72, %p73
    %p75 = scmp.ne.s32.totalorder %s67, %s69
    %p76 = scmp.eq.s32.totalorder %s17, 1
    %p77 = por %p75, %p76
    %p78 = scmp.ne.s32.totalorder %s69, %s70
    %p79 = scmp.eq.s32.totalorder %s17, 0
    %p80 = por %p78, %p79
    %p81 = scmp.ne.s32.totalorder %s69, %s70
    %p82 = scmp.eq.s32.totalorder %s18, 1
    %p83 = por %p81, %p82
    %p85 = scmp.ne.s32.totalorder %s70, %s84
    %p86 = scmp.eq.s32.totalorder %s18, 0
    %p87 = por %p85, %p86
    %s89 = sadd.s32 %s88, 1
    %p92 = scmp.eq.s32.totalorder %s12, 1
    %p93 = scmp.ne.s32.totalorder %s88, %s90
    %p94 = scmp.eq.s32.totalorder %s12, 0
    %p95 = por %p93, %p94
    %p96 = scmp.ne.s32.totalorder %s88, %s90
    %p97 = scmp.eq.s32.totalorder %s17, 1
    %p98 = por %p96, %p97
    %p99 = scmp.ne.s32.totalorder %s90, %s91
    %p100 = scmp.eq.s32.totalorder %s17, 0
    %p101 = por %p99, %p100
    %p102 = scmp.ne.s32.totalorder %s90, %s91
    %p103 = scmp.eq.s32.totalorder %s18, 1
    %p104 = por %p102, %p103
    %p106 = scmp.ne.s32.totalorder %s91, %s105
    %p107 = scmp.eq.s32.totalorder %s18, 0
    %p108 = por %p106, %p107
    %s110 = sadd.s32 %s109, 1
    %p113 = scmp.eq.s32.totalorder %s12, 1
    %p114 = scmp.ne.s32.totalorder %s109, %s111
    %p115 = scmp.eq.s32.totalorder %s12, 0
    %p116 = por %p114, %p115
    %p117 = scmp.ne.s32.totalorder %s109, %s111
    %p118 = scmp.eq.s32.totalorder %s17, 1
    %p119 = por %p117, %p118
    %p120 = scmp.ne.s32.totalorder %s111, %s112
    %p121 = scmp.eq.s32.totalorder %s17, 0
    %p122 = por %p120, %p121
    %p123 = scmp.ne.s32.totalorder %s111, %s112
    %p124 = scmp.eq.s32.totalorder %s18, 1
    %p125 = por %p123, %p124
    %p127 = scmp.ne.s32.totalorder %s112, %s126
    %p128 = scmp.eq.s32.totalorder %s18, 0
    %p129 = por %p127, %p128
    %s131 = sadd.s32 %s130, 1
    %p134 = scmp.eq.s32.totalorder %s12, 1
    %p135 = scmp.ne.s32.totalorder %s130, %s132
    %p136 = scmp.eq.s32.totalorder %s12, 0
    %p137 = por %p135, %p136
    %p138 = scmp.ne.s32.totalorder %s130, %s132
    %p139 = scmp.eq.s32.totalorder %s17, 1
    %p140 = por %p138, %p139
    %p141 = scmp.ne.s32.totalorder %s132, %s133
    %p142 = scmp.eq.s32.totalorder %s17, 0
    %p143 = por %p141, %p142
    %p144 = scmp.ne.s32.totalorder %s132, %s133
    %p145 = scmp.eq.s32.totalorder %s18, 1
    %p146 = por %p144, %p145
    %p148 = scmp.ne.s32.totalorder %s133, %s147
    %p149 = scmp.eq.s32.totalorder %s18, 0
    %p150 = por %p148, %p149
    %s151 = ssub.s32 %s12, %s19
    %p152 = scmp.eq.s32.totalorder %s151, 0
    %s154 = sadd.s32 %s153, 1
    %s155 = scalar_select %p152, %s153, %s154
    %p158 = pneg %p152
    %p159 = scmp.eq.s32.totalorder %s12, 1
    %p160 = por %p158, %p159
    %p161 = scmp.ne.s32.totalorder %s153, %s156
    %p162 = scmp.eq.s32.totalorder %s12, 0
    %p163 = por %p161, %p162
    %p164 = scmp.ne.s32.totalorder %s153, %s156
    %p165 = scmp.eq.s32.totalorder %s17, 1
    %p166 = por %p164, %p165
    %p167 = scmp.ne.s32.totalorder %s156, %s157
    %p168 = scmp.eq.s32.totalorder %s17, 0
    %p169 = por %p167, %p168
    %p170 = scmp.ne.s32.totalorder %s156, %s157
    %p171 = scmp.eq.s32.totalorder %s18, 1
    %p172 = por %p170, %p171
    %p174 = scmp.ne.s32.totalorder %s157, %s173
    %p175 = scmp.eq.s32.totalorder %s18, 0
    %p176 = por %p174, %p175
    %p177 = scmp.le.s32.totalorder 1, %s12
    %p178 = scmp.lt.s32.totalorder %s12, 3
    %p179 = pnand %p177, %p178
    %p180 = pneg %p179
    // Predicated region
    $region9: #{fixmatch_forward.2} parent=5 // pred_check
      _
    $region10: #{fixmatch_forward.2} parent=5 // pred_check_branch
      %182 = sbr.rel (%p179) target = $region12
    $region11: #{fixmatch_forward.2} parent=5 // pred_region
      %s183 = ssub.s32 %s12, 1
      // Predicated region
      $region13: #{fixmatch_forward.2} parent=11 // pred_check
        %p184 = pneg %p59
      $region14: #{fixmatch_forward.2} parent=11 // pred_check_branch
        %186 = sbr.rel (%p184) target = $region16
      $region15: #{fixmatch_forward.2} parent=11 // pred_region
        _
      $region16: #{fixmatch_forward.2} parent=11 // pred_fallthru
        _
      // Predicated region
      $region17: #{fixmatch_forward.2} parent=11 // pred_check
        %p187 = pneg %p80
      $region18: #{fixmatch_forward.2} parent=11 // pred_check_branch
        %189 = sbr.rel (%p187) target = $region20
      $region19: #{fixmatch_forward.2} parent=11 // pred_region
        _
      $region20: #{fixmatch_forward.2} parent=11 // pred_fallthru
        _
      // Predicated region
      $region21: #{fixmatch_forward.2} parent=11 // pred_check
        %p190 = pneg %p101
      $region22: #{fixmatch_forward.2} parent=11 // pred_check_branch
        %192 = sbr.rel (%p190) target = $region24
      $region23: #{fixmatch_forward.2} parent=11 // pred_region
        _
      $region24: #{fixmatch_forward.2} parent=11 // pred_fallthru
        _
      // Predicated region
      $region25: #{fixmatch_forward.2} parent=11 // pred_check
        %p193 = pneg %p122
      $region26: #{fixmatch_forward.2} parent=11 // pred_check_branch
        %195 = sbr.rel (%p193) target = $region28
      $region27: #{fixmatch_forward.2} parent=11 // pred_region
        _
      $region28: #{fixmatch_forward.2} parent=11 // pred_fallthru
        _
      // Predicated region
      $region29: #{fixmatch_forward.2} parent=11 // pred_check
        %p196 = pneg %p143
      $region30: #{fixmatch_forward.2} parent=11 // pred_check_branch
        %198 = sbr.rel (%p196) target = $region32
      $region31: #{fixmatch_forward.2} parent=11 // pred_region
        _
      $region32: #{fixmatch_forward.2} parent=11 // pred_fallthru
        _
    $region12: #{fixmatch_forward.2} parent=5 // pred_fallthru
      _
    %p199 = scmp.lt.s32.totalorder %s12, 2
    // Predicated region
    $region33: #{fixmatch_forward.2} parent=5 // pred_check
      %p200 = pneg %p199
    $region34: #{fixmatch_forward.2} parent=5 // pred_check_branch
      %202 = sbr.rel (%p200) target = $region36
    $region35: #{fixmatch_forward.2} parent=5 // pred_region
      // Predicated region
      $region37: #{fixmatch_forward.2} parent=35 // pred_check
        %p203 = pneg %p32
      $region38: #{fixmatch_forward.2} parent=35 // pred_check_branch
        %205 = sbr.rel (%p203) target = $region40
      $region39: #{fixmatch_forward.2} parent=35 // pred_region
        %s206 = smul.u32 96, %s12
        %p207 = scmp.lt.s32.totalorder %s206, 191
        %s208 = scalar_select %p207, %s206, 191
        %s209 = smul.addr %s208, 8
        %s210 = scalar_lea.vmem %s0, %s209
        %s211 = smul.u32 96, %s12
      $region40: #{fixmatch_forward.2} parent=35 // pred_fallthru
        _
    $region36: #{fixmatch_forward.2} parent=5 // pred_fallthru
      _
    %p212 = scmp.le.s32.totalorder 1, %s12
    %p213 = scmp.lt.s32.totalorder %s12, 3
    %p214 = pnand %p212, %p213
    %p215 = pneg %p214
    // Predicated region
    $region41: #{fixmatch_forward.2} parent=5 // pred_check
      _
    $region42: #{fixmatch_forward.2} parent=5 // pred_check_branch
      %217 = sbr.rel (%p214) target = $region44
    $region43: #{fixmatch_forward.2} parent=5 // pred_region
      %s218 = ssub.s32 %s12, 1
      %s219 = smul.u32 96, %s17
      %p220 = scmp.lt.s32.totalorder %s219, 191
      %s221 = scalar_select %p220, %s219, 191
      %s222 = smul.addr %s221, 8
      %s223 = scalar_lea.vmem %s0, %s222
      %p224 = pneg %p38
      %p225 = pneg %p35
      %p226 = pneg %p59
      %p227 = pneg %p56
      %p228 = pneg %p80
      %p229 = pneg %p77
      %p230 = pneg %p101
      %p231 = pneg %p98
      %p232 = pneg %p122
      %p233 = pneg %p119
      %p234 = pneg %p143
      %p235 = pneg %p140
      %p236 = pneg %p169
      %p237 = pneg %p166
      %s238 = smul.u32 96, %s17
      %p239 = scmp.lt.s32.totalorder %s238, 191
      %s240 = scalar_select %p239, %s238, 191
      %s241 = smul.addr %s240, 8
      %s242 = scalar_lea.vmem %s6, %s241
      %s243 = smul.u32 96, %s17
      %p244 = scmp.lt.s32.totalorder %s243, 191
      %s245 = scalar_select %p244, %s243, 191
      %s246 = smul.addr %s245, 8
      %s247 = scalar_lea.vmem %s0, %s246
      %s248 = smul.u32 96, %s17
      %s249 = smul.u32 96, %s17
      %p250 = scmp.lt.s32.totalorder %s249, 191
      %s251 = scalar_select %p250, %s249, 191
      %s252 = smul.addr %s251, 8
      %s253 = scalar_lea.vmem %s6, %s252
      %s254 = smul.u32 96, %s17
      %v255 = vld [vmem:[%s247] sm:$0xff]
      %v256 = vld [vmem:[%s247 + $0x8] sm:$0xff]
      %v257 = vld [vmem:[%s247 + $0x10] sm:$0xff]
      %v258 = vld [vmem:[%s247 + $0x18] sm:$0xff]
      %v259 = vld [vmem:[%s247 + $0x20] sm:$0xff]
      %v260 = vld [vmem:[%s247 + $0x28] sm:$0xff]
      %v261 = vld [vmem:[%s247 + $0x30] sm:$0xff]
      %v262 = vld [vmem:[%s247 + $0x38] sm:$0xff]
      %v263 = vld [vmem:[%s247 + $0x40] sm:$0xff]
      %v264 = vld [vmem:[%s247 + $0x48] sm:$0xff]
      %v265 = vld [vmem:[%s247 + $0x50] sm:$0xff]
      %v266 = vld [vmem:[%s247 + $0x58] sm:$0xff]
      %v267 = vld [vmem:[%s247 + $0x60] sm:$0xff]
      %v268 = vld [vmem:[%s247 + $0x68] sm:$0xff]
      %v269 = vld [vmem:[%s247 + $0x70] sm:$0xff]
      %v270 = vld [vmem:[%s247 + $0x78] sm:$0xff]
      %v271 = vld [vmem:[%s247 + $0x80] sm:$0xff]
      %v272 = vld [vmem:[%s247 + $0x88] sm:$0xff]
      %v273 = vld [vmem:[%s247 + $0x90] sm:$0xff]
      %v274 = vld [vmem:[%s247 + $0x98] sm:$0xff]
      %v275 = vld [vmem:[%s247 + $0xa0] sm:$0xff]
      %v276 = vld [vmem:[%s247 + $0xa8] sm:$0xff]
      %v277 = vld [vmem:[%s247 + $0xb0] sm:$0xff]
      %v278 = vld [vmem:[%s247 + $0xb8] sm:$0xff]
      %v279 = vld [vmem:[%s247 + $0xc0] sm:$0xff]
      %v280 = vld [vmem:[%s247 + $0xc8] sm:$0xff]
      %v281 = vld [vmem:[%s247 + $0xd0] sm:$0xff]
      %v282 = vld [vmem:[%s247 + $0xd8] sm:$0xff]
      %v283 = vld [vmem:[%s247 + $0xe0] sm:$0xff]
      %v284 = vld [vmem:[%s247 + $0xe8] sm:$0xff]
      %v285 = vld [vmem:[%s247 + $0xf0] sm:$0xff]
      %v286 = vld [vmem:[%s247 + $0xf8] sm:$0xff]
      %v287 = vld [vmem:[%s247 + $0x100] sm:$0xff]
      %v288 = vld [vmem:[%s247 + $0x108] sm:$0xff]
      %v289 = vld [vmem:[%s247 + $0x110] sm:$0xff]
      %v290 = vld [vmem:[%s247 + $0x118] sm:$0xff]
      %v291 = vld [vmem:[%s247 + $0x120] sm:$0xff]
      %v292 = vld [vmem:[%s247 + $0x128] sm:$0xff]
      %v293 = vld [vmem:[%s247 + $0x130] sm:$0xff]
      %v294 = vld [vmem:[%s247 + $0x138] sm:$0xff]
      %v295 = vld [vmem:[%s247 + $0x140] sm:$0xff]
      %v296 = vld [vmem:[%s247 + $0x148] sm:$0xff]
      %v297 = vld [vmem:[%s247 + $0x150] sm:$0xff]
      %v298 = vld [vmem:[%s247 + $0x158] sm:$0xff]
      %v299 = vld [vmem:[%s247 + $0x160] sm:$0xff]
      %v300 = vld [vmem:[%s247 + $0x168] sm:$0xff]
      %v301 = vld [vmem:[%s247 + $0x170] sm:$0xff]
      %v302 = vld [vmem:[%s247 + $0x178] sm:$0xff]
      %v303 = vld [vmem:[%s247 + $0x180] sm:$0xff]
      %v304 = vld [vmem:[%s247 + $0x188] sm:$0xff]
      %v305 = vld [vmem:[%s247 + $0x190] sm:$0xff]
      %v306 = vld [vmem:[%s247 + $0x198] sm:$0xff]
      %v307 = vld [vmem:[%s247 + $0x1a0] sm:$0xff]
      %v308 = vld [vmem:[%s247 + $0x1a8] sm:$0xff]
      %v309 = vld [vmem:[%s247 + $0x1b0] sm:$0xff]
      %v310 = vld [vmem:[%s247 + $0x1b8] sm:$0xff]
      %v311 = vld [vmem:[%s247 + $0x1c0] sm:$0xff]
      %v312 = vld [vmem:[%s247 + $0x1c8] sm:$0xff]
      %v313 = vld [vmem:[%s247 + $0x1d0] sm:$0xff]
      %v314 = vld [vmem:[%s247 + $0x1d8] sm:$0xff]
      %v315 = vld [vmem:[%s247 + $0x1e0] sm:$0xff]
      %v316 = vld [vmem:[%s247 + $0x1e8] sm:$0xff]
      %v317 = vld [vmem:[%s247 + $0x1f0] sm:$0xff]
      %v318 = vld [vmem:[%s247 + $0x1f8] sm:$0xff]
      %v319 = vld [vmem:[%s247 + $0x200] sm:$0xff]
      %v320 = vld [vmem:[%s247 + $0x208] sm:$0xff]
      %v321 = vld [vmem:[%s247 + $0x210] sm:$0xff]
      %v322 = vld [vmem:[%s247 + $0x218] sm:$0xff]
      %v323 = vld [vmem:[%s247 + $0x220] sm:$0xff]
      %v324 = vld [vmem:[%s247 + $0x228] sm:$0xff]
      %v325 = vld [vmem:[%s247 + $0x230] sm:$0xff]
      %v326 = vld [vmem:[%s247 + $0x238] sm:$0xff]
      %v327 = vld [vmem:[%s247 + $0x240] sm:$0xff]
      %v328 = vld [vmem:[%s247 + $0x248] sm:$0xff]
      %v329 = vld [vmem:[%s247 + $0x250] sm:$0xff]
      %v330 = vld [vmem:[%s247 + $0x258] sm:$0xff]
      %v331 = vld [vmem:[%s247 + $0x260] sm:$0xff]
      %v332 = vld [vmem:[%s247 + $0x268] sm:$0xff]
      %v333 = vld [vmem:[%s247 + $0x270] sm:$0xff]
      %v334 = vld [vmem:[%s247 + $0x278] sm:$0xff]
      %v335 = vld [vmem:[%s247 + $0x280] sm:$0xff]
      %v336 = vld [vmem:[%s247 + $0x288] sm:$0xff]
      %v337 = vld [vmem:[%s247 + $0x290] sm:$0xff]
      %v338 = vld [vmem:[%s247 + $0x298] sm:$0xff]
      %v339 = vld [vmem:[%s247 + $0x2a0] sm:$0xff]
      %v340 = vld [vmem:[%s247 + $0x2a8] sm:$0xff]
      %v341 = vld [vmem:[%s247 + $0x2b0] sm:$0xff]
      %v342 = vld [vmem:[%s247 + $0x2b8] sm:$0xff]
      %v343 = vld [vmem:[%s247 + $0x2c0] sm:$0xff]
      %v344 = vld [vmem:[%s247 + $0x2c8] sm:$0xff]
      %v345 = vld [vmem:[%s247 + $0x2d0] sm:$0xff]
      %v346 = vld [vmem:[%s247 + $0x2d8] sm:$0xff]
      %v347 = vld [vmem:[%s247 + $0x2e0] sm:$0xff]
      %v348 = vld [vmem:[%s247 + $0x2e8] sm:$0xff]
      %v349 = vld [vmem:[%s247 + $0x2f0] sm:$0xff]
      %v350 = vld [vmem:[%s247 + $0x2f8] sm:$0xff]
      %v351 = vld [vmem:[%s1] sm:$0xf]
      %v352 = vld [vmem:[%s2] sm:$0x1]
      %v354 = vlaneseq
      %v355 = vshrl.u32 %v354, 7
      %v356 = vsub.s32 0, %v355
      %v357 = vrot.slane %v352, %v356
      %vm359 = vcmask 31744
      %v361 = vsel %vm359, %v255, 0
      %v364 = vsel %vm359, %v256, 0
      %v367 = vsel %vm359, %v257, 0
      %v370 = vsel %vm359, %v258, 0
      %v373 = vsel %vm359, %v259, 0
      %v376 = vsel %vm359, %v260, 0
      %v379 = vsel %vm359, %v261, 0
      %v382 = vsel %vm359, %v262, 0
      %v385 = vsel %vm359, %v263, 0
      %v388 = vsel %vm359, %v264, 0
      %v391 = vsel %vm359, %v265, 0
      %v394 = vsel %vm359, %v266, 0
      %v397 = vsel %vm359, %v267, 0
      %v400 = vsel %vm359, %v268, 0
      %v403 = vsel %vm359, %v269, 0
      %v406 = vsel %vm359, %v270, 0
      %v409 = vsel %vm359, %v271, 0
      %v412 = vsel %vm359, %v272, 0
      %v415 = vsel %vm359, %v273, 0
      %v418 = vsel %vm359, %v274, 0
      %v421 = vsel %vm359, %v275, 0
      %v424 = vsel %vm359, %v276, 0
      %v427 = vsel %vm359, %v277, 0
      %v430 = vsel %vm359, %v278, 0
      %v433 = vsel %vm359, %v279, 0
      %v436 = vsel %vm359, %v280, 0
      %v439 = vsel %vm359, %v281, 0
      %v442 = vsel %vm359, %v282, 0
      %v445 = vsel %vm359, %v283, 0
      %v448 = vsel %vm359, %v284, 0
      %v451 = vsel %vm359, %v285, 0
      %v454 = vsel %vm359, %v286, 0
      %v457 = vsel %vm359, %v287, 0
      %v460 = vsel %vm359, %v288, 0
      %v463 = vsel %vm359, %v289, 0
      %v466 = vsel %vm359, %v290, 0
      %v469 = vsel %vm359, %v291, 0
      %v472 = vsel %vm359, %v292, 0
      %v475 = vsel %vm359, %v293, 0
      %v478 = vsel %vm359, %v294, 0
      %v481 = vsel %vm359, %v295, 0
      %v484 = vsel %vm359, %v296, 0
      %v487 = vsel %vm359, %v297, 0
      %v490 = vsel %vm359, %v298, 0
      %v493 = vsel %vm359, %v299, 0
      %v496 = vsel %vm359, %v300, 0
      %v499 = vsel %vm359, %v301, 0
      %v502 = vsel %vm359, %v302, 0
      %v505 = vsel %vm359, %v303, 0
      %v508 = vsel %vm359, %v304, 0
      %v511 = vsel %vm359, %v305, 0
      %v514 = vsel %vm359, %v306, 0
      %v517 = vsel %vm359, %v307, 0
      %v520 = vsel %vm359, %v308, 0
      %v523 = vsel %vm359, %v309, 0
      %v526 = vsel %vm359, %v310, 0
      %v529 = vsel %vm359, %v311, 0
      %v532 = vsel %vm359, %v312, 0
      %v535 = vsel %vm359, %v313, 0
      %v538 = vsel %vm359, %v314, 0
      %v541 = vsel %vm359, %v315, 0
      %v544 = vsel %vm359, %v316, 0
      %v547 = vsel %vm359, %v317, 0
      %v550 = vsel %vm359, %v318, 0
      %v553 = vsel %vm359, %v319, 0
      %v556 = vsel %vm359, %v320, 0
      %v559 = vsel %vm359, %v321, 0
      %v562 = vsel %vm359, %v322, 0
      %v565 = vsel %vm359, %v323, 0
      %v568 = vsel %vm359, %v324, 0
      %v571 = vsel %vm359, %v325, 0
      %v574 = vsel %vm359, %v326, 0
      %v577 = vsel %vm359, %v327, 0
      %v580 = vsel %vm359, %v328, 0
      %v583 = vsel %vm359, %v329, 0
      %v586 = vsel %vm359, %v330, 0
      %v589 = vsel %vm359, %v331, 0
      %v592 = vsel %vm359, %v332, 0
      %v595 = vsel %vm359, %v333, 0
      %v598 = vsel %vm359, %v334, 0
      %v601 = vsel %vm359, %v335, 0
      %v604 = vsel %vm359, %v336, 0
      %v607 = vsel %vm359, %v337, 0
      %v610 = vsel %vm359, %v338, 0
      %v613 = vsel %vm359, %v339, 0
      %v616 = vsel %vm359, %v340, 0
      %v619 = vsel %vm359, %v341, 0
      %v622 = vsel %vm359, %v342, 0
      %v625 = vsel %vm359, %v343, 0
      %v628 = vsel %vm359, %v344, 0
      %v631 = vsel %vm359, %v345, 0
      %v634 = vsel %vm359, %v346, 0
      %v637 = vsel %vm359, %v347, 0
      %v640 = vsel %vm359, %v348, 0
      %v643 = vsel %vm359, %v349, 0
      %v646 = vsel %vm359, %v350, 0
      %vm648 = vcmask 1043456
      %v650 = vsel %vm648, %v351, 0
      %652 = vmatprep.subr.mxu0 0.0
      %653 = vmatpush1.msra.mxu0 0.0
      %654 = vmatprep.subr.mxu0 0.0
      %655 = vmatpush1.msra.mxu0 0.0
      %656 = vmatprep.subr.mxu0 0.0
      %657 = vmatpush1.msra.mxu0 0.0
      %658 = vmatprep.subr.mxu0 0.0
      %659 = vmatpush1.msra.mxu0 0.0
      %660 = vmatprep.subr.mxu0 0.0
      %661 = vmatpush1.msra.mxu0 0.0
      %662 = vmatprep.subr.mxu0 0.0
      %663 = vmatpush1.msra.mxu0 0.0
      %664 = vmatprep.subr.mxu0 0.0
      %665 = vmatpush1.msra.mxu0 0.0
      %666 = vmatprep.subr.mxu0 0.0
      %667 = vmatpush1.msra.mxu0 0.0
      %668 = vmatprep.subr.mxu0 0.0
      %669 = vmatpush1.msra.mxu0 0.0
      %670 = vmatprep.subr.mxu0 0.0
      %671 = vmatpush1.msra.mxu0 0.0
      %672 = vmatprep.subr.mxu0 0.0
      %673 = vmatpush1.msra.mxu0 0.0
      %674 = vmatprep.subr.mxu0 0.0
      %675 = vmatpush1.msra.mxu0 0.0
      %676 = vmatprep.subr.mxu0 0.0
      %677 = vmatpush1.msra.mxu0 0.0
      %678 = vmatprep.subr.mxu0 0.0
      %679 = vmatpush1.msra.mxu0 0.0
      %680 = vmatprep.subr.mxu0 0.0
      %681 = vmatpush1.msra.mxu0 0.0
      %682 = vmatprep.subr.mxu0 0.0
      %683 = vmatpush1.msra.mxu0 %v650
      %684 = vmatprep.subr.mxu0 0.0
      %685 = vmatpush2.msra.mxu0 0.0
      %686 = vmatprep.subr.mxu0 0.0
      %687 = vmatpush2.msra.mxu0 0.0
      %688 = vmatprep.subr.mxu0 0.0
      %689 = vmatpush2.msra.mxu0 0.0
      %690 = vmatprep.subr.mxu0 0.0
      %691 = vmatpush2.msra.mxu0 0.0
      %692 = vmatprep.subr.mxu0 0.0
      %693 = vmatpush2.msra.mxu0 0.0
      %694 = vmatprep.subr.mxu0 0.0
      %695 = vmatpush2.msra.mxu0 0.0
      %696 = vmatprep.subr.mxu0 0.0
      %697 = vmatpush2.msra.mxu0 0.0
      %698 = vmatprep.subr.mxu0 0.0
      %699 = vmatpush2.msra.mxu0 0.0
      %700 = vmatprep.subr.mxu0 0.0
      %701 = vmatpush2.msra.mxu0 0.0
      %702 = vmatprep.subr.mxu0 0.0
      %703 = vmatpush2.msra.mxu0 0.0
      %704 = vmatprep.subr.mxu0 0.0
      %705 = vmatpush2.msra.mxu0 0.0
      %706 = vmatprep.subr.mxu0 0.0
      %707 = vmatpush2.msra.mxu0 0.0
      %708 = vmatprep.subr.mxu0 0.0
      %709 = vmatpush2.msra.mxu0 0.0
      %710 = vmatprep.subr.mxu0 0.0
      %711 = vmatpush2.msra.mxu0 0.0
      %712 = vmatprep.subr.mxu0 0.0
      %713 = vmatpush2.msra.mxu0 0.0
      %714 = vmatprep.subr.mxu0 0.0
      %715 = vmatpush2.msra.mxu0 0.0
      %716 = vmatprep.mubr.f32.mxu0 0.0
      %717 = vmatmul.mubr.f32.gmra.mxu0 %v361
      %v718 = vpop.f32.mrf.mxu0
      %v719 = vadd.f32 %v357, %v718
      %v720 = vpop.f32.mrf.mxu0
      %721 = vmatprep.mubr.f32.mxu0 0.0
      %722 = vmatmul.mubr.f32.gmra.mxu0 %v364
      %v723 = vpop.f32.mrf.mxu0
      %v724 = vadd.f32 %v357, %v723
      %v725 = vpop.f32.mrf.mxu0
      %726 = vmatprep.mubr.f32.mxu0 0.0
      %727 = vmatmul.mubr.f32.gmra.mxu0 %v367
      %v728 = vpop.f32.mrf.mxu0
      %v729 = vadd.f32 %v357, %v728
      %v730 = vpop.f32.mrf.mxu0
      %731 = vmatprep.mubr.f32.mxu0 0.0
      %732 = vmatmul.mubr.f32.gmra.mxu0 %v370
      %v733 = vpop.f32.mrf.mxu0
      %v734 = vadd.f32 %v357, %v733
      %v735 = vpop.f32.mrf.mxu0
      %736 = vmatprep.mubr.f32.mxu0 0.0
      %737 = vmatmul.mubr.f32.gmra.mxu0 %v373
      %v738 = vpop.f32.mrf.mxu0
      %v739 = vadd.f32 %v357, %v738
      %v740 = vpop.f32.mrf.mxu0
      %741 = vmatprep.mubr.f32.mxu0 0.0
      %742 = vmatmul.mubr.f32.gmra.mxu0 %v376
      %v743 = vpop.f32.mrf.mxu0
      %v744 = vadd.f32 %v357, %v743
      %v745 = vpop.f32.mrf.mxu0
      %746 = vmatprep.mubr.f32.mxu0 0.0
      %747 = vmatmul.mubr.f32.gmra.mxu0 %v379
      %v748 = vpop.f32.mrf.mxu0
      %v749 = vadd.f32 %v357, %v748
      %v750 = vpop.f32.mrf.mxu0
      %751 = vmatprep.mubr.f32.mxu0 0.0
      %752 = vmatmul.mubr.f32.gmra.mxu0 %v382
      %v753 = vpop.f32.mrf.mxu0
      %v754 = vadd.f32 %v357, %v753
      %v755 = vpop.f32.mrf.mxu0
      %756 = vmatprep.mubr.f32.mxu0 0.0
      %757 = vmatmul.mubr.f32.gmra.mxu0 %v385
      %v758 = vpop.f32.mrf.mxu0
      %v759 = vadd.f32 %v357, %v758
      %v760 = vpop.f32.mrf.mxu0
      %761 = vmatprep.mubr.f32.mxu0 0.0
      %762 = vmatmul.mubr.f32.gmra.mxu0 %v388
      %v763 = vpop.f32.mrf.mxu0
      %v764 = vadd.f32 %v357, %v763
      %v765 = vpop.f32.mrf.mxu0
      %766 = vmatprep.mubr.f32.mxu0 0.0
      %767 = vmatmul.mubr.f32.gmra.mxu0 %v391
      %v768 = vpop.f32.mrf.mxu0
      %v769 = vadd.f32 %v357, %v768
      %v770 = vpop.f32.mrf.mxu0
      %771 = vmatprep.mubr.f32.mxu0 0.0
      %772 = vmatmul.mubr.f32.gmra.mxu0 %v394
      %v773 = vpop.f32.mrf.mxu0
      %v774 = vadd.f32 %v357, %v773
      %v775 = vpop.f32.mrf.mxu0
      %776 = vmatprep.mubr.f32.mxu0 0.0
      %777 = vmatmul.mubr.f32.gmra.mxu0 %v397
      %v778 = vpop.f32.mrf.mxu0
      %v779 = vadd.f32 %v357, %v778
      %v780 = vpop.f32.mrf.mxu0
      %781 = vmatprep.mubr.f32.mxu0 0.0
      %782 = vmatmul.mubr.f32.gmra.mxu0 %v400
      %v783 = vpop.f32.mrf.mxu0
      %v784 = vadd.f32 %v357, %v783
      %v785 = vpop.f32.mrf.mxu0
      %786 = vmatprep.mubr.f32.mxu0 0.0
      %787 = vmatmul.mubr.f32.gmra.mxu0 %v403
      %v788 = vpop.f32.mrf.mxu0
      %v789 = vadd.f32 %v357, %v788
      %v790 = vpop.f32.mrf.mxu0
      %791 = vmatprep.mubr.f32.mxu0 0.0
      %792 = vmatmul.mubr.f32.gmra.mxu0 %v406
      %v793 = vpop.f32.mrf.mxu0
      %v794 = vadd.f32 %v357, %v793
      %v795 = vpop.f32.mrf.mxu0
      %796 = vmatprep.mubr.f32.mxu0 0.0
      %797 = vmatmul.mubr.f32.gmra.mxu0 %v409
      %v798 = vpop.f32.mrf.mxu0
      %v799 = vadd.f32 %v357, %v798
      %v800 = vpop.f32.mrf.mxu0
      %801 = vmatprep.mubr.f32.mxu0 0.0
      %802 = vmatmul.mubr.f32.gmra.mxu0 %v412
      %v803 = vpop.f32.mrf.mxu0
      %v804 = vadd.f32 %v357, %v803
      %v805 = vpop.f32.mrf.mxu0
      %806 = vmatprep.mubr.f32.mxu0 0.0
      %807 = vmatmul.mubr.f32.gmra.mxu0 %v415
      %v808 = vpop.f32.mrf.mxu0
      %v809 = vadd.f32 %v357, %v808
      %v810 = vpop.f32.mrf.mxu0
      %811 = vmatprep.mubr.f32.mxu0 0.0
      %812 = vmatmul.mubr.f32.gmra.mxu0 %v418
      %v813 = vpop.f32.mrf.mxu0
      %v814 = vadd.f32 %v357, %v813
      %v815 = vpop.f32.mrf.mxu0
      %816 = vmatprep.mubr.f32.mxu0 0.0
      %817 = vmatmul.mubr.f32.gmra.mxu0 %v421
      %v818 = vpop.f32.mrf.mxu0
      %v819 = vadd.f32 %v357, %v818
      %v820 = vpop.f32.mrf.mxu0
      %821 = vmatprep.mubr.f32.mxu0 0.0
      %822 = vmatmul.mubr.f32.gmra.mxu0 %v424
      %v823 = vpop.f32.mrf.mxu0
      %v824 = vadd.f32 %v357, %v823
      %v825 = vpop.f32.mrf.mxu0
      %826 = vmatprep.mubr.f32.mxu0 0.0
      %827 = vmatmul.mubr.f32.gmra.mxu0 %v427
      %v828 = vpop.f32.mrf.mxu0
      %v829 = vadd.f32 %v357, %v828
      %v830 = vpop.f32.mrf.mxu0
      %831 = vmatprep.mubr.f32.mxu0 0.0
      %832 = vmatmul.mubr.f32.gmra.mxu0 %v430
      %v833 = vpop.f32.mrf.mxu0
      %v834 = vadd.f32 %v357, %v833
      %v835 = vpop.f32.mrf.mxu0
      %836 = vmatprep.mubr.f32.mxu0 0.0
      %837 = vmatmul.mubr.f32.gmra.mxu0 %v433
      %v838 = vpop.f32.mrf.mxu0
      %v839 = vadd.f32 %v357, %v838
      %v840 = vpop.f32.mrf.mxu0
      %841 = vmatprep.mubr.f32.mxu0 0.0
      %842 = vmatmul.mubr.f32.gmra.mxu0 %v436
      %v843 = vpop.f32.mrf.mxu0
      %v844 = vadd.f32 %v357, %v843
      %v845 = vpop.f32.mrf.mxu0
      %846 = vmatprep.mubr.f32.mxu0 0.0
      %847 = vmatmul.mubr.f32.gmra.mxu0 %v439
      %v848 = vpop.f32.mrf.mxu0
      %v849 = vadd.f32 %v357, %v848
      %v850 = vpop.f32.mrf.mxu0
      %851 = vmatprep.mubr.f32.mxu0 0.0
      %852 = vmatmul.mubr.f32.gmra.mxu0 %v442
      %v853 = vpop.f32.mrf.mxu0
      %v854 = vadd.f32 %v357, %v853
      %v855 = vpop.f32.mrf.mxu0
      %856 = vmatprep.mubr.f32.mxu0 0.0
      %857 = vmatmul.mubr.f32.gmra.mxu0 %v445
      %v858 = vpop.f32.mrf.mxu0
      %v859 = vadd.f32 %v357, %v858
      %v860 = vpop.f32.mrf.mxu0
      %861 = vmatprep.mubr.f32.mxu0 0.0
      %862 = vmatmul.mubr.f32.gmra.mxu0 %v448
      %v863 = vpop.f32.mrf.mxu0
      %v864 = vadd.f32 %v357, %v863
      %v865 = vpop.f32.mrf.mxu0
      %866 = vmatprep.mubr.f32.mxu0 0.0
      %867 = vmatmul.mubr.f32.gmra.mxu0 %v451
      %v868 = vpop.f32.mrf.mxu0
      %v869 = vadd.f32 %v357, %v868
      %v870 = vpop.f32.mrf.mxu0
      %871 = vmatprep.mubr.f32.mxu0 0.0
      %872 = vmatmul.mubr.f32.gmra.mxu0 %v454
      %v873 = vpop.f32.mrf.mxu0
      %v874 = vadd.f32 %v357, %v873
      %v875 = vpop.f32.mrf.mxu0
      %876 = vmatprep.mubr.f32.mxu0 0.0
      %877 = vmatmul.mubr.f32.gmra.mxu0 %v457
      %v878 = vpop.f32.mrf.mxu0
      %v879 = vadd.f32 %v357, %v878
      %v880 = vpop.f32.mrf.mxu0
      %881 = vmatprep.mubr.f32.mxu0 0.0
      %882 = vmatmul.mubr.f32.gmra.mxu0 %v460
      %v883 = vpop.f32.mrf.mxu0
      %v884 = vadd.f32 %v357, %v883
      %v885 = vpop.f32.mrf.mxu0
      %886 = vmatprep.mubr.f32.mxu0 0.0
      %887 = vmatmul.mubr.f32.gmra.mxu0 %v463
      %v888 = vpop.f32.mrf.mxu0
      %v889 = vadd.f32 %v357, %v888
      %v890 = vpop.f32.mrf.mxu0
      %891 = vmatprep.mubr.f32.mxu0 0.0
      %892 = vmatmul.mubr.f32.gmra.mxu0 %v466
      %v893 = vpop.f32.mrf.mxu0
      %v894 = vadd.f32 %v357, %v893
      %v895 = vpop.f32.mrf.mxu0
      %896 = vmatprep.mubr.f32.mxu0 0.0
      %897 = vmatmul.mubr.f32.gmra.mxu0 %v469
      %v898 = vpop.f32.mrf.mxu0
      %v899 = vadd.f32 %v357, %v898
      %v900 = vpop.f32.mrf.mxu0
      %901 = vmatprep.mubr.f32.mxu0 0.0
      %902 = vmatmul.mubr.f32.gmra.mxu0 %v472
      %v903 = vpop.f32.mrf.mxu0
      %v904 = vadd.f32 %v357, %v903
      %v905 = vpop.f32.mrf.mxu0
      %906 = vmatprep.mubr.f32.mxu0 0.0
      %907 = vmatmul.mubr.f32.gmra.mxu0 %v475
      %v908 = vpop.f32.mrf.mxu0
      %v909 = vadd.f32 %v357, %v908
      %v910 = vpop.f32.mrf.mxu0
      %911 = vmatprep.mubr.f32.mxu0 0.0
      %912 = vmatmul.mubr.f32.gmra.mxu0 %v478
      %v913 = vpop.f32.mrf.mxu0
      %v914 = vadd.f32 %v357, %v913
      %v915 = vpop.f32.mrf.mxu0
      %916 = vmatprep.mubr.f32.mxu0 0.0
      %917 = vmatmul.mubr.f32.gmra.mxu0 %v481
      %v918 = vpop.f32.mrf.mxu0
      %v919 = vadd.f32 %v357, %v918
      %v920 = vpop.f32.mrf.mxu0
      %921 = vmatprep.mubr.f32.mxu0 0.0
      %922 = vmatmul.mubr.f32.gmra.mxu0 %v484
      %v923 = vpop.f32.mrf.mxu0
      %v924 = vadd.f32 %v357, %v923
      %v925 = vpop.f32.mrf.mxu0
      %926 = vmatprep.mubr.f32.mxu0 0.0
      %927 = vmatmul.mubr.f32.gmra.mxu0 %v487
      %v928 = vpop.f32.mrf.mxu0
      %v929 = vadd.f32 %v357, %v928
      %v930 = vpop.f32.mrf.mxu0
      %931 = vmatprep.mubr.f32.mxu0 0.0
      %932 = vmatmul.mubr.f32.gmra.mxu0 %v490
      %v933 = vpop.f32.mrf.mxu0
      %v934 = vadd.f32 %v357, %v933
      %v935 = vpop.f32.mrf.mxu0
      %936 = vmatprep.mubr.f32.mxu0 0.0
      %937 = vmatmul.mubr.f32.gmra.mxu0 %v493
      %v938 = vpop.f32.mrf.mxu0
      %v939 = vadd.f32 %v357, %v938
      %v940 = vpop.f32.mrf.mxu0
      %941 = vmatprep.mubr.f32.mxu0 0.0
      %942 = vmatmul.mubr.f32.gmra.mxu0 %v496
      %v943 = vpop.f32.mrf.mxu0
      %v944 = vadd.f32 %v357, %v943
      %v945 = vpop.f32.mrf.mxu0
      %946 = vmatprep.mubr.f32.mxu0 0.0
      %947 = vmatmul.mubr.f32.gmra.mxu0 %v499
      %v948 = vpop.f32.mrf.mxu0
      %v949 = vadd.f32 %v357, %v948
      %v950 = vpop.f32.mrf.mxu0
      %951 = vmatprep.mubr.f32.mxu0 0.0
      %952 = vmatmul.mubr.f32.gmra.mxu0 %v502
      %v953 = vpop.f32.mrf.mxu0
      %v954 = vadd.f32 %v357, %v953
      %v955 = vpop.f32.mrf.mxu0
      %956 = vmatprep.mubr.f32.mxu0 0.0
      %957 = vmatmul.mubr.f32.gmra.mxu0 %v505
      %v958 = vpop.f32.mrf.mxu0
      %v959 = vadd.f32 %v357, %v958
      %v960 = vpop.f32.mrf.mxu0
      %961 = vmatprep.mubr.f32.mxu0 0.0
      %962 = vmatmul.mubr.f32.gmra.mxu0 %v508
      %v963 = vpop.f32.mrf.mxu0
      %v964 = vadd.f32 %v357, %v963
      %v965 = vpop.f32.mrf.mxu0
      %966 = vmatprep.mubr.f32.mxu0 0.0
      %967 = vmatmul.mubr.f32.gmra.mxu0 %v511
      %v968 = vpop.f32.mrf.mxu0
      %v969 = vadd.f32 %v357, %v968
      %v970 = vpop.f32.mrf.mxu0
      %971 = vmatprep.mubr.f32.mxu0 0.0
      %972 = vmatmul.mubr.f32.gmra.mxu0 %v514
      %v973 = vpop.f32.mrf.mxu0
      %v974 = vadd.f32 %v357, %v973
      %v975 = vpop.f32.mrf.mxu0
      %976 = vmatprep.mubr.f32.mxu0 0.0
      %977 = vmatmul.mubr.f32.gmra.mxu0 %v517
      %v978 = vpop.f32.mrf.mxu0
      %v979 = vadd.f32 %v357, %v978
      %v980 = vpop.f32.mrf.mxu0
      %981 = vmatprep.mubr.f32.mxu0 0.0
      %982 = vmatmul.mubr.f32.gmra.mxu0 %v520
      %v983 = vpop.f32.mrf.mxu0
      %v984 = vadd.f32 %v357, %v983
      %v985 = vpop.f32.mrf.mxu0
      %986 = vmatprep.mubr.f32.mxu0 0.0
      %987 = vmatmul.mubr.f32.gmra.mxu0 %v523
      %v988 = vpop.f32.mrf.mxu0
      %v989 = vadd.f32 %v357, %v988
      %v990 = vpop.f32.mrf.mxu0
      %991 = vmatprep.mubr.f32.mxu0 0.0
      %992 = vmatmul.mubr.f32.gmra.mxu0 %v526
      %v993 = vpop.f32.mrf.mxu0
      %v994 = vadd.f32 %v357, %v993
      %v995 = vpop.f32.mrf.mxu0
      %996 = vmatprep.mubr.f32.mxu0 0.0
      %997 = vmatmul.mubr.f32.gmra.mxu0 %v529
      %v998 = vpop.f32.mrf.mxu0
      %v999 = vadd.f32 %v357, %v998
      %v1000 = vpop.f32.mrf.mxu0
      %1001 = vmatprep.mubr.f32.mxu0 0.0
      %1002 = vmatmul.mubr.f32.gmra.mxu0 %v532
      %v1003 = vpop.f32.mrf.mxu0
      %v1004 = vadd.f32 %v357, %v1003
      %v1005 = vpop.f32.mrf.mxu0
      %1006 = vmatprep.mubr.f32.mxu0 0.0
      %1007 = vmatmul.mubr.f32.gmra.mxu0 %v535
      %v1008 = vpop.f32.mrf.mxu0
      %v1009 = vadd.f32 %v357, %v1008
      %v1010 = vpop.f32.mrf.mxu0
      %1011 = vmatprep.mubr.f32.mxu0 0.0
      %1012 = vmatmul.mubr.f32.gmra.mxu0 %v538
      %v1013 = vpop.f32.mrf.mxu0
      %v1014 = vadd.f32 %v357, %v1013
      %v1015 = vpop.f32.mrf.mxu0
      %1016 = vmatprep.mubr.f32.mxu0 0.0
      %1017 = vmatmul.mubr.f32.gmra.mxu0 %v541
      %v1018 = vpop.f32.mrf.mxu0
      %v1019 = vadd.f32 %v357, %v1018
      %v1020 = vpop.f32.mrf.mxu0
      %1021 = vmatprep.mubr.f32.mxu0 0.0
      %1022 = vmatmul.mubr.f32.gmra.mxu0 %v544
      %v1023 = vpop.f32.mrf.mxu0
      %v1024 = vadd.f32 %v357, %v1023
      %v1025 = vpop.f32.mrf.mxu0
      %1026 = vmatprep.mubr.f32.mxu0 0.0
      %1027 = vmatmul.mubr.f32.gmra.mxu0 %v547
      %v1028 = vpop.f32.mrf.mxu0
      %v1029 = vadd.f32 %v357, %v1028
      %v1030 = vpop.f32.mrf.mxu0
      %1031 = vmatprep.mubr.f32.mxu0 0.0
      %1032 = vmatmul.mubr.f32.gmra.mxu0 %v550
      %v1033 = vpop.f32.mrf.mxu0
      %v1034 = vadd.f32 %v357, %v1033
      %v1035 = vpop.f32.mrf.mxu0
      %1036 = vmatprep.mubr.f32.mxu0 0.0
      %1037 = vmatmul.mubr.f32.gmra.mxu0 %v553
      %v1038 = vpop.f32.mrf.mxu0
      %v1039 = vadd.f32 %v357, %v1038
      %v1040 = vpop.f32.mrf.mxu0
      %1041 = vmatprep.mubr.f32.mxu0 0.0
      %1042 = vmatmul.mubr.f32.gmra.mxu0 %v556
      %v1043 = vpop.f32.mrf.mxu0
      %v1044 = vadd.f32 %v357, %v1043
      %v1045 = vpop.f32.mrf.mxu0
      %1046 = vmatprep.mubr.f32.mxu0 0.0
      %1047 = vmatmul.mubr.f32.gmra.mxu0 %v559
      %v1048 = vpop.f32.mrf.mxu0
      %v1049 = vadd.f32 %v357, %v1048
      %v1050 = vpop.f32.mrf.mxu0
      %1051 = vmatprep.mubr.f32.mxu0 0.0
      %1052 = vmatmul.mubr.f32.gmra.mxu0 %v562
      %v1053 = vpop.f32.mrf.mxu0
      %v1054 = vadd.f32 %v357, %v1053
      %v1055 = vpop.f32.mrf.mxu0
      %1056 = vmatprep.mubr.f32.mxu0 0.0
      %1057 = vmatmul.mubr.f32.gmra.mxu0 %v565
      %v1058 = vpop.f32.mrf.mxu0
      %v1059 = vadd.f32 %v357, %v1058
      %v1060 = vpop.f32.mrf.mxu0
      %1061 = vmatprep.mubr.f32.mxu0 0.0
      %1062 = vmatmul.mubr.f32.gmra.mxu0 %v568
      %v1063 = vpop.f32.mrf.mxu0
      %v1064 = vadd.f32 %v357, %v1063
      %v1065 = vpop.f32.mrf.mxu0
      %1066 = vmatprep.mubr.f32.mxu0 0.0
      %1067 = vmatmul.mubr.f32.gmra.mxu0 %v571
      %v1068 = vpop.f32.mrf.mxu0
      %v1069 = vadd.f32 %v357, %v1068
      %v1070 = vpop.f32.mrf.mxu0
      %1071 = vmatprep.mubr.f32.mxu0 0.0
      %1072 = vmatmul.mubr.f32.gmra.mxu0 %v574
      %v1073 = vpop.f32.mrf.mxu0
      %v1074 = vadd.f32 %v357, %v1073
      %v1075 = vpop.f32.mrf.mxu0
      %1076 = vmatprep.mubr.f32.mxu0 0.0
      %1077 = vmatmul.mubr.f32.gmra.mxu0 %v577
      %v1078 = vpop.f32.mrf.mxu0
      %v1079 = vadd.f32 %v357, %v1078
      %v1080 = vpop.f32.mrf.mxu0
      %1081 = vmatprep.mubr.f32.mxu0 0.0
      %1082 = vmatmul.mubr.f32.gmra.mxu0 %v580
      %v1083 = vpop.f32.mrf.mxu0
      %v1084 = vadd.f32 %v357, %v1083
      %v1085 = vpop.f32.mrf.mxu0
      %1086 = vmatprep.mubr.f32.mxu0 0.0
      %1087 = vmatmul.mubr.f32.gmra.mxu0 %v583
      %v1088 = vpop.f32.mrf.mxu0
      %v1089 = vadd.f32 %v357, %v1088
      %v1090 = vpop.f32.mrf.mxu0
      %1091 = vmatprep.mubr.f32.mxu0 0.0
      %1092 = vmatmul.mubr.f32.gmra.mxu0 %v586
      %v1093 = vpop.f32.mrf.mxu0
      %v1094 = vadd.f32 %v357, %v1093
      %v1095 = vpop.f32.mrf.mxu0
      %1096 = vmatprep.mubr.f32.mxu0 0.0
      %1097 = vmatmul.mubr.f32.gmra.mxu0 %v589
      %v1098 = vpop.f32.mrf.mxu0
      %v1099 = vadd.f32 %v357, %v1098
      %v1100 = vpop.f32.mrf.mxu0
      %1101 = vmatprep.mubr.f32.mxu0 0.0
      %1102 = vmatmul.mubr.f32.gmra.mxu0 %v592
      %v1103 = vpop.f32.mrf.mxu0
      %v1104 = vadd.f32 %v357, %v1103
      %v1105 = vpop.f32.mrf.mxu0
      %1106 = vmatprep.mubr.f32.mxu0 0.0
      %1107 = vmatmul.mubr.f32.gmra.mxu0 %v595
      %v1108 = vpop.f32.mrf.mxu0
      %v1109 = vadd.f32 %v357, %v1108
      %v1110 = vpop.f32.mrf.mxu0
      %1111 = vmatprep.mubr.f32.mxu0 0.0
      %1112 = vmatmul.mubr.f32.gmra.mxu0 %v598
      %v1113 = vpop.f32.mrf.mxu0
      %v1114 = vadd.f32 %v357, %v1113
      %v1115 = vpop.f32.mrf.mxu0
      %1116 = vmatprep.mubr.f32.mxu0 0.0
      %1117 = vmatmul.mubr.f32.gmra.mxu0 %v601
      %v1118 = vpop.f32.mrf.mxu0
      %v1119 = vadd.f32 %v357, %v1118
      %v1120 = vpop.f32.mrf.mxu0
      %1121 = vmatprep.mubr.f32.mxu0 0.0
      %1122 = vmatmul.mubr.f32.gmra.mxu0 %v604
      %v1123 = vpop.f32.mrf.mxu0
      %v1124 = vadd.f32 %v357, %v1123
      %v1125 = vpop.f32.mrf.mxu0
      %1126 = vmatprep.mubr.f32.mxu0 0.0
      %1127 = vmatmul.mubr.f32.gmra.mxu0 %v607
      %v1128 = vpop.f32.mrf.mxu0
      %v1129 = vadd.f32 %v357, %v1128
      %v1130 = vpop.f32.mrf.mxu0
      %1131 = vmatprep.mubr.f32.mxu0 0.0
      %1132 = vmatmul.mubr.f32.gmra.mxu0 %v610
      %v1133 = vpop.f32.mrf.mxu0
      %v1134 = vadd.f32 %v357, %v1133
      %v1135 = vpop.f32.mrf.mxu0
      %1136 = vmatprep.mubr.f32.mxu0 0.0
      %1137 = vmatmul.mubr.f32.gmra.mxu0 %v613
      %v1138 = vpop.f32.mrf.mxu0
      %v1139 = vadd.f32 %v357, %v1138
      %v1140 = vpop.f32.mrf.mxu0
      %1141 = vmatprep.mubr.f32.mxu0 0.0
      %1142 = vmatmul.mubr.f32.gmra.mxu0 %v616
      %v1143 = vpop.f32.mrf.mxu0
      %v1144 = vadd.f32 %v357, %v1143
      %v1145 = vpop.f32.mrf.mxu0
      %1146 = vmatprep.mubr.f32.mxu0 0.0
      %1147 = vmatmul.mubr.f32.gmra.mxu0 %v619
      %v1148 = vpop.f32.mrf.mxu0
      %v1149 = vadd.f32 %v357, %v1148
      %v1150 = vpop.f32.mrf.mxu0
      %1151 = vmatprep.mubr.f32.mxu0 0.0
      %1152 = vmatmul.mubr.f32.gmra.mxu0 %v622
      %v1153 = vpop.f32.mrf.mxu0
      %v1154 = vadd.f32 %v357, %v1153
      %v1155 = vpop.f32.mrf.mxu0
      %1156 = vmatprep.mubr.f32.mxu0 0.0
      %1157 = vmatmul.mubr.f32.gmra.mxu0 %v625
      %v1158 = vpop.f32.mrf.mxu0
      %v1159 = vadd.f32 %v357, %v1158
      %v1160 = vpop.f32.mrf.mxu0
      %1161 = vmatprep.mubr.f32.mxu0 0.0
      %1162 = vmatmul.mubr.f32.gmra.mxu0 %v628
      %v1163 = vpop.f32.mrf.mxu0
      %v1164 = vadd.f32 %v357, %v1163
      %v1165 = vpop.f32.mrf.mxu0
      %1166 = vmatprep.mubr.f32.mxu0 0.0
      %1167 = vmatmul.mubr.f32.gmra.mxu0 %v631
      %v1168 = vpop.f32.mrf.mxu0
      %v1169 = vadd.f32 %v357, %v1168
      %v1170 = vpop.f32.mrf.mxu0
      %1171 = vmatprep.mubr.f32.mxu0 0.0
      %1172 = vmatmul.mubr.f32.gmra.mxu0 %v634
      %v1173 = vpop.f32.mrf.mxu0
      %v1174 = vadd.f32 %v357, %v1173
      %v1175 = vpop.f32.mrf.mxu0
      %1176 = vmatprep.mubr.f32.mxu0 0.0
      %1177 = vmatmul.mubr.f32.gmra.mxu0 %v637
      %v1178 = vpop.f32.mrf.mxu0
      %v1179 = vadd.f32 %v357, %v1178
      %v1180 = vpop.f32.mrf.mxu0
      %1181 = vmatprep.mubr.f32.mxu0 0.0
      %1182 = vmatmul.mubr.f32.gmra.mxu0 %v640
      %v1183 = vpop.f32.mrf.mxu0
      %v1184 = vadd.f32 %v357, %v1183
      %v1185 = vpop.f32.mrf.mxu0
      %1186 = vmatprep.mubr.f32.mxu0 0.0
      %1187 = vmatmul.mubr.f32.gmra.mxu0 %v643
      %v1188 = vpop.f32.mrf.mxu0
      %v1189 = vadd.f32 %v357, %v1188
      %v1190 = vpop.f32.mrf.mxu0
      %1191 = vmatprep.mubr.f32.mxu0 0.0
      %1192 = vmatmul.mubr.f32.gmra.mxu0 %v646
      %v1193 = vpop.f32.mrf.mxu0
      %v1194 = vadd.f32 %v357, %v1193
      %v1195 = vpop.f32.mrf.mxu0
      %1196 = vdwg.mxu0
      %v1197 = vlaneseq
      %v1198 = vand.u32 %v1197, 127
      %vm1199 = vcmp.ge.s32.totalorder %v1198, 4
      %vm1200 = vcmp.lt.s32.totalorder %v1198, 20
      %vm1201 = vmand %vm1199, %vm1200
      %v1202 = vmax.f32 %v719, 0.0
      %v1203 = vmax.f32 %v724, 0.0
      %v1204 = vmax.f32 %v729, 0.0
      %v1205 = vmax.f32 %v734, 0.0
      %v1206 = vmax.f32 %v739, 0.0
      %v1207 = vmax.f32 %v744, 0.0
      %v1208 = vmax.f32 %v749, 0.0
      %v1209 = vmax.f32 %v754, 0.0
      %v1210 = vmax.f32 %v759, 0.0
      %v1211 = vmax.f32 %v764, 0.0
      %v1212 = vmax.f32 %v769, 0.0
      %v1213 = vmax.f32 %v774, 0.0
      %v1214 = vmax.f32 %v779, 0.0
      %v1215 = vmax.f32 %v784, 0.0
      %v1216 = vmax.f32 %v789, 0.0
      %v1217 = vmax.f32 %v794, 0.0
      %v1218 = vmax.f32 %v799, 0.0
      %v1219 = vmax.f32 %v804, 0.0
      %v1220 = vmax.f32 %v809, 0.0
      %v1221 = vmax.f32 %v814, 0.0
      %v1222 = vmax.f32 %v819, 0.0
      %v1223 = vmax.f32 %v824, 0.0
      %v1224 = vmax.f32 %v829, 0.0
      %v1225 = vmax.f32 %v834, 0.0
      %v1226 = vmax.f32 %v839, 0.0
      %v1227 = vmax.f32 %v844, 0.0
      %v1228 = vmax.f32 %v849, 0.0
      %v1229 = vmax.f32 %v854, 0.0
      %v1230 = vmax.f32 %v859, 0.0
      %v1231 = vmax.f32 %v864, 0.0
      %v1232 = vmax.f32 %v869, 0.0
      %v1233 = vmax.f32 %v874, 0.0
      %v1234 = vmax.f32 %v879, 0.0
      %v1235 = vmax.f32 %v884, 0.0
      %v1236 = vmax.f32 %v889, 0.0
      %v1237 = vmax.f32 %v894, 0.0
      %v1238 = vmax.f32 %v899, 0.0
      %v1239 = vmax.f32 %v904, 0.0
      %v1240 = vmax.f32 %v909, 0.0
      %v1241 = vmax.f32 %v914, 0.0
      %v1242 = vmax.f32 %v919, 0.0
      %v1243 = vmax.f32 %v924, 0.0
      %v1244 = vmax.f32 %v929, 0.0
      %v1245 = vmax.f32 %v934, 0.0
      %v1246 = vmax.f32 %v939, 0.0
      %v1247 = vmax.f32 %v944, 0.0
      %v1248 = vmax.f32 %v949, 0.0
      %v1249 = vmax.f32 %v954, 0.0
      %v1250 = vmax.f32 %v959, 0.0
      %v1251 = vmax.f32 %v964, 0.0
      %v1252 = vmax.f32 %v969, 0.0
      %v1253 = vmax.f32 %v974, 0.0
      %v1254 = vmax.f32 %v979, 0.0
      %v1255 = vmax.f32 %v984, 0.0
      %v1256 = vmax.f32 %v989, 0.0
      %v1257 = vmax.f32 %v994, 0.0
      %v1258 = vmax.f32 %v999, 0.0
      %v1259 = vmax.f32 %v1004, 0.0
      %v1260 = vmax.f32 %v1009, 0.0
      %v1261 = vmax.f32 %v1014, 0.0
      %v1262 = vmax.f32 %v1019, 0.0
      %v1263 = vmax.f32 %v1024, 0.0
      %v1264 = vmax.f32 %v1029, 0.0
      %v1265 = vmax.f32 %v1034, 0.0
      %v1266 = vmax.f32 %v1039, 0.0
      %v1267 = vmax.f32 %v1044, 0.0
      %v1268 = vmax.f32 %v1049, 0.0
      %v1269 = vmax.f32 %v1054, 0.0
      %v1270 = vmax.f32 %v1059, 0.0
      %v1271 = vmax.f32 %v1064, 0.0
      %v1272 = vmax.f32 %v1069, 0.0
      %v1273 = vmax.f32 %v1074, 0.0
      %v1274 = vmax.f32 %v1079, 0.0
      %v1275 = vmax.f32 %v1084, 0.0
      %v1276 = vmax.f32 %v1089, 0.0
      %v1277 = vmax.f32 %v1094, 0.0
      %v1278 = vmax.f32 %v1099, 0.0
      %v1279 = vmax.f32 %v1104, 0.0
      %v1280 = vmax.f32 %v1109, 0.0
      %v1281 = vmax.f32 %v1114, 0.0
      %v1282 = vmax.f32 %v1119, 0.0
      %v1283 = vmax.f32 %v1124, 0.0
      %v1284 = vmax.f32 %v1129, 0.0
      %v1285 = vmax.f32 %v1134, 0.0
      %v1286 = vmax.f32 %v1139, 0.0
      %v1287 = vmax.f32 %v1144, 0.0
      %v1288 = vmax.f32 %v1149, 0.0
      %v1289 = vmax.f32 %v1154, 0.0
      %v1290 = vmax.f32 %v1159, 0.0
      %v1291 = vmax.f32 %v1164, 0.0
      %v1292 = vmax.f32 %v1169, 0.0
      %v1293 = vmax.f32 %v1174, 0.0
      %v1294 = vmax.f32 %v1179, 0.0
      %v1295 = vmax.f32 %v1184, 0.0
      %v1296 = vmax.f32 %v1189, 0.0
      %v1297 = vmax.f32 %v1194, 0.0
      %v1298 = vsel %vm1201, %v1202, %v719
      %v1299 = vsel %vm1201, %v1203, %v724
      %v1300 = vsel %vm1201, %v1204, %v729
      %v1301 = vsel %vm1201, %v1205, %v734
      %v1302 = vsel %vm1201, %v1206, %v739
      %v1303 = vsel %vm1201, %v1207, %v744
      %v1304 = vsel %vm1201, %v1208, %v749
      %v1305 = vsel %vm1201, %v1209, %v754
      %v1306 = vsel %vm1201, %v1210, %v759
      %v1307 = vsel %vm1201, %v1211, %v764
      %v1308 = vsel %vm1201, %v1212, %v769
      %v1309 = vsel %vm1201, %v1213, %v774
      %v1310 = vsel %vm1201, %v1214, %v779
      %v1311 = vsel %vm1201, %v1215, %v784
      %v1312 = vsel %vm1201, %v1216, %v789
      %v1313 = vsel %vm1201, %v1217, %v794
      %v1314 = vsel %vm1201, %v1218, %v799
      %v1315 = vsel %vm1201, %v1219, %v804
      %v1316 = vsel %vm1201, %v1220, %v809
      %v1317 = vsel %vm1201, %v1221, %v814
      %v1318 = vsel %vm1201, %v1222, %v819
      %v1319 = vsel %vm1201, %v1223, %v824
      %v1320 = vsel %vm1201, %v1224, %v829
      %v1321 = vsel %vm1201, %v1225, %v834
      %v1322 = vsel %vm1201, %v1226, %v839
      %v1323 = vsel %vm1201, %v1227, %v844
      %v1324 = vsel %vm1201, %v1228, %v849
      %v1325 = vsel %vm1201, %v1229, %v854
      %v1326 = vsel %vm1201, %v1230, %v859
      %v1327 = vsel %vm1201, %v1231, %v864
      %v1328 = vsel %vm1201, %v1232, %v869
      %v1329 = vsel %vm1201, %v1233, %v874
      %v1330 = vsel %vm1201, %v1234, %v879
      %v1331 = vsel %vm1201, %v1235, %v884
      %v1332 = vsel %vm1201, %v1236, %v889
      %v1333 = vsel %vm1201, %v1237, %v894
      %v1334 = vsel %vm1201, %v1238, %v899
      %v1335 = vsel %vm1201, %v1239, %v904
      %v1336 = vsel %vm1201, %v1240, %v909
      %v1337 = vsel %vm1201, %v1241, %v914
      %v1338 = vsel %vm1201, %v1242, %v919
      %v1339 = vsel %vm1201, %v1243, %v924
      %v1340 = vsel %vm1201, %v1244, %v929
      %v1341 = vsel %vm1201, %v1245, %v934
      %v1342 = vsel %vm1201, %v1246, %v939
      %v1343 = vsel %vm1201, %v1247, %v944
      %v1344 = vsel %vm1201, %v1248, %v949
      %v1345 = vsel %vm1201, %v1249, %v954
      %v1346 = vsel %vm1201, %v1250, %v959
      %v1347 = vsel %vm1201, %v1251, %v964
      %v1348 = vsel %vm1201, %v1252, %v969
      %v1349 = vsel %vm1201, %v1253, %v974
      %v1350 = vsel %vm1201, %v1254, %v979
      %v1351 = vsel %vm1201, %v1255, %v984
      %v1352 = vsel %vm1201, %v1256, %v989
      %v1353 = vsel %vm1201, %v1257, %v994
      %v1354 = vsel %vm1201, %v1258, %v999
      %v1355 = vsel %vm1201, %v1259, %v1004
      %v1356 = vsel %vm1201, %v1260, %v1009
      %v1357 = vsel %vm1201, %v1261, %v1014
      %v1358 = vsel %vm1201, %v1262, %v1019
      %v1359 = vsel %vm1201, %v1263, %v1024
      %v1360 = vsel %vm1201, %v1264, %v1029
      %v1361 = vsel %vm1201, %v1265, %v1034
      %v1362 = vsel %vm1201, %v1266, %v1039
      %v1363 = vsel %vm1201, %v1267, %v1044
      %v1364 = vsel %vm1201, %v1268, %v1049
      %v1365 = vsel %vm1201, %v1269, %v1054
      %v1366 = vsel %vm1201, %v1270, %v1059
      %v1367 = vsel %vm1201, %v1271, %v1064
      %v1368 = vsel %vm1201, %v1272, %v1069
      %v1369 = vsel %vm1201, %v1273, %v1074
      %v1370 = vsel %vm1201, %v1274, %v1079
      %v1371 = vsel %vm1201, %v1275, %v1084
      %v1372 = vsel %vm1201, %v1276, %v1089
      %v1373 = vsel %vm1201, %v1277, %v1094
      %v1374 = vsel %vm1201, %v1278, %v1099
      %v1375 = vsel %vm1201, %v1279, %v1104
      %v1376 = vsel %vm1201, %v1280, %v1109
      %v1377 = vsel %vm1201, %v1281, %v1114
      %v1378 = vsel %vm1201, %v1282, %v1119
      %v1379 = vsel %vm1201, %v1283, %v1124
      %v1380 = vsel %vm1201, %v1284, %v1129
      %v1381 = vsel %vm1201, %v1285, %v1134
      %v1382 = vsel %vm1201, %v1286, %v1139
      %v1383 = vsel %vm1201, %v1287, %v1144
      %v1384 = vsel %vm1201, %v1288, %v1149
      %v1385 = vsel %vm1201, %v1289, %v1154
      %v1386 = vsel %vm1201, %v1290, %v1159
      %v1387 = vsel %vm1201, %v1291, %v1164
      %v1388 = vsel %vm1201, %v1292, %v1169
      %v1389 = vsel %vm1201, %v1293, %v1174
      %v1390 = vsel %vm1201, %v1294, %v1179
      %v1391 = vsel %vm1201, %v1295, %v1184
      %v1392 = vsel %vm1201, %v1296, %v1189
      %v1393 = vsel %vm1201, %v1297, %v1194
      %v1394 = vld [vmem:[%s3] sm:$0xf]
      %v1395 = vld [vmem:[%s4] sm:$0x1]
      %v1397 = vlaneseq
      %v1398 = vshrl.u32 %v1397, 7
      %v1399 = vsub.s32 0, %v1398
      %v1400 = vrot.slane %v1395, %v1399
      %v1403 = vsel %vm648, %v1394, 0
      %1405 = vmatprep.subr.mxu0 0.0
      %1406 = vmatpush1.msra.mxu0 0.0
      %1407 = vmatprep.subr.mxu0 0.0
      %1408 = vmatpush1.msra.mxu0 0.0
      %1409 = vmatprep.subr.mxu0 0.0
      %1410 = vmatpush1.msra.mxu0 0.0
      %1411 = vmatprep.subr.mxu0 0.0
      %1412 = vmatpush1.msra.mxu0 0.0
      %1413 = vmatprep.subr.mxu0 0.0
      %1414 = vmatpush1.msra.mxu0 0.0
      %1415 = vmatprep.subr.mxu0 0.0
      %1416 = vmatpush1.msra.mxu0 0.0
      %1417 = vmatprep.subr.mxu0 0.0
      %1418 = vmatpush1.msra.mxu0 0.0
      %1419 = vmatprep.subr.mxu0 0.0
      %1420 = vmatpush1.msra.mxu0 0.0
      %1421 = vmatprep.subr.mxu0 0.0
      %1422 = vmatpush1.msra.mxu0 0.0
      %1423 = vmatprep.subr.mxu0 0.0
      %1424 = vmatpush1.msra.mxu0 0.0
      %1425 = vmatprep.subr.mxu0 0.0
      %1426 = vmatpush1.msra.mxu0 0.0
      %1427 = vmatprep.subr.mxu0 0.0
      %1428 = vmatpush1.msra.mxu0 0.0
      %1429 = vmatprep.subr.mxu0 0.0
      %1430 = vmatpush1.msra.mxu0 0.0
      %1431 = vmatprep.subr.mxu0 0.0
      %1432 = vmatpush1.msra.mxu0 0.0
      %1433 = vmatprep.subr.mxu0 0.0
      %1434 = vmatpush1.msra.mxu0 0.0
      %1435 = vmatprep.subr.mxu0 0.0
      %1436 = vmatpush1.msra.mxu0 %v1403
      %1437 = vmatprep.subr.mxu0 0.0
      %1438 = vmatpush2.msra.mxu0 0.0
      %1439 = vmatprep.subr.mxu0 0.0
      %1440 = vmatpush2.msra.mxu0 0.0
      %1441 = vmatprep.subr.mxu0 0.0
      %1442 = vmatpush2.msra.mxu0 0.0
      %1443 = vmatprep.subr.mxu0 0.0
      %1444 = vmatpush2.msra.mxu0 0.0
      %1445 = vmatprep.subr.mxu0 0.0
      %1446 = vmatpush2.msra.mxu0 0.0
      %1447 = vmatprep.subr.mxu0 0.0
      %1448 = vmatpush2.msra.mxu0 0.0
      %1449 = vmatprep.subr.mxu0 0.0
      %1450 = vmatpush2.msra.mxu0 0.0
      %1451 = vmatprep.subr.mxu0 0.0
      %1452 = vmatpush2.msra.mxu0 0.0
      %1453 = vmatprep.subr.mxu0 0.0
      %1454 = vmatpush2.msra.mxu0 0.0
      %1455 = vmatprep.subr.mxu0 0.0
      %1456 = vmatpush2.msra.mxu0 0.0
      %1457 = vmatprep.subr.mxu0 0.0
      %1458 = vmatpush2.msra.mxu0 0.0
      %1459 = vmatprep.subr.mxu0 0.0
      %1460 = vmatpush2.msra.mxu0 0.0
      %1461 = vmatprep.subr.mxu0 0.0
      %1462 = vmatpush2.msra.mxu0 0.0
      %1463 = vmatprep.subr.mxu0 0.0
      %1464 = vmatpush2.msra.mxu0 0.0
      %1465 = vmatprep.subr.mxu0 0.0
      %1466 = vmatpush2.msra.mxu0 0.0
      %1467 = vmatprep.subr.mxu0 0.0
      %1468 = vmatpush2.msra.mxu0 0.0
      %1469 = vmatprep.mubr.f32.mxu0 0.0
      %1470 = vmatmul.mubr.f32.gmra.mxu0 %v361
      %v1471 = vpop.f32.mrf.mxu0
      %v1472 = vadd.f32 %v1400, %v1471
      %v1473 = vpop.f32.mrf.mxu0
      %1474 = vmatprep.mubr.f32.mxu0 0.0
      %1475 = vmatmul.mubr.f32.gmra.mxu0 %v364
      %v1476 = vpop.f32.mrf.mxu0
      %v1477 = vadd.f32 %v1400, %v1476
      %v1478 = vpop.f32.mrf.mxu0
      %1479 = vmatprep.mubr.f32.mxu0 0.0
      %1480 = vmatmul.mubr.f32.gmra.mxu0 %v367
      %v1481 = vpop.f32.mrf.mxu0
      %v1482 = vadd.f32 %v1400, %v1481
      %v1483 = vpop.f32.mrf.mxu0
      %1484 = vmatprep.mubr.f32.mxu0 0.0
      %1485 = vmatmul.mubr.f32.gmra.mxu0 %v370
      %v1486 = vpop.f32.mrf.mxu0
      %v1487 = vadd.f32 %v1400, %v1486
      %v1488 = vpop.f32.mrf.mxu0
      %1489 = vmatprep.mubr.f32.mxu0 0.0
      %1490 = vmatmul.mubr.f32.gmra.mxu0 %v373
      %v1491 = vpop.f32.mrf.mxu0
      %v1492 = vadd.f32 %v1400, %v1491
      %v1493 = vpop.f32.mrf.mxu0
      %1494 = vmatprep.mubr.f32.mxu0 0.0
      %1495 = vmatmul.mubr.f32.gmra.mxu0 %v376
      %v1496 = vpop.f32.mrf.mxu0
      %v1497 = vadd.f32 %v1400, %v1496
      %v1498 = vpop.f32.mrf.mxu0
      %1499 = vmatprep.mubr.f32.mxu0 0.0
      %1500 = vmatmul.mubr.f32.gmra.mxu0 %v379
      %v1501 = vpop.f32.mrf.mxu0
      %v1502 = vadd.f32 %v1400, %v1501
      %v1503 = vpop.f32.mrf.mxu0
      %1504 = vmatprep.mubr.f32.mxu0 0.0
      %1505 = vmatmul.mubr.f32.gmra.mxu0 %v382
      %v1506 = vpop.f32.mrf.mxu0
      %v1507 = vadd.f32 %v1400, %v1506
      %v1508 = vpop.f32.mrf.mxu0
      %1509 = vmatprep.mubr.f32.mxu0 0.0
      %1510 = vmatmul.mubr.f32.gmra.mxu0 %v385
      %v1511 = vpop.f32.mrf.mxu0
      %v1512 = vadd.f32 %v1400, %v1511
      %v1513 = vpop.f32.mrf.mxu0
      %1514 = vmatprep.mubr.f32.mxu0 0.0
      %1515 = vmatmul.mubr.f32.gmra.mxu0 %v388
      %v1516 = vpop.f32.mrf.mxu0
      %v1517 = vadd.f32 %v1400, %v1516
      %v1518 = vpop.f32.mrf.mxu0
      %1519 = vmatprep.mubr.f32.mxu0 0.0
      %1520 = vmatmul.mubr.f32.gmra.mxu0 %v391
      %v1521 = vpop.f32.mrf.mxu0
      %v1522 = vadd.f32 %v1400, %v1521
      %v1523 = vpop.f32.mrf.mxu0
      %1524 = vmatprep.mubr.f32.mxu0 0.0
      %1525 = vmatmul.mubr.f32.gmra.mxu0 %v394
      %v1526 = vpop.f32.mrf.mxu0
      %v1527 = vadd.f32 %v1400, %v1526
      %v1528 = vpop.f32.mrf.mxu0
      %1529 = vmatprep.mubr.f32.mxu0 0.0
      %1530 = vmatmul.mubr.f32.gmra.mxu0 %v397
      %v1531 = vpop.f32.mrf.mxu0
      %v1532 = vadd.f32 %v1400, %v1531
      %v1533 = vpop.f32.mrf.mxu0
      %1534 = vmatprep.mubr.f32.mxu0 0.0
      %1535 = vmatmul.mubr.f32.gmra.mxu0 %v400
      %v1536 = vpop.f32.mrf.mxu0
      %v1537 = vadd.f32 %v1400, %v1536
      %v1538 = vpop.f32.mrf.mxu0
      %1539 = vmatprep.mubr.f32.mxu0 0.0
      %1540 = vmatmul.mubr.f32.gmra.mxu0 %v403
      %v1541 = vpop.f32.mrf.mxu0
      %v1542 = vadd.f32 %v1400, %v1541
      %v1543 = vpop.f32.mrf.mxu0
      %1544 = vmatprep.mubr.f32.mxu0 0.0
      %1545 = vmatmul.mubr.f32.gmra.mxu0 %v406
      %v1546 = vpop.f32.mrf.mxu0
      %v1547 = vadd.f32 %v1400, %v1546
      %v1548 = vpop.f32.mrf.mxu0
      %1549 = vmatprep.mubr.f32.mxu0 0.0
      %1550 = vmatmul.mubr.f32.gmra.mxu0 %v409
      %v1551 = vpop.f32.mrf.mxu0
      %v1552 = vadd.f32 %v1400, %v1551
      %v1553 = vpop.f32.mrf.mxu0
      %1554 = vmatprep.mubr.f32.mxu0 0.0
      %1555 = vmatmul.mubr.f32.gmra.mxu0 %v412
      %v1556 = vpop.f32.mrf.mxu0
      %v1557 = vadd.f32 %v1400, %v1556
      %v1558 = vpop.f32.mrf.mxu0
      %1559 = vmatprep.mubr.f32.mxu0 0.0
      %1560 = vmatmul.mubr.f32.gmra.mxu0 %v415
      %v1561 = vpop.f32.mrf.mxu0
      %v1562 = vadd.f32 %v1400, %v1561
      %v1563 = vpop.f32.mrf.mxu0
      %1564 = vmatprep.mubr.f32.mxu0 0.0
      %1565 = vmatmul.mubr.f32.gmra.mxu0 %v418
      %v1566 = vpop.f32.mrf.mxu0
      %v1567 = vadd.f32 %v1400, %v1566
      %v1568 = vpop.f32.mrf.mxu0
      %1569 = vmatprep.mubr.f32.mxu0 0.0
      %1570 = vmatmul.mubr.f32.gmra.mxu0 %v421
      %v1571 = vpop.f32.mrf.mxu0
      %v1572 = vadd.f32 %v1400, %v1571
      %v1573 = vpop.f32.mrf.mxu0
      %1574 = vmatprep.mubr.f32.mxu0 0.0
      %1575 = vmatmul.mubr.f32.gmra.mxu0 %v424
      %v1576 = vpop.f32.mrf.mxu0
      %v1577 = vadd.f32 %v1400, %v1576
      %v1578 = vpop.f32.mrf.mxu0
      %1579 = vmatprep.mubr.f32.mxu0 0.0
      %1580 = vmatmul.mubr.f32.gmra.mxu0 %v427
      %v1581 = vpop.f32.mrf.mxu0
      %v1582 = vadd.f32 %v1400, %v1581
      %v1583 = vpop.f32.mrf.mxu0
      %1584 = vmatprep.mubr.f32.mxu0 0.0
      %1585 = vmatmul.mubr.f32.gmra.mxu0 %v430
      %v1586 = vpop.f32.mrf.mxu0
      %v1587 = vadd.f32 %v1400, %v1586
      %v1588 = vpop.f32.mrf.mxu0
      %1589 = vmatprep.mubr.f32.mxu0 0.0
      %1590 = vmatmul.mubr.f32.gmra.mxu0 %v433
      %v1591 = vpop.f32.mrf.mxu0
      %v1592 = vadd.f32 %v1400, %v1591
      %v1593 = vpop.f32.mrf.mxu0
      %1594 = vmatprep.mubr.f32.mxu0 0.0
      %1595 = vmatmul.mubr.f32.gmra.mxu0 %v436
      %v1596 = vpop.f32.mrf.mxu0
      %v1597 = vadd.f32 %v1400, %v1596
      %v1598 = vpop.f32.mrf.mxu0
      %1599 = vmatprep.mubr.f32.mxu0 0.0
      %1600 = vmatmul.mubr.f32.gmra.mxu0 %v439
      %v1601 = vpop.f32.mrf.mxu0
      %v1602 = vadd.f32 %v1400, %v1601
      %v1603 = vpop.f32.mrf.mxu0
      %1604 = vmatprep.mubr.f32.mxu0 0.0
      %1605 = vmatmul.mubr.f32.gmra.mxu0 %v442
      %v1606 = vpop.f32.mrf.mxu0
      %v1607 = vadd.f32 %v1400, %v1606
      %v1608 = vpop.f32.mrf.mxu0
      %1609 = vmatprep.mubr.f32.mxu0 0.0
      %1610 = vmatmul.mubr.f32.gmra.mxu0 %v445
      %v1611 = vpop.f32.mrf.mxu0
      %v1612 = vadd.f32 %v1400, %v1611
      %v1613 = vpop.f32.mrf.mxu0
      %1614 = vmatprep.mubr.f32.mxu0 0.0
      %1615 = vmatmul.mubr.f32.gmra.mxu0 %v448
      %v1616 = vpop.f32.mrf.mxu0
      %v1617 = vadd.f32 %v1400, %v1616
      %v1618 = vpop.f32.mrf.mxu0
      %1619 = vmatprep.mubr.f32.mxu0 0.0
      %1620 = vmatmul.mubr.f32.gmra.mxu0 %v451
      %v1621 = vpop.f32.mrf.mxu0
      %v1622 = vadd.f32 %v1400, %v1621
      %v1623 = vpop.f32.mrf.mxu0
      %1624 = vmatprep.mubr.f32.mxu0 0.0
      %1625 = vmatmul.mubr.f32.gmra.mxu0 %v454
      %v1626 = vpop.f32.mrf.mxu0
      %v1627 = vadd.f32 %v1400, %v1626
      %v1628 = vpop.f32.mrf.mxu0
      %1629 = vmatprep.mubr.f32.mxu0 0.0
      %1630 = vmatmul.mubr.f32.gmra.mxu0 %v457
      %v1631 = vpop.f32.mrf.mxu0
      %v1632 = vadd.f32 %v1400, %v1631
      %v1633 = vpop.f32.mrf.mxu0
      %1634 = vmatprep.mubr.f32.mxu0 0.0
      %1635 = vmatmul.mubr.f32.gmra.mxu0 %v460
      %v1636 = vpop.f32.mrf.mxu0
      %v1637 = vadd.f32 %v1400, %v1636
      %v1638 = vpop.f32.mrf.mxu0
      %1639 = vmatprep.mubr.f32.mxu0 0.0
      %1640 = vmatmul.mubr.f32.gmra.mxu0 %v463
      %v1641 = vpop.f32.mrf.mxu0
      %v1642 = vadd.f32 %v1400, %v1641
      %v1643 = vpop.f32.mrf.mxu0
      %1644 = vmatprep.mubr.f32.mxu0 0.0
      %1645 = vmatmul.mubr.f32.gmra.mxu0 %v466
      %v1646 = vpop.f32.mrf.mxu0
      %v1647 = vadd.f32 %v1400, %v1646
      %v1648 = vpop.f32.mrf.mxu0
      %1649 = vmatprep.mubr.f32.mxu0 0.0
      %1650 = vmatmul.mubr.f32.gmra.mxu0 %v469
      %v1651 = vpop.f32.mrf.mxu0
      %v1652 = vadd.f32 %v1400, %v1651
      %v1653 = vpop.f32.mrf.mxu0
      %1654 = vmatprep.mubr.f32.mxu0 0.0
      %1655 = vmatmul.mubr.f32.gmra.mxu0 %v472
      %v1656 = vpop.f32.mrf.mxu0
      %v1657 = vadd.f32 %v1400, %v1656
      %v1658 = vpop.f32.mrf.mxu0
      %1659 = vmatprep.mubr.f32.mxu0 0.0
      %1660 = vmatmul.mubr.f32.gmra.mxu0 %v475
      %v1661 = vpop.f32.mrf.mxu0
      %v1662 = vadd.f32 %v1400, %v1661
      %v1663 = vpop.f32.mrf.mxu0
      %1664 = vmatprep.mubr.f32.mxu0 0.0
      %1665 = vmatmul.mubr.f32.gmra.mxu0 %v478
      %v1666 = vpop.f32.mrf.mxu0
      %v1667 = vadd.f32 %v1400, %v1666
      %v1668 = vpop.f32.mrf.mxu0
      %1669 = vmatprep.mubr.f32.mxu0 0.0
      %1670 = vmatmul.mubr.f32.gmra.mxu0 %v481
      %v1671 = vpop.f32.mrf.mxu0
      %v1672 = vadd.f32 %v1400, %v1671
      %v1673 = vpop.f32.mrf.mxu0
      %1674 = vmatprep.mubr.f32.mxu0 0.0
      %1675 = vmatmul.mubr.f32.gmra.mxu0 %v484
      %v1676 = vpop.f32.mrf.mxu0
      %v1677 = vadd.f32 %v1400, %v1676
      %v1678 = vpop.f32.mrf.mxu0
      %1679 = vmatprep.mubr.f32.mxu0 0.0
      %1680 = vmatmul.mubr.f32.gmra.mxu0 %v487
      %v1681 = vpop.f32.mrf.mxu0
      %v1682 = vadd.f32 %v1400, %v1681
      %v1683 = vpop.f32.mrf.mxu0
      %1684 = vmatprep.mubr.f32.mxu0 0.0
      %1685 = vmatmul.mubr.f32.gmra.mxu0 %v490
      %v1686 = vpop.f32.mrf.mxu0
      %v1687 = vadd.f32 %v1400, %v1686
      %v1688 = vpop.f32.mrf.mxu0
      %1689 = vmatprep.mubr.f32.mxu0 0.0
      %1690 = vmatmul.mubr.f32.gmra.mxu0 %v493
      %v1691 = vpop.f32.mrf.mxu0
      %v1692 = vadd.f32 %v1400, %v1691
      %v1693 = vpop.f32.mrf.mxu0
      %1694 = vmatprep.mubr.f32.mxu0 0.0
      %1695 = vmatmul.mubr.f32.gmra.mxu0 %v496
      %v1696 = vpop.f32.mrf.mxu0
      %v1697 = vadd.f32 %v1400, %v1696
      %v1698 = vpop.f32.mrf.mxu0
      %1699 = vmatprep.mubr.f32.mxu0 0.0
      %1700 = vmatmul.mubr.f32.gmra.mxu0 %v499
      %v1701 = vpop.f32.mrf.mxu0
      %v1702 = vadd.f32 %v1400, %v1701
      %v1703 = vpop.f32.mrf.mxu0
      %1704 = vmatprep.mubr.f32.mxu0 0.0
      %1705 = vmatmul.mubr.f32.gmra.mxu0 %v502
      %v1706 = vpop.f32.mrf.mxu0
      %v1707 = vadd.f32 %v1400, %v1706
      %v1708 = vpop.f32.mrf.mxu0
      %1709 = vmatprep.mubr.f32.mxu0 0.0
      %1710 = vmatmul.mubr.f32.gmra.mxu0 %v505
      %v1711 = vpop.f32.mrf.mxu0
      %v1712 = vadd.f32 %v1400, %v1711
      %v1713 = vpop.f32.mrf.mxu0
      %1714 = vmatprep.mubr.f32.mxu0 0.0
      %1715 = vmatmul.mubr.f32.gmra.mxu0 %v508
      %v1716 = vpop.f32.mrf.mxu0
      %v1717 = vadd.f32 %v1400, %v1716
      %v1718 = vpop.f32.mrf.mxu0
      %1719 = vmatprep.mubr.f32.mxu0 0.0
      %1720 = vmatmul.mubr.f32.gmra.mxu0 %v511
      %v1721 = vpop.f32.mrf.mxu0
      %v1722 = vadd.f32 %v1400, %v1721
      %v1723 = vpop.f32.mrf.mxu0
      %1724 = vmatprep.mubr.f32.mxu0 0.0
      %1725 = vmatmul.mubr.f32.gmra.mxu0 %v514
      %v1726 = vpop.f32.mrf.mxu0
      %v1727 = vadd.f32 %v1400, %v1726
      %v1728 = vpop.f32.mrf.mxu0
      %1729 = vmatprep.mubr.f32.mxu0 0.0
      %1730 = vmatmul.mubr.f32.gmra.mxu0 %v517
      %v1731 = vpop.f32.mrf.mxu0
      %v1732 = vadd.f32 %v1400, %v1731
      %v1733 = vpop.f32.mrf.mxu0
      %1734 = vmatprep.mubr.f32.mxu0 0.0
      %1735 = vmatmul.mubr.f32.gmra.mxu0 %v520
      %v1736 = vpop.f32.mrf.mxu0
      %v1737 = vadd.f32 %v1400, %v1736
      %v1738 = vpop.f32.mrf.mxu0
      %1739 = vmatprep.mubr.f32.mxu0 0.0
      %1740 = vmatmul.mubr.f32.gmra.mxu0 %v523
      %v1741 = vpop.f32.mrf.mxu0
      %v1742 = vadd.f32 %v1400, %v1741
      %v1743 = vpop.f32.mrf.mxu0
      %1744 = vmatprep.mubr.f32.mxu0 0.0
      %1745 = vmatmul.mubr.f32.gmra.mxu0 %v526
      %v1746 = vpop.f32.mrf.mxu0
      %v1747 = vadd.f32 %v1400, %v1746
      %v1748 = vpop.f32.mrf.mxu0
      %1749 = vmatprep.mubr.f32.mxu0 0.0
      %1750 = vmatmul.mubr.f32.gmra.mxu0 %v529
      %v1751 = vpop.f32.mrf.mxu0
      %v1752 = vadd.f32 %v1400, %v1751
      %v1753 = vpop.f32.mrf.mxu0
      %1754 = vmatprep.mubr.f32.mxu0 0.0
      %1755 = vmatmul.mubr.f32.gmra.mxu0 %v532
      %v1756 = vpop.f32.mrf.mxu0
      %v1757 = vadd.f32 %v1400, %v1756
      %v1758 = vpop.f32.mrf.mxu0
      %1759 = vmatprep.mubr.f32.mxu0 0.0
      %1760 = vmatmul.mubr.f32.gmra.mxu0 %v535
      %v1761 = vpop.f32.mrf.mxu0
      %v1762 = vadd.f32 %v1400, %v1761
      %v1763 = vpop.f32.mrf.mxu0
      %1764 = vmatprep.mubr.f32.mxu0 0.0
      %1765 = vmatmul.mubr.f32.gmra.mxu0 %v538
      %v1766 = vpop.f32.mrf.mxu0
      %v1767 = vadd.f32 %v1400, %v1766
      %v1768 = vpop.f32.mrf.mxu0
      %1769 = vmatprep.mubr.f32.mxu0 0.0
      %1770 = vmatmul.mubr.f32.gmra.mxu0 %v541
      %v1771 = vpop.f32.mrf.mxu0
      %v1772 = vadd.f32 %v1400, %v1771
      %v1773 = vpop.f32.mrf.mxu0
      %1774 = vmatprep.mubr.f32.mxu0 0.0
      %1775 = vmatmul.mubr.f32.gmra.mxu0 %v544
      %v1776 = vpop.f32.mrf.mxu0
      %v1777 = vadd.f32 %v1400, %v1776
      %v1778 = vpop.f32.mrf.mxu0
      %1779 = vmatprep.mubr.f32.mxu0 0.0
      %1780 = vmatmul.mubr.f32.gmra.mxu0 %v547
      %v1781 = vpop.f32.mrf.mxu0
      %v1782 = vadd.f32 %v1400, %v1781
      %v1783 = vpop.f32.mrf.mxu0
      %1784 = vmatprep.mubr.f32.mxu0 0.0
      %1785 = vmatmul.mubr.f32.gmra.mxu0 %v550
      %v1786 = vpop.f32.mrf.mxu0
      %v1787 = vadd.f32 %v1400, %v1786
      %v1788 = vpop.f32.mrf.mxu0
      %1789 = vmatprep.mubr.f32.mxu0 0.0
      %1790 = vmatmul.mubr.f32.gmra.mxu0 %v553
      %v1791 = vpop.f32.mrf.mxu0
      %v1792 = vadd.f32 %v1400, %v1791
      %v1793 = vpop.f32.mrf.mxu0
      %1794 = vmatprep.mubr.f32.mxu0 0.0
      %1795 = vmatmul.mubr.f32.gmra.mxu0 %v556
      %v1796 = vpop.f32.mrf.mxu0
      %v1797 = vadd.f32 %v1400, %v1796
      %v1798 = vpop.f32.mrf.mxu0
      %1799 = vmatprep.mubr.f32.mxu0 0.0
      %1800 = vmatmul.mubr.f32.gmra.mxu0 %v559
      %v1801 = vpop.f32.mrf.mxu0
      %v1802 = vadd.f32 %v1400, %v1801
      %v1803 = vpop.f32.mrf.mxu0
      %1804 = vmatprep.mubr.f32.mxu0 0.0
      %1805 = vmatmul.mubr.f32.gmra.mxu0 %v562
      %v1806 = vpop.f32.mrf.mxu0
      %v1807 = vadd.f32 %v1400, %v1806
      %v1808 = vpop.f32.mrf.mxu0
      %1809 = vmatprep.mubr.f32.mxu0 0.0
      %1810 = vmatmul.mubr.f32.gmra.mxu0 %v565
      %v1811 = vpop.f32.mrf.mxu0
      %v1812 = vadd.f32 %v1400, %v1811
      %v1813 = vpop.f32.mrf.mxu0
      %1814 = vmatprep.mubr.f32.mxu0 0.0
      %1815 = vmatmul.mubr.f32.gmra.mxu0 %v568
      %v1816 = vpop.f32.mrf.mxu0
      %v1817 = vadd.f32 %v1400, %v1816
      %v1818 = vpop.f32.mrf.mxu0
      %1819 = vmatprep.mubr.f32.mxu0 0.0
      %1820 = vmatmul.mubr.f32.gmra.mxu0 %v571
      %v1821 = vpop.f32.mrf.mxu0
      %v1822 = vadd.f32 %v1400, %v1821
      %v1823 = vpop.f32.mrf.mxu0
      %1824 = vmatprep.mubr.f32.mxu0 0.0
      %1825 = vmatmul.mubr.f32.gmra.mxu0 %v574
      %v1826 = vpop.f32.mrf.mxu0
      %v1827 = vadd.f32 %v1400, %v1826
      %v1828 = vpop.f32.mrf.mxu0
      %1829 = vmatprep.mubr.f32.mxu0 0.0
      %1830 = vmatmul.mubr.f32.gmra.mxu0 %v577
      %v1831 = vpop.f32.mrf.mxu0
      %v1832 = vadd.f32 %v1400, %v1831
      %v1833 = vpop.f32.mrf.mxu0
      %1834 = vmatprep.mubr.f32.mxu0 0.0
      %1835 = vmatmul.mubr.f32.gmra.mxu0 %v580
      %v1836 = vpop.f32.mrf.mxu0
      %v1837 = vadd.f32 %v1400, %v1836
      %v1838 = vpop.f32.mrf.mxu0
      %1839 = vmatprep.mubr.f32.mxu0 0.0
      %1840 = vmatmul.mubr.f32.gmra.mxu0 %v583
      %v1841 = vpop.f32.mrf.mxu0
      %v1842 = vadd.f32 %v1400, %v1841
      %v1843 = vpop.f32.mrf.mxu0
      %1844 = vmatprep.mubr.f32.mxu0 0.0
      %1845 = vmatmul.mubr.f32.gmra.mxu0 %v586
      %v1846 = vpop.f32.mrf.mxu0
      %v1847 = vadd.f32 %v1400, %v1846
      %v1848 = vpop.f32.mrf.mxu0
      %1849 = vmatprep.mubr.f32.mxu0 0.0
      %1850 = vmatmul.mubr.f32.gmra.mxu0 %v589
      %v1851 = vpop.f32.mrf.mxu0
      %v1852 = vadd.f32 %v1400, %v1851
      %v1853 = vpop.f32.mrf.mxu0
      %1854 = vmatprep.mubr.f32.mxu0 0.0
      %1855 = vmatmul.mubr.f32.gmra.mxu0 %v592
      %v1856 = vpop.f32.mrf.mxu0
      %v1857 = vadd.f32 %v1400, %v1856
      %v1858 = vpop.f32.mrf.mxu0
      %1859 = vmatprep.mubr.f32.mxu0 0.0
      %1860 = vmatmul.mubr.f32.gmra.mxu0 %v595
      %v1861 = vpop.f32.mrf.mxu0
      %v1862 = vadd.f32 %v1400, %v1861
      %v1863 = vpop.f32.mrf.mxu0
      %1864 = vmatprep.mubr.f32.mxu0 0.0
      %1865 = vmatmul.mubr.f32.gmra.mxu0 %v598
      %v1866 = vpop.f32.mrf.mxu0
      %v1867 = vadd.f32 %v1400, %v1866
      %v1868 = vpop.f32.mrf.mxu0
      %1869 = vmatprep.mubr.f32.mxu0 0.0
      %1870 = vmatmul.mubr.f32.gmra.mxu0 %v601
      %v1871 = vpop.f32.mrf.mxu0
      %v1872 = vadd.f32 %v1400, %v1871
      %v1873 = vpop.f32.mrf.mxu0
      %1874 = vmatprep.mubr.f32.mxu0 0.0
      %1875 = vmatmul.mubr.f32.gmra.mxu0 %v604
      %v1876 = vpop.f32.mrf.mxu0
      %v1877 = vadd.f32 %v1400, %v1876
      %v1878 = vpop.f32.mrf.mxu0
      %1879 = vmatprep.mubr.f32.mxu0 0.0
      %1880 = vmatmul.mubr.f32.gmra.mxu0 %v607
      %v1881 = vpop.f32.mrf.mxu0
      %v1882 = vadd.f32 %v1400, %v1881
      %v1883 = vpop.f32.mrf.mxu0
      %1884 = vmatprep.mubr.f32.mxu0 0.0
      %1885 = vmatmul.mubr.f32.gmra.mxu0 %v610
      %v1886 = vpop.f32.mrf.mxu0
      %v1887 = vadd.f32 %v1400, %v1886
      %v1888 = vpop.f32.mrf.mxu0
      %1889 = vmatprep.mubr.f32.mxu0 0.0
      %1890 = vmatmul.mubr.f32.gmra.mxu0 %v613
      %v1891 = vpop.f32.mrf.mxu0
      %v1892 = vadd.f32 %v1400, %v1891
      %v1893 = vpop.f32.mrf.mxu0
      %1894 = vmatprep.mubr.f32.mxu0 0.0
      %1895 = vmatmul.mubr.f32.gmra.mxu0 %v616
      %v1896 = vpop.f32.mrf.mxu0
      %v1897 = vadd.f32 %v1400, %v1896
      %v1898 = vpop.f32.mrf.mxu0
      %1899 = vmatprep.mubr.f32.mxu0 0.0
      %1900 = vmatmul.mubr.f32.gmra.mxu0 %v619
      %v1901 = vpop.f32.mrf.mxu0
      %v1902 = vadd.f32 %v1400, %v1901
      %v1903 = vpop.f32.mrf.mxu0
      %1904 = vmatprep.mubr.f32.mxu0 0.0
      %1905 = vmatmul.mubr.f32.gmra.mxu0 %v622
      %v1906 = vpop.f32.mrf.mxu0
      %v1907 = vadd.f32 %v1400, %v1906
      %v1908 = vpop.f32.mrf.mxu0
      %1909 = vmatprep.mubr.f32.mxu0 0.0
      %1910 = vmatmul.mubr.f32.gmra.mxu0 %v625
      %v1911 = vpop.f32.mrf.mxu0
      %v1912 = vadd.f32 %v1400, %v1911
      %v1913 = vpop.f32.mrf.mxu0
      %1914 = vmatprep.mubr.f32.mxu0 0.0
      %1915 = vmatmul.mubr.f32.gmra.mxu0 %v628
      %v1916 = vpop.f32.mrf.mxu0
      %v1917 = vadd.f32 %v1400, %v1916
      %v1918 = vpop.f32.mrf.mxu0
      %1919 = vmatprep.mubr.f32.mxu0 0.0
      %1920 = vmatmul.mubr.f32.gmra.mxu0 %v631
      %v1921 = vpop.f32.mrf.mxu0
      %v1922 = vadd.f32 %v1400, %v1921
      %v1923 = vpop.f32.mrf.mxu0
      %1924 = vmatprep.mubr.f32.mxu0 0.0
      %1925 = vmatmul.mubr.f32.gmra.mxu0 %v634
      %v1926 = vpop.f32.mrf.mxu0
      %v1927 = vadd.f32 %v1400, %v1926
      %v1928 = vpop.f32.mrf.mxu0
      %1929 = vmatprep.mubr.f32.mxu0 0.0
      %1930 = vmatmul.mubr.f32.gmra.mxu0 %v637
      %v1931 = vpop.f32.mrf.mxu0
      %v1932 = vadd.f32 %v1400, %v1931
      %v1933 = vpop.f32.mrf.mxu0
      %1934 = vmatprep.mubr.f32.mxu0 0.0
      %1935 = vmatmul.mubr.f32.gmra.mxu0 %v640
      %v1936 = vpop.f32.mrf.mxu0
      %v1937 = vadd.f32 %v1400, %v1936
      %v1938 = vpop.f32.mrf.mxu0
      %1939 = vmatprep.mubr.f32.mxu0 0.0
      %1940 = vmatmul.mubr.f32.gmra.mxu0 %v643
      %v1941 = vpop.f32.mrf.mxu0
      %v1942 = vadd.f32 %v1400, %v1941
      %v1943 = vpop.f32.mrf.mxu0
      %1944 = vmatprep.mubr.f32.mxu0 0.0
      %1945 = vmatmul.mubr.f32.gmra.mxu0 %v646
      %v1946 = vpop.f32.mrf.mxu0
      %v1947 = vadd.f32 %v1400, %v1946
      %v1948 = vpop.f32.mrf.mxu0
      %1949 = vdwg.mxu0
      %v1950 = vmax.f32 %v1472, 0.0
      %v1951 = vmax.f32 %v1477, 0.0
      %v1952 = vmax.f32 %v1482, 0.0
      %v1953 = vmax.f32 %v1487, 0.0
      %v1954 = vmax.f32 %v1492, 0.0
      %v1955 = vmax.f32 %v1497, 0.0
      %v1956 = vmax.f32 %v1502, 0.0
      %v1957 = vmax.f32 %v1507, 0.0
      %v1958 = vmax.f32 %v1512, 0.0
      %v1959 = vmax.f32 %v1517, 0.0
      %v1960 = vmax.f32 %v1522, 0.0
      %v1961 = vmax.f32 %v1527, 0.0
      %v1962 = vmax.f32 %v1532, 0.0
      %v1963 = vmax.f32 %v1537, 0.0
      %v1964 = vmax.f32 %v1542, 0.0
      %v1965 = vmax.f32 %v1547, 0.0
      %v1966 = vmax.f32 %v1552, 0.0
      %v1967 = vmax.f32 %v1557, 0.0
      %v1968 = vmax.f32 %v1562, 0.0
      %v1969 = vmax.f32 %v1567, 0.0
      %v1970 = vmax.f32 %v1572, 0.0
      %v1971 = vmax.f32 %v1577, 0.0
      %v1972 = vmax.f32 %v1582, 0.0
      %v1973 = vmax.f32 %v1587, 0.0
      %v1974 = vmax.f32 %v1592, 0.0
      %v1975 = vmax.f32 %v1597, 0.0
      %v1976 = vmax.f32 %v1602, 0.0
      %v1977 = vmax.f32 %v1607, 0.0
      %v1978 = vmax.f32 %v1612, 0.0
      %v1979 = vmax.f32 %v1617, 0.0
      %v1980 = vmax.f32 %v1622, 0.0
      %v1981 = vmax.f32 %v1627, 0.0
      %v1982 = vmax.f32 %v1632, 0.0
      %v1983 = vmax.f32 %v1637, 0.0
      %v1984 = vmax.f32 %v1642, 0.0
      %v1985 = vmax.f32 %v1647, 0.0
      %v1986 = vmax.f32 %v1652, 0.0
      %v1987 = vmax.f32 %v1657, 0.0
      %v1988 = vmax.f32 %v1662, 0.0
      %v1989 = vmax.f32 %v1667, 0.0
      %v1990 = vmax.f32 %v1672, 0.0
      %v1991 = vmax.f32 %v1677, 0.0
      %v1992 = vmax.f32 %v1682, 0.0
      %v1993 = vmax.f32 %v1687, 0.0
      %v1994 = vmax.f32 %v1692, 0.0
      %v1995 = vmax.f32 %v1697, 0.0
      %v1996 = vmax.f32 %v1702, 0.0
      %v1997 = vmax.f32 %v1707, 0.0
      %v1998 = vmax.f32 %v1712, 0.0
      %v1999 = vmax.f32 %v1717, 0.0
      %v2000 = vmax.f32 %v1722, 0.0
      %v2001 = vmax.f32 %v1727, 0.0
      %v2002 = vmax.f32 %v1732, 0.0
      %v2003 = vmax.f32 %v1737, 0.0
      %v2004 = vmax.f32 %v1742, 0.0
      %v2005 = vmax.f32 %v1747, 0.0
      %v2006 = vmax.f32 %v1752, 0.0
      %v2007 = vmax.f32 %v1757, 0.0
      %v2008 = vmax.f32 %v1762, 0.0
      %v2009 = vmax.f32 %v1767, 0.0
      %v2010 = vmax.f32 %v1772, 0.0
      %v2011 = vmax.f32 %v1777, 0.0
      %v2012 = vmax.f32 %v1782, 0.0
      %v2013 = vmax.f32 %v1787, 0.0
      %v2014 = vmax.f32 %v1792, 0.0
      %v2015 = vmax.f32 %v1797, 0.0
      %v2016 = vmax.f32 %v1802, 0.0
      %v2017 = vmax.f32 %v1807, 0.0
      %v2018 = vmax.f32 %v1812, 0.0
      %v2019 = vmax.f32 %v1817, 0.0
      %v2020 = vmax.f32 %v1822, 0.0
      %v2021 = vmax.f32 %v1827, 0.0
      %v2022 = vmax.f32 %v1832, 0.0
      %v2023 = vmax.f32 %v1837, 0.0
      %v2024 = vmax.f32 %v1842, 0.0
      %v2025 = vmax.f32 %v1847, 0.0
      %v2026 = vmax.f32 %v1852, 0.0
      %v2027 = vmax.f32 %v1857, 0.0
      %v2028 = vmax.f32 %v1862, 0.0
      %v2029 = vmax.f32 %v1867, 0.0
      %v2030 = vmax.f32 %v1872, 0.0
      %v2031 = vmax.f32 %v1877, 0.0
      %v2032 = vmax.f32 %v1882, 0.0
      %v2033 = vmax.f32 %v1887, 0.0
      %v2034 = vmax.f32 %v1892, 0.0
      %v2035 = vmax.f32 %v1897, 0.0
      %v2036 = vmax.f32 %v1902, 0.0
      %v2037 = vmax.f32 %v1907, 0.0
      %v2038 = vmax.f32 %v1912, 0.0
      %v2039 = vmax.f32 %v1917, 0.0
      %v2040 = vmax.f32 %v1922, 0.0
      %v2041 = vmax.f32 %v1927, 0.0
      %v2042 = vmax.f32 %v1932, 0.0
      %v2043 = vmax.f32 %v1937, 0.0
      %v2044 = vmax.f32 %v1942, 0.0
      %v2045 = vmax.f32 %v1947, 0.0
      %v2046 = vld [vmem:[%s5] sm:$0xff]
      %vm2047 = vcmask 64512
      %v2049 = vsel %vm2047, %v1950, 0
      %v2052 = vsel %vm2047, %v1951, 0
      %v2055 = vsel %vm2047, %v1952, 0
      %v2058 = vsel %vm2047, %v1953, 0
      %v2061 = vsel %vm2047, %v1954, 0
      %v2064 = vsel %vm2047, %v1955, 0
      %v2067 = vsel %vm2047, %v1956, 0
      %v2070 = vsel %vm2047, %v1957, 0
      %v2073 = vsel %vm2047, %v1958, 0
      %v2076 = vsel %vm2047, %v1959, 0
      %v2079 = vsel %vm2047, %v1960, 0
      %v2082 = vsel %vm2047, %v1961, 0
      %v2085 = vsel %vm2047, %v1962, 0
      %v2088 = vsel %vm2047, %v1963, 0
      %v2091 = vsel %vm2047, %v1964, 0
      %v2094 = vsel %vm2047, %v1965, 0
      %v2097 = vsel %vm2047, %v1966, 0
      %v2100 = vsel %vm2047, %v1967, 0
      %v2103 = vsel %vm2047, %v1968, 0
      %v2106 = vsel %vm2047, %v1969, 0
      %v2109 = vsel %vm2047, %v1970, 0
      %v2112 = vsel %vm2047, %v1971, 0
      %v2115 = vsel %vm2047, %v1972, 0
      %v2118 = vsel %vm2047, %v1973, 0
      %v2121 = vsel %vm2047, %v1974, 0
      %v2124 = vsel %vm2047, %v1975, 0
      %v2127 = vsel %vm2047, %v1976, 0
      %v2130 = vsel %vm2047, %v1977, 0
      %v2133 = vsel %vm2047, %v1978, 0
      %v2136 = vsel %vm2047, %v1979, 0
      %v2139 = vsel %vm2047, %v1980, 0
      %v2142 = vsel %vm2047, %v1981, 0
      %v2145 = vsel %vm2047, %v1982, 0
      %v2148 = vsel %vm2047, %v1983, 0
      %v2151 = vsel %vm2047, %v1984, 0
      %v2154 = vsel %vm2047, %v1985, 0
      %v2157 = vsel %vm2047, %v1986, 0
      %v2160 = vsel %vm2047, %v1987, 0
      %v2163 = vsel %vm2047, %v1988, 0
      %v2166 = vsel %vm2047, %v1989, 0
      %v2169 = vsel %vm2047, %v1990, 0
      %v2172 = vsel %vm2047, %v1991, 0
      %v2175 = vsel %vm2047, %v1992, 0
      %v2178 = vsel %vm2047, %v1993, 0
      %v2181 = vsel %vm2047, %v1994, 0
      %v2184 = vsel %vm2047, %v1995, 0
      %v2187 = vsel %vm2047, %v1996, 0
      %v2190 = vsel %vm2047, %v1997, 0
      %v2193 = vsel %vm2047, %v1998, 0
      %v2196 = vsel %vm2047, %v1999, 0
      %v2199 = vsel %vm2047, %v2000, 0
      %v2202 = vsel %vm2047, %v2001, 0
      %v2205 = vsel %vm2047, %v2002, 0
      %v2208 = vsel %vm2047, %v2003, 0
      %v2211 = vsel %vm2047, %v2004, 0
      %v2214 = vsel %vm2047, %v2005, 0
      %v2217 = vsel %vm2047, %v2006, 0
      %v2220 = vsel %vm2047, %v2007, 0
      %v2223 = vsel %vm2047, %v2008, 0
      %v2226 = vsel %vm2047, %v2009, 0
      %v2229 = vsel %vm2047, %v2010, 0
      %v2232 = vsel %vm2047, %v2011, 0
      %v2235 = vsel %vm2047, %v2012, 0
      %v2238 = vsel %vm2047, %v2013, 0
      %v2241 = vsel %vm2047, %v2014, 0
      %v2244 = vsel %vm2047, %v2015, 0
      %v2247 = vsel %vm2047, %v2016, 0
      %v2250 = vsel %vm2047, %v2017, 0
      %v2253 = vsel %vm2047, %v2018, 0
      %v2256 = vsel %vm2047, %v2019, 0
      %v2259 = vsel %vm2047, %v2020, 0
      %v2262 = vsel %vm2047, %v2021, 0
      %v2265 = vsel %vm2047, %v2022, 0
      %v2268 = vsel %vm2047, %v2023, 0
      %v2271 = vsel %vm2047, %v2024, 0
      %v2274 = vsel %vm2047, %v2025, 0
      %v2277 = vsel %vm2047, %v2026, 0
      %v2280 = vsel %vm2047, %v2027, 0
      %v2283 = vsel %vm2047, %v2028, 0
      %v2286 = vsel %vm2047, %v2029, 0
      %v2289 = vsel %vm2047, %v2030, 0
      %v2292 = vsel %vm2047, %v2031, 0
      %v2295 = vsel %vm2047, %v2032, 0
      %v2298 = vsel %vm2047, %v2033, 0
      %v2301 = vsel %vm2047, %v2034, 0
      %v2304 = vsel %vm2047, %v2035, 0
      %v2307 = vsel %vm2047, %v2036, 0
      %v2310 = vsel %vm2047, %v2037, 0
      %v2313 = vsel %vm2047, %v2038, 0
      %v2316 = vsel %vm2047, %v2039, 0
      %v2319 = vsel %vm2047, %v2040, 0
      %v2322 = vsel %vm2047, %v2041, 0
      %v2325 = vsel %vm2047, %v2042, 0
      %v2328 = vsel %vm2047, %v2043, 0
      %v2331 = vsel %vm2047, %v2044, 0
      %v2334 = vsel %vm2047, %v2045, 0
      %2336 = vmatprep.subr.mxu0 0.0
      %2337 = vmatpush1.msra.mxu0 0.0
      %2338 = vmatprep.subr.mxu0 0.0
      %2339 = vmatpush1.msra.mxu0 0.0
      %2340 = vmatprep.subr.mxu0 0.0
      %2341 = vmatpush1.msra.mxu0 0.0
      %2342 = vmatprep.subr.mxu0 0.0
      %2343 = vmatpush1.msra.mxu0 0.0
      %2344 = vmatprep.subr.mxu0 0.0
      %2345 = vmatpush1.msra.mxu0 0.0
      %2346 = vmatprep.subr.mxu0 0.0
      %2347 = vmatpush1.msra.mxu0 0.0
      %2348 = vmatprep.subr.mxu0 0.0
      %2349 = vmatpush1.msra.mxu0 0.0
      %2350 = vmatprep.subr.mxu0 0.0
      %2351 = vmatpush1.msra.mxu0 0.0
      %2352 = vmatprep.subr.mxu0 0.0
      %2353 = vmatpush1.msra.mxu0 0.0
      %2354 = vmatprep.subr.mxu0 0.0
      %2355 = vmatpush1.msra.mxu0 0.0
      %2356 = vmatprep.subr.mxu0 0.0
      %2357 = vmatpush1.msra.mxu0 0.0
      %2358 = vmatprep.subr.mxu0 0.0
      %2359 = vmatpush1.msra.mxu0 0.0
      %2360 = vmatprep.subr.mxu0 0.0
      %2361 = vmatpush1.msra.mxu0 0.0
      %2362 = vmatprep.subr.mxu0 0.0
      %2363 = vmatpush1.msra.mxu0 0.0
      %2364 = vmatprep.subr.mxu0 0.0
      %2365 = vmatpush1.msra.mxu0 0.0
      %2366 = vmatprep.subr.mxu0 0.0
      %2367 = vmatpush1.msra.mxu0 %v2046
      %2368 = vmatprep.subr.mxu0 0.0
      %2369 = vmatpush2.msra.mxu0 0.0
      %2370 = vmatprep.subr.mxu0 0.0
      %2371 = vmatpush2.msra.mxu0 0.0
      %2372 = vmatprep.subr.mxu0 0.0
      %2373 = vmatpush2.msra.mxu0 0.0
      %2374 = vmatprep.subr.mxu0 0.0
      %2375 = vmatpush2.msra.mxu0 0.0
      %2376 = vmatprep.subr.mxu0 0.0
      %2377 = vmatpush2.msra.mxu0 0.0
      %2378 = vmatprep.subr.mxu0 0.0
      %2379 = vmatpush2.msra.mxu0 0.0
      %2380 = vmatprep.subr.mxu0 0.0
      %2381 = vmatpush2.msra.mxu0 0.0
      %2382 = vmatprep.subr.mxu0 0.0
      %2383 = vmatpush2.msra.mxu0 0.0
      %2384 = vmatprep.subr.mxu0 0.0
      %2385 = vmatpush2.msra.mxu0 0.0
      %2386 = vmatprep.subr.mxu0 0.0
      %2387 = vmatpush2.msra.mxu0 0.0
      %2388 = vmatprep.subr.mxu0 0.0
      %2389 = vmatpush2.msra.mxu0 0.0
      %2390 = vmatprep.subr.mxu0 0.0
      %2391 = vmatpush2.msra.mxu0 0.0
      %2392 = vmatprep.subr.mxu0 0.0
      %2393 = vmatpush2.msra.mxu0 0.0
      %2394 = vmatprep.subr.mxu0 0.0
      %2395 = vmatpush2.msra.mxu0 0.0
      %2396 = vmatprep.subr.mxu0 0.0
      %2397 = vmatpush2.msra.mxu0 0.0
      %2398 = vmatprep.subr.mxu0 0.0
      %2399 = vmatpush2.msra.mxu0 0.0
      %2400 = vmatprep.mubr.f32.mxu0 0.0
      %2401 = vmatmul.mubr.f32.gmra.mxu0 %v2049
      %v2402 = vpop.f32.mrf.mxu0
      %v2403 = vadd.f32 0.0, %v2402
      %v2404 = vpop.f32.mrf.mxu0
      %2405 = vmatprep.mubr.f32.mxu0 0.0
      %2406 = vmatmul.mubr.f32.gmra.mxu0 %v2052
      %v2407 = vpop.f32.mrf.mxu0
      %v2408 = vadd.f32 0.0, %v2407
      %v2409 = vpop.f32.mrf.mxu0
      %2410 = vmatprep.mubr.f32.mxu0 0.0
      %2411 = vmatmul.mubr.f32.gmra.mxu0 %v2055
      %v2412 = vpop.f32.mrf.mxu0
      %v2413 = vadd.f32 0.0, %v2412
      %v2414 = vpop.f32.mrf.mxu0
      %2415 = vmatprep.mubr.f32.mxu0 0.0
      %2416 = vmatmul.mubr.f32.gmra.mxu0 %v2058
      %v2417 = vpop.f32.mrf.mxu0
      %v2418 = vadd.f32 0.0, %v2417
      %v2419 = vpop.f32.mrf.mxu0
      %2420 = vmatprep.mubr.f32.mxu0 0.0
      %2421 = vmatmul.mubr.f32.gmra.mxu0 %v2061
      %v2422 = vpop.f32.mrf.mxu0
      %v2423 = vadd.f32 0.0, %v2422
      %v2424 = vpop.f32.mrf.mxu0
      %2425 = vmatprep.mubr.f32.mxu0 0.0
      %2426 = vmatmul.mubr.f32.gmra.mxu0 %v2064
      %v2427 = vpop.f32.mrf.mxu0
      %v2428 = vadd.f32 0.0, %v2427
      %v2429 = vpop.f32.mrf.mxu0
      %2430 = vmatprep.mubr.f32.mxu0 0.0
      %2431 = vmatmul.mubr.f32.gmra.mxu0 %v2067
      %v2432 = vpop.f32.mrf.mxu0
      %v2433 = vadd.f32 0.0, %v2432
      %v2434 = vpop.f32.mrf.mxu0
      %2435 = vmatprep.mubr.f32.mxu0 0.0
      %2436 = vmatmul.mubr.f32.gmra.mxu0 %v2070
      %v2437 = vpop.f32.mrf.mxu0
      %v2438 = vadd.f32 0.0, %v2437
      %v2439 = vpop.f32.mrf.mxu0
      %2440 = vmatprep.mubr.f32.mxu0 0.0
      %2441 = vmatmul.mubr.f32.gmra.mxu0 %v2073
      %v2442 = vpop.f32.mrf.mxu0
      %v2443 = vadd.f32 0.0, %v2442
      %v2444 = vpop.f32.mrf.mxu0
      %2445 = vmatprep.mubr.f32.mxu0 0.0
      %2446 = vmatmul.mubr.f32.gmra.mxu0 %v2076
      %v2447 = vpop.f32.mrf.mxu0
      %v2448 = vadd.f32 0.0, %v2447
      %v2449 = vpop.f32.mrf.mxu0
      %2450 = vmatprep.mubr.f32.mxu0 0.0
      %2451 = vmatmul.mubr.f32.gmra.mxu0 %v2079
      %v2452 = vpop.f32.mrf.mxu0
      %v2453 = vadd.f32 0.0, %v2452
      %v2454 = vpop.f32.mrf.mxu0
      %2455 = vmatprep.mubr.f32.mxu0 0.0
      %2456 = vmatmul.mubr.f32.gmra.mxu0 %v2082
      %v2457 = vpop.f32.mrf.mxu0
      %v2458 = vadd.f32 0.0, %v2457
      %v2459 = vpop.f32.mrf.mxu0
      %2460 = vmatprep.mubr.f32.mxu0 0.0
      %2461 = vmatmul.mubr.f32.gmra.mxu0 %v2085
      %v2462 = vpop.f32.mrf.mxu0
      %v2463 = vadd.f32 0.0, %v2462
      %v2464 = vpop.f32.mrf.mxu0
      %2465 = vmatprep.mubr.f32.mxu0 0.0
      %2466 = vmatmul.mubr.f32.gmra.mxu0 %v2088
      %v2467 = vpop.f32.mrf.mxu0
      %v2468 = vadd.f32 0.0, %v2467
      %v2469 = vpop.f32.mrf.mxu0
      %2470 = vmatprep.mubr.f32.mxu0 0.0
      %2471 = vmatmul.mubr.f32.gmra.mxu0 %v2091
      %v2472 = vpop.f32.mrf.mxu0
      %v2473 = vadd.f32 0.0, %v2472
      %v2474 = vpop.f32.mrf.mxu0
      %2475 = vmatprep.mubr.f32.mxu0 0.0
      %2476 = vmatmul.mubr.f32.gmra.mxu0 %v2094
      %v2477 = vpop.f32.mrf.mxu0
      %v2478 = vadd.f32 0.0, %v2477
      %v2479 = vpop.f32.mrf.mxu0
      %2480 = vmatprep.mubr.f32.mxu0 0.0
      %2481 = vmatmul.mubr.f32.gmra.mxu0 %v2097
      %v2482 = vpop.f32.mrf.mxu0
      %v2483 = vadd.f32 0.0, %v2482
      %v2484 = vpop.f32.mrf.mxu0
      %2485 = vmatprep.mubr.f32.mxu0 0.0
      %2486 = vmatmul.mubr.f32.gmra.mxu0 %v2100
      %v2487 = vpop.f32.mrf.mxu0
      %v2488 = vadd.f32 0.0, %v2487
      %v2489 = vpop.f32.mrf.mxu0
      %2490 = vmatprep.mubr.f32.mxu0 0.0
      %2491 = vmatmul.mubr.f32.gmra.mxu0 %v2103
      %v2492 = vpop.f32.mrf.mxu0
      %v2493 = vadd.f32 0.0, %v2492
      %v2494 = vpop.f32.mrf.mxu0
      %2495 = vmatprep.mubr.f32.mxu0 0.0
      %2496 = vmatmul.mubr.f32.gmra.mxu0 %v2106
      %v2497 = vpop.f32.mrf.mxu0
      %v2498 = vadd.f32 0.0, %v2497
      %v2499 = vpop.f32.mrf.mxu0
      %2500 = vmatprep.mubr.f32.mxu0 0.0
      %2501 = vmatmul.mubr.f32.gmra.mxu0 %v2109
      %v2502 = vpop.f32.mrf.mxu0
      %v2503 = vadd.f32 0.0, %v2502
      %v2504 = vpop.f32.mrf.mxu0
      %2505 = vmatprep.mubr.f32.mxu0 0.0
      %2506 = vmatmul.mubr.f32.gmra.mxu0 %v2112
      %v2507 = vpop.f32.mrf.mxu0
      %v2508 = vadd.f32 0.0, %v2507
      %v2509 = vpop.f32.mrf.mxu0
      %2510 = vmatprep.mubr.f32.mxu0 0.0
      %2511 = vmatmul.mubr.f32.gmra.mxu0 %v2115
      %v2512 = vpop.f32.mrf.mxu0
      %v2513 = vadd.f32 0.0, %v2512
      %v2514 = vpop.f32.mrf.mxu0
      %2515 = vmatprep.mubr.f32.mxu0 0.0
      %2516 = vmatmul.mubr.f32.gmra.mxu0 %v2118
      %v2517 = vpop.f32.mrf.mxu0
      %v2518 = vadd.f32 0.0, %v2517
      %v2519 = vpop.f32.mrf.mxu0
      %2520 = vmatprep.mubr.f32.mxu0 0.0
      %2521 = vmatmul.mubr.f32.gmra.mxu0 %v2121
      %v2522 = vpop.f32.mrf.mxu0
      %v2523 = vadd.f32 0.0, %v2522
      %v2524 = vpop.f32.mrf.mxu0
      %2525 = vmatprep.mubr.f32.mxu0 0.0
      %2526 = vmatmul.mubr.f32.gmra.mxu0 %v2124
      %v2527 = vpop.f32.mrf.mxu0
      %v2528 = vadd.f32 0.0, %v2527
      %v2529 = vpop.f32.mrf.mxu0
      %2530 = vmatprep.mubr.f32.mxu0 0.0
      %2531 = vmatmul.mubr.f32.gmra.mxu0 %v2127
      %v2532 = vpop.f32.mrf.mxu0
      %v2533 = vadd.f32 0.0, %v2532
      %v2534 = vpop.f32.mrf.mxu0
      %2535 = vmatprep.mubr.f32.mxu0 0.0
      %2536 = vmatmul.mubr.f32.gmra.mxu0 %v2130
      %v2537 = vpop.f32.mrf.mxu0
      %v2538 = vadd.f32 0.0, %v2537
      %v2539 = vpop.f32.mrf.mxu0
      %2540 = vmatprep.mubr.f32.mxu0 0.0
      %2541 = vmatmul.mubr.f32.gmra.mxu0 %v2133
      %v2542 = vpop.f32.mrf.mxu0
      %v2543 = vadd.f32 0.0, %v2542
      %v2544 = vpop.f32.mrf.mxu0
      %2545 = vmatprep.mubr.f32.mxu0 0.0
      %2546 = vmatmul.mubr.f32.gmra.mxu0 %v2136
      %v2547 = vpop.f32.mrf.mxu0
      %v2548 = vadd.f32 0.0, %v2547
      %v2549 = vpop.f32.mrf.mxu0
      %2550 = vmatprep.mubr.f32.mxu0 0.0
      %2551 = vmatmul.mubr.f32.gmra.mxu0 %v2139
      %v2552 = vpop.f32.mrf.mxu0
      %v2553 = vadd.f32 0.0, %v2552
      %v2554 = vpop.f32.mrf.mxu0
      %2555 = vmatprep.mubr.f32.mxu0 0.0
      %2556 = vmatmul.mubr.f32.gmra.mxu0 %v2142
      %v2557 = vpop.f32.mrf.mxu0
      %v2558 = vadd.f32 0.0, %v2557
      %v2559 = vpop.f32.mrf.mxu0
      %2560 = vmatprep.mubr.f32.mxu0 0.0
      %2561 = vmatmul.mubr.f32.gmra.mxu0 %v2145
      %v2562 = vpop.f32.mrf.mxu0
      %v2563 = vadd.f32 0.0, %v2562
      %v2564 = vpop.f32.mrf.mxu0
      %2565 = vmatprep.mubr.f32.mxu0 0.0
      %2566 = vmatmul.mubr.f32.gmra.mxu0 %v2148
      %v2567 = vpop.f32.mrf.mxu0
      %v2568 = vadd.f32 0.0, %v2567
      %v2569 = vpop.f32.mrf.mxu0
      %2570 = vmatprep.mubr.f32.mxu0 0.0
      %2571 = vmatmul.mubr.f32.gmra.mxu0 %v2151
      %v2572 = vpop.f32.mrf.mxu0
      %v2573 = vadd.f32 0.0, %v2572
      %v2574 = vpop.f32.mrf.mxu0
      %2575 = vmatprep.mubr.f32.mxu0 0.0
      %2576 = vmatmul.mubr.f32.gmra.mxu0 %v2154
      %v2577 = vpop.f32.mrf.mxu0
      %v2578 = vadd.f32 0.0, %v2577
      %v2579 = vpop.f32.mrf.mxu0
      %2580 = vmatprep.mubr.f32.mxu0 0.0
      %2581 = vmatmul.mubr.f32.gmra.mxu0 %v2157
      %v2582 = vpop.f32.mrf.mxu0
      %v2583 = vadd.f32 0.0, %v2582
      %v2584 = vpop.f32.mrf.mxu0
      %2585 = vmatprep.mubr.f32.mxu0 0.0
      %2586 = vmatmul.mubr.f32.gmra.mxu0 %v2160
      %v2587 = vpop.f32.mrf.mxu0
      %v2588 = vadd.f32 0.0, %v2587
      %v2589 = vpop.f32.mrf.mxu0
      %2590 = vmatprep.mubr.f32.mxu0 0.0
      %2591 = vmatmul.mubr.f32.gmra.mxu0 %v2163
      %v2592 = vpop.f32.mrf.mxu0
      %v2593 = vadd.f32 0.0, %v2592
      %v2594 = vpop.f32.mrf.mxu0
      %2595 = vmatprep.mubr.f32.mxu0 0.0
      %2596 = vmatmul.mubr.f32.gmra.mxu0 %v2166
      %v2597 = vpop.f32.mrf.mxu0
      %v2598 = vadd.f32 0.0, %v2597
      %v2599 = vpop.f32.mrf.mxu0
      %2600 = vmatprep.mubr.f32.mxu0 0.0
      %2601 = vmatmul.mubr.f32.gmra.mxu0 %v2169
      %v2602 = vpop.f32.mrf.mxu0
      %v2603 = vadd.f32 0.0, %v2602
      %v2604 = vpop.f32.mrf.mxu0
      %2605 = vmatprep.mubr.f32.mxu0 0.0
      %2606 = vmatmul.mubr.f32.gmra.mxu0 %v2172
      %v2607 = vpop.f32.mrf.mxu0
      %v2608 = vadd.f32 0.0, %v2607
      %v2609 = vpop.f32.mrf.mxu0
      %2610 = vmatprep.mubr.f32.mxu0 0.0
      %2611 = vmatmul.mubr.f32.gmra.mxu0 %v2175
      %v2612 = vpop.f32.mrf.mxu0
      %v2613 = vadd.f32 0.0, %v2612
      %v2614 = vpop.f32.mrf.mxu0
      %2615 = vmatprep.mubr.f32.mxu0 0.0
      %2616 = vmatmul.mubr.f32.gmra.mxu0 %v2178
      %v2617 = vpop.f32.mrf.mxu0
      %v2618 = vadd.f32 0.0, %v2617
      %v2619 = vpop.f32.mrf.mxu0
      %2620 = vmatprep.mubr.f32.mxu0 0.0
      %2621 = vmatmul.mubr.f32.gmra.mxu0 %v2181
      %v2622 = vpop.f32.mrf.mxu0
      %v2623 = vadd.f32 0.0, %v2622
      %v2624 = vpop.f32.mrf.mxu0
      %2625 = vmatprep.mubr.f32.mxu0 0.0
      %2626 = vmatmul.mubr.f32.gmra.mxu0 %v2184
      %v2627 = vpop.f32.mrf.mxu0
      %v2628 = vadd.f32 0.0, %v2627
      %v2629 = vpop.f32.mrf.mxu0
      %2630 = vmatprep.mubr.f32.mxu0 0.0
      %2631 = vmatmul.mubr.f32.gmra.mxu0 %v2187
      %v2632 = vpop.f32.mrf.mxu0
      %v2633 = vadd.f32 0.0, %v2632
      %v2634 = vpop.f32.mrf.mxu0
      %2635 = vmatprep.mubr.f32.mxu0 0.0
      %2636 = vmatmul.mubr.f32.gmra.mxu0 %v2190
      %v2637 = vpop.f32.mrf.mxu0
      %v2638 = vadd.f32 0.0, %v2637
      %v2639 = vpop.f32.mrf.mxu0
      %2640 = vmatprep.mubr.f32.mxu0 0.0
      %2641 = vmatmul.mubr.f32.gmra.mxu0 %v2193
      %v2642 = vpop.f32.mrf.mxu0
      %v2643 = vadd.f32 0.0, %v2642
      %v2644 = vpop.f32.mrf.mxu0
      %2645 = vmatprep.mubr.f32.mxu0 0.0
      %2646 = vmatmul.mubr.f32.gmra.mxu0 %v2196
      %v2647 = vpop.f32.mrf.mxu0
      %v2648 = vadd.f32 0.0, %v2647
      %v2649 = vpop.f32.mrf.mxu0
      %2650 = vmatprep.mubr.f32.mxu0 0.0
      %2651 = vmatmul.mubr.f32.gmra.mxu0 %v2199
      %v2652 = vpop.f32.mrf.mxu0
      %v2653 = vadd.f32 0.0, %v2652
      %v2654 = vpop.f32.mrf.mxu0
      %2655 = vmatprep.mubr.f32.mxu0 0.0
      %2656 = vmatmul.mubr.f32.gmra.mxu0 %v2202
      %v2657 = vpop.f32.mrf.mxu0
      %v2658 = vadd.f32 0.0, %v2657
      %v2659 = vpop.f32.mrf.mxu0
      %2660 = vmatprep.mubr.f32.mxu0 0.0
      %2661 = vmatmul.mubr.f32.gmra.mxu0 %v2205
      %v2662 = vpop.f32.mrf.mxu0
      %v2663 = vadd.f32 0.0, %v2662
      %v2664 = vpop.f32.mrf.mxu0
      %2665 = vmatprep.mubr.f32.mxu0 0.0
      %2666 = vmatmul.mubr.f32.gmra.mxu0 %v2208
      %v2667 = vpop.f32.mrf.mxu0
      %v2668 = vadd.f32 0.0, %v2667
      %v2669 = vpop.f32.mrf.mxu0
      %2670 = vmatprep.mubr.f32.mxu0 0.0
      %2671 = vmatmul.mubr.f32.gmra.mxu0 %v2211
      %v2672 = vpop.f32.mrf.mxu0
      %v2673 = vadd.f32 0.0, %v2672
      %v2674 = vpop.f32.mrf.mxu0
      %2675 = vmatprep.mubr.f32.mxu0 0.0
      %2676 = vmatmul.mubr.f32.gmra.mxu0 %v2214
      %v2677 = vpop.f32.mrf.mxu0
      %v2678 = vadd.f32 0.0, %v2677
      %v2679 = vpop.f32.mrf.mxu0
      %2680 = vmatprep.mubr.f32.mxu0 0.0
      %2681 = vmatmul.mubr.f32.gmra.mxu0 %v2217
      %v2682 = vpop.f32.mrf.mxu0
      %v2683 = vadd.f32 0.0, %v2682
      %v2684 = vpop.f32.mrf.mxu0
      %2685 = vmatprep.mubr.f32.mxu0 0.0
      %2686 = vmatmul.mubr.f32.gmra.mxu0 %v2220
      %v2687 = vpop.f32.mrf.mxu0
      %v2688 = vadd.f32 0.0, %v2687
      %v2689 = vpop.f32.mrf.mxu0
      %2690 = vmatprep.mubr.f32.mxu0 0.0
      %2691 = vmatmul.mubr.f32.gmra.mxu0 %v2223
      %v2692 = vpop.f32.mrf.mxu0
      %v2693 = vadd.f32 0.0, %v2692
      %v2694 = vpop.f32.mrf.mxu0
      %2695 = vmatprep.mubr.f32.mxu0 0.0
      %2696 = vmatmul.mubr.f32.gmra.mxu0 %v2226
      %v2697 = vpop.f32.mrf.mxu0
      %v2698 = vadd.f32 0.0, %v2697
      %v2699 = vpop.f32.mrf.mxu0
      %2700 = vmatprep.mubr.f32.mxu0 0.0
      %2701 = vmatmul.mubr.f32.gmra.mxu0 %v2229
      %v2702 = vpop.f32.mrf.mxu0
      %v2703 = vadd.f32 0.0, %v2702
      %v2704 = vpop.f32.mrf.mxu0
      %2705 = vmatprep.mubr.f32.mxu0 0.0
      %2706 = vmatmul.mubr.f32.gmra.mxu0 %v2232
      %v2707 = vpop.f32.mrf.mxu0
      %v2708 = vadd.f32 0.0, %v2707
      %v2709 = vpop.f32.mrf.mxu0
      %2710 = vmatprep.mubr.f32.mxu0 0.0
      %2711 = vmatmul.mubr.f32.gmra.mxu0 %v2235
      %v2712 = vpop.f32.mrf.mxu0
      %v2713 = vadd.f32 0.0, %v2712
      %v2714 = vpop.f32.mrf.mxu0
      %2715 = vmatprep.mubr.f32.mxu0 0.0
      %2716 = vmatmul.mubr.f32.gmra.mxu0 %v2238
      %v2717 = vpop.f32.mrf.mxu0
      %v2718 = vadd.f32 0.0, %v2717
      %v2719 = vpop.f32.mrf.mxu0
      %2720 = vmatprep.mubr.f32.mxu0 0.0
      %2721 = vmatmul.mubr.f32.gmra.mxu0 %v2241
      %v2722 = vpop.f32.mrf.mxu0
      %v2723 = vadd.f32 0.0, %v2722
      %v2724 = vpop.f32.mrf.mxu0
      %2725 = vmatprep.mubr.f32.mxu0 0.0
      %2726 = vmatmul.mubr.f32.gmra.mxu0 %v2244
      %v2727 = vpop.f32.mrf.mxu0
      %v2728 = vadd.f32 0.0, %v2727
      %v2729 = vpop.f32.mrf.mxu0
      %2730 = vmatprep.mubr.f32.mxu0 0.0
      %2731 = vmatmul.mubr.f32.gmra.mxu0 %v2247
      %v2732 = vpop.f32.mrf.mxu0
      %v2733 = vadd.f32 0.0, %v2732
      %v2734 = vpop.f32.mrf.mxu0
      %2735 = vmatprep.mubr.f32.mxu0 0.0
      %2736 = vmatmul.mubr.f32.gmra.mxu0 %v2250
      %v2737 = vpop.f32.mrf.mxu0
      %v2738 = vadd.f32 0.0, %v2737
      %v2739 = vpop.f32.mrf.mxu0
      %2740 = vmatprep.mubr.f32.mxu0 0.0
      %2741 = vmatmul.mubr.f32.gmra.mxu0 %v2253
      %v2742 = vpop.f32.mrf.mxu0
      %v2743 = vadd.f32 0.0, %v2742
      %v2744 = vpop.f32.mrf.mxu0
      %2745 = vmatprep.mubr.f32.mxu0 0.0
      %2746 = vmatmul.mubr.f32.gmra.mxu0 %v2256
      %v2747 = vpop.f32.mrf.mxu0
      %v2748 = vadd.f32 0.0, %v2747
      %v2749 = vpop.f32.mrf.mxu0
      %2750 = vmatprep.mubr.f32.mxu0 0.0
      %2751 = vmatmul.mubr.f32.gmra.mxu0 %v2259
      %v2752 = vpop.f32.mrf.mxu0
      %v2753 = vadd.f32 0.0, %v2752
      %v2754 = vpop.f32.mrf.mxu0
      %2755 = vmatprep.mubr.f32.mxu0 0.0
      %2756 = vmatmul.mubr.f32.gmra.mxu0 %v2262
      %v2757 = vpop.f32.mrf.mxu0
      %v2758 = vadd.f32 0.0, %v2757
      %v2759 = vpop.f32.mrf.mxu0
      %2760 = vmatprep.mubr.f32.mxu0 0.0
      %2761 = vmatmul.mubr.f32.gmra.mxu0 %v2265
      %v2762 = vpop.f32.mrf.mxu0
      %v2763 = vadd.f32 0.0, %v2762
      %v2764 = vpop.f32.mrf.mxu0
      %2765 = vmatprep.mubr.f32.mxu0 0.0
      %2766 = vmatmul.mubr.f32.gmra.mxu0 %v2268
      %v2767 = vpop.f32.mrf.mxu0
      %v2768 = vadd.f32 0.0, %v2767
      %v2769 = vpop.f32.mrf.mxu0
      %2770 = vmatprep.mubr.f32.mxu0 0.0
      %2771 = vmatmul.mubr.f32.gmra.mxu0 %v2271
      %v2772 = vpop.f32.mrf.mxu0
      %v2773 = vadd.f32 0.0, %v2772
      %v2774 = vpop.f32.mrf.mxu0
      %2775 = vmatprep.mubr.f32.mxu0 0.0
      %2776 = vmatmul.mubr.f32.gmra.mxu0 %v2274
      %v2777 = vpop.f32.mrf.mxu0
      %v2778 = vadd.f32 0.0, %v2777
      %v2779 = vpop.f32.mrf.mxu0
      %2780 = vmatprep.mubr.f32.mxu0 0.0
      %2781 = vmatmul.mubr.f32.gmra.mxu0 %v2277
      %v2782 = vpop.f32.mrf.mxu0
      %v2783 = vadd.f32 0.0, %v2782
      %v2784 = vpop.f32.mrf.mxu0
      %2785 = vmatprep.mubr.f32.mxu0 0.0
      %2786 = vmatmul.mubr.f32.gmra.mxu0 %v2280
      %v2787 = vpop.f32.mrf.mxu0
      %v2788 = vadd.f32 0.0, %v2787
      %v2789 = vpop.f32.mrf.mxu0
      %2790 = vmatprep.mubr.f32.mxu0 0.0
      %2791 = vmatmul.mubr.f32.gmra.mxu0 %v2283
      %v2792 = vpop.f32.mrf.mxu0
      %v2793 = vadd.f32 0.0, %v2792
      %v2794 = vpop.f32.mrf.mxu0
      %2795 = vmatprep.mubr.f32.mxu0 0.0
      %2796 = vmatmul.mubr.f32.gmra.mxu0 %v2286
      %v2797 = vpop.f32.mrf.mxu0
      %v2798 = vadd.f32 0.0, %v2797
      %v2799 = vpop.f32.mrf.mxu0
      %2800 = vmatprep.mubr.f32.mxu0 0.0
      %2801 = vmatmul.mubr.f32.gmra.mxu0 %v2289
      %v2802 = vpop.f32.mrf.mxu0
      %v2803 = vadd.f32 0.0, %v2802
      %v2804 = vpop.f32.mrf.mxu0
      %2805 = vmatprep.mubr.f32.mxu0 0.0
      %2806 = vmatmul.mubr.f32.gmra.mxu0 %v2292
      %v2807 = vpop.f32.mrf.mxu0
      %v2808 = vadd.f32 0.0, %v2807
      %v2809 = vpop.f32.mrf.mxu0
      %2810 = vmatprep.mubr.f32.mxu0 0.0
      %2811 = vmatmul.mubr.f32.gmra.mxu0 %v2295
      %v2812 = vpop.f32.mrf.mxu0
      %v2813 = vadd.f32 0.0, %v2812
      %v2814 = vpop.f32.mrf.mxu0
      %2815 = vmatprep.mubr.f32.mxu0 0.0
      %2816 = vmatmul.mubr.f32.gmra.mxu0 %v2298
      %v2817 = vpop.f32.mrf.mxu0
      %v2818 = vadd.f32 0.0, %v2817
      %v2819 = vpop.f32.mrf.mxu0
      %2820 = vmatprep.mubr.f32.mxu0 0.0
      %2821 = vmatmul.mubr.f32.gmra.mxu0 %v2301
      %v2822 = vpop.f32.mrf.mxu0
      %v2823 = vadd.f32 0.0, %v2822
      %v2824 = vpop.f32.mrf.mxu0
      %2825 = vmatprep.mubr.f32.mxu0 0.0
      %2826 = vmatmul.mubr.f32.gmra.mxu0 %v2304
      %v2827 = vpop.f32.mrf.mxu0
      %v2828 = vadd.f32 0.0, %v2827
      %v2829 = vpop.f32.mrf.mxu0
      %2830 = vmatprep.mubr.f32.mxu0 0.0
      %2831 = vmatmul.mubr.f32.gmra.mxu0 %v2307
      %v2832 = vpop.f32.mrf.mxu0
      %v2833 = vadd.f32 0.0, %v2832
      %v2834 = vpop.f32.mrf.mxu0
      %2835 = vmatprep.mubr.f32.mxu0 0.0
      %2836 = vmatmul.mubr.f32.gmra.mxu0 %v2310
      %v2837 = vpop.f32.mrf.mxu0
      %v2838 = vadd.f32 0.0, %v2837
      %v2839 = vpop.f32.mrf.mxu0
      %2840 = vmatprep.mubr.f32.mxu0 0.0
      %2841 = vmatmul.mubr.f32.gmra.mxu0 %v2313
      %v2842 = vpop.f32.mrf.mxu0
      %v2843 = vadd.f32 0.0, %v2842
      %v2844 = vpop.f32.mrf.mxu0
      %2845 = vmatprep.mubr.f32.mxu0 0.0
      %2846 = vmatmul.mubr.f32.gmra.mxu0 %v2316
      %v2847 = vpop.f32.mrf.mxu0
      %v2848 = vadd.f32 0.0, %v2847
      %v2849 = vpop.f32.mrf.mxu0
      %2850 = vmatprep.mubr.f32.mxu0 0.0
      %2851 = vmatmul.mubr.f32.gmra.mxu0 %v2319
      %v2852 = vpop.f32.mrf.mxu0
      %v2853 = vadd.f32 0.0, %v2852
      %v2854 = vpop.f32.mrf.mxu0
      %2855 = vmatprep.mubr.f32.mxu0 0.0
      %2856 = vmatmul.mubr.f32.gmra.mxu0 %v2322
      %v2857 = vpop.f32.mrf.mxu0
      %v2858 = vadd.f32 0.0, %v2857
      %v2859 = vpop.f32.mrf.mxu0
      %2860 = vmatprep.mubr.f32.mxu0 0.0
      %2861 = vmatmul.mubr.f32.gmra.mxu0 %v2325
      %v2862 = vpop.f32.mrf.mxu0
      %v2863 = vadd.f32 0.0, %v2862
      %v2864 = vpop.f32.mrf.mxu0
      %2865 = vmatprep.mubr.f32.mxu0 0.0
      %2866 = vmatmul.mubr.f32.gmra.mxu0 %v2328
      %v2867 = vpop.f32.mrf.mxu0
      %v2868 = vadd.f32 0.0, %v2867
      %v2869 = vpop.f32.mrf.mxu0
      %2870 = vmatprep.mubr.f32.mxu0 0.0
      %2871 = vmatmul.mubr.f32.gmra.mxu0 %v2331
      %v2872 = vpop.f32.mrf.mxu0
      %v2873 = vadd.f32 0.0, %v2872
      %v2874 = vpop.f32.mrf.mxu0
      %2875 = vmatprep.mubr.f32.mxu0 0.0
      %2876 = vmatmul.mubr.f32.gmra.mxu0 %v2334
      %v2877 = vpop.f32.mrf.mxu0
      %v2878 = vadd.f32 0.0, %v2877
      %v2879 = vpop.f32.mrf.mxu0
      %2880 = vdwg.mxu0
      %v2881 = vadd.f32 %v1298, %v2403
      %v2882 = vadd.f32 %v1299, %v2408
      %v2883 = vadd.f32 %v1300, %v2413
      %v2884 = vadd.f32 %v1301, %v2418
      %v2885 = vadd.f32 %v1302, %v2423
      %v2886 = vadd.f32 %v1303, %v2428
      %v2887 = vadd.f32 %v1304, %v2433
      %v2888 = vadd.f32 %v1305, %v2438
      %v2889 = vadd.f32 %v1306, %v2443
      %v2890 = vadd.f32 %v1307, %v2448
      %v2891 = vadd.f32 %v1308, %v2453
      %v2892 = vadd.f32 %v1309, %v2458
      %v2893 = vadd.f32 %v1310, %v2463
      %v2894 = vadd.f32 %v1311, %v2468
      %v2895 = vadd.f32 %v1312, %v2473
      %v2896 = vadd.f32 %v1313, %v2478
      %v2897 = vadd.f32 %v1314, %v2483
      %v2898 = vadd.f32 %v1315, %v2488
      %v2899 = vadd.f32 %v1316, %v2493
      %v2900 = vadd.f32 %v1317, %v2498
      %v2901 = vadd.f32 %v1318, %v2503
      %v2902 = vadd.f32 %v1319, %v2508
      %v2903 = vadd.f32 %v1320, %v2513
      %v2904 = vadd.f32 %v1321, %v2518
      %v2905 = vadd.f32 %v1322, %v2523
      %v2906 = vadd.f32 %v1323, %v2528
      %v2907 = vadd.f32 %v1324, %v2533
      %v2908 = vadd.f32 %v1325, %v2538
      %v2909 = vadd.f32 %v1326, %v2543
      %v2910 = vadd.f32 %v1327, %v2548
      %v2911 = vadd.f32 %v1328, %v2553
      %v2912 = vadd.f32 %v1329, %v2558
      %v2913 = vadd.f32 %v1330, %v2563
      %v2914 = vadd.f32 %v1331, %v2568
      %v2915 = vadd.f32 %v1332, %v2573
      %v2916 = vadd.f32 %v1333, %v2578
      %v2917 = vadd.f32 %v1334, %v2583
      %v2918 = vadd.f32 %v1335, %v2588
      %v2919 = vadd.f32 %v1336, %v2593
      %v2920 = vadd.f32 %v1337, %v2598
      %v2921 = vadd.f32 %v1338, %v2603
      %v2922 = vadd.f32 %v1339, %v2608
      %v2923 = vadd.f32 %v1340, %v2613
      %v2924 = vadd.f32 %v1341, %v2618
      %v2925 = vadd.f32 %v1342, %v2623
      %v2926 = vadd.f32 %v1343, %v2628
      %v2927 = vadd.f32 %v1344, %v2633
      %v2928 = vadd.f32 %v1345, %v2638
      %v2929 = vadd.f32 %v1346, %v2643
      %v2930 = vadd.f32 %v1347, %v2648
      %v2931 = vadd.f32 %v1348, %v2653
      %v2932 = vadd.f32 %v1349, %v2658
      %v2933 = vadd.f32 %v1350, %v2663
      %v2934 = vadd.f32 %v1351, %v2668
      %v2935 = vadd.f32 %v1352, %v2673
      %v2936 = vadd.f32 %v1353, %v2678
      %v2937 = vadd.f32 %v1354, %v2683
      %v2938 = vadd.f32 %v1355, %v2688
      %v2939 = vadd.f32 %v1356, %v2693
      %v2940 = vadd.f32 %v1357, %v2698
      %v2941 = vadd.f32 %v1358, %v2703
      %v2942 = vadd.f32 %v1359, %v2708
      %v2943 = vadd.f32 %v1360, %v2713
      %v2944 = vadd.f32 %v1361, %v2718
      %v2945 = vadd.f32 %v1362, %v2723
      %v2946 = vadd.f32 %v1363, %v2728
      %v2947 = vadd.f32 %v1364, %v2733
      %v2948 = vadd.f32 %v1365, %v2738
      %v2949 = vadd.f32 %v1366, %v2743
      %v2950 = vadd.f32 %v1367, %v2748
      %v2951 = vadd.f32 %v1368, %v2753
      %v2952 = vadd.f32 %v1369, %v2758
      %v2953 = vadd.f32 %v1370, %v2763
      %v2954 = vadd.f32 %v1371, %v2768
      %v2955 = vadd.f32 %v1372, %v2773
      %v2956 = vadd.f32 %v1373, %v2778
      %v2957 = vadd.f32 %v1374, %v2783
      %v2958 = vadd.f32 %v1375, %v2788
      %v2959 = vadd.f32 %v1376, %v2793
      %v2960 = vadd.f32 %v1377, %v2798
      %v2961 = vadd.f32 %v1378, %v2803
      %v2962 = vadd.f32 %v1379, %v2808
      %v2963 = vadd.f32 %v1380, %v2813
      %v2964 = vadd.f32 %v1381, %v2818
      %v2965 = vadd.f32 %v1382, %v2823
      %v2966 = vadd.f32 %v1383, %v2828
      %v2967 = vadd.f32 %v1384, %v2833
      %v2968 = vadd.f32 %v1385, %v2838
      %v2969 = vadd.f32 %v1386, %v2843
      %v2970 = vadd.f32 %v1387, %v2848
      %v2971 = vadd.f32 %v1388, %v2853
      %v2972 = vadd.f32 %v1389, %v2858
      %v2973 = vadd.f32 %v1390, %v2863
      %v2974 = vadd.f32 %v1391, %v2868
      %v2975 = vadd.f32 %v1392, %v2873
      %v2976 = vadd.f32 %v1393, %v2878
      %2977 = vst [vmem:[%s253] sm:$0xff] %v2881
      %2978 = vst [vmem:[%s253 + $0x8] sm:$0xff] %v2882
      %2979 = vst [vmem:[%s253 + $0x10] sm:$0xff] %v2883
      %2980 = vst [vmem:[%s253 + $0x18] sm:$0xff] %v2884
      %2981 = vst [vmem:[%s253 + $0x20] sm:$0xff] %v2885
      %2982 = vst [vmem:[%s253 + $0x28] sm:$0xff] %v2886
      %2983 = vst [vmem:[%s253 + $0x30] sm:$0xff] %v2887
      %2984 = vst [vmem:[%s253 + $0x38] sm:$0xff] %v2888
      %2985 = vst [vmem:[%s253 + $0x40] sm:$0xff] %v2889
      %2986 = vst [vmem:[%s253 + $0x48] sm:$0xff] %v2890
      %2987 = vst [vmem:[%s253 + $0x50] sm:$0xff] %v2891
      %2988 = vst [vmem:[%s253 + $0x58] sm:$0xff] %v2892
      %2989 = vst [vmem:[%s253 + $0x60] sm:$0xff] %v2893
      %2990 = vst [vmem:[%s253 + $0x68] sm:$0xff] %v2894
      %2991 = vst [vmem:[%s253 + $0x70] sm:$0xff] %v2895
      %2992 = vst [vmem:[%s253 + $0x78] sm:$0xff] %v2896
      %2993 = vst [vmem:[%s253 + $0x80] sm:$0xff] %v2897
      %2994 = vst [vmem:[%s253 + $0x88] sm:$0xff] %v2898
      %2995 = vst [vmem:[%s253 + $0x90] sm:$0xff] %v2899
      %2996 = vst [vmem:[%s253 + $0x98] sm:$0xff] %v2900
      %2997 = vst [vmem:[%s253 + $0xa0] sm:$0xff] %v2901
      %2998 = vst [vmem:[%s253 + $0xa8] sm:$0xff] %v2902
      %2999 = vst [vmem:[%s253 + $0xb0] sm:$0xff] %v2903
      %3000 = vst [vmem:[%s253 + $0xb8] sm:$0xff] %v2904
      %3001 = vst [vmem:[%s253 + $0xc0] sm:$0xff] %v2905
      %3002 = vst [vmem:[%s253 + $0xc8] sm:$0xff] %v2906
      %3003 = vst [vmem:[%s253 + $0xd0] sm:$0xff] %v2907
      %3004 = vst [vmem:[%s253 + $0xd8] sm:$0xff] %v2908
      %3005 = vst [vmem:[%s253 + $0xe0] sm:$0xff] %v2909
      %3006 = vst [vmem:[%s253 + $0xe8] sm:$0xff] %v2910
      %3007 = vst [vmem:[%s253 + $0xf0] sm:$0xff] %v2911
      %3008 = vst [vmem:[%s253 + $0xf8] sm:$0xff] %v2912
      %3009 = vst [vmem:[%s253 + $0x100] sm:$0xff] %v2913
      %3010 = vst [vmem:[%s253 + $0x108] sm:$0xff] %v2914
      %3011 = vst [vmem:[%s253 + $0x110] sm:$0xff] %v2915
      %3012 = vst [vmem:[%s253 + $0x118] sm:$0xff] %v2916
      %3013 = vst [vmem:[%s253 + $0x120] sm:$0xff] %v2917
      %3014 = vst [vmem:[%s253 + $0x128] sm:$0xff] %v2918
      %3015 = vst [vmem:[%s253 + $0x130] sm:$0xff] %v2919
      %3016 = vst [vmem:[%s253 + $0x138] sm:$0xff] %v2920
      %3017 = vst [vmem:[%s253 + $0x140] sm:$0xff] %v2921
      %3018 = vst [vmem:[%s253 + $0x148] sm:$0xff] %v2922
      %3019 = vst [vmem:[%s253 + $0x150] sm:$0xff] %v2923
      %3020 = vst [vmem:[%s253 + $0x158] sm:$0xff] %v2924
      %3021 = vst [vmem:[%s253 + $0x160] sm:$0xff] %v2925
      %3022 = vst [vmem:[%s253 + $0x168] sm:$0xff] %v2926
      %3023 = vst [vmem:[%s253 + $0x170] sm:$0xff] %v2927
      %3024 = vst [vmem:[%s253 + $0x178] sm:$0xff] %v2928
      %3025 = vst [vmem:[%s253 + $0x180] sm:$0xff] %v2929
      %3026 = vst [vmem:[%s253 + $0x188] sm:$0xff] %v2930
      %3027 = vst [vmem:[%s253 + $0x190] sm:$0xff] %v2931
      %3028 = vst [vmem:[%s253 + $0x198] sm:$0xff] %v2932
      %3029 = vst [vmem:[%s253 + $0x1a0] sm:$0xff] %v2933
      %3030 = vst [vmem:[%s253 + $0x1a8] sm:$0xff] %v2934
      %3031 = vst [vmem:[%s253 + $0x1b0] sm:$0xff] %v2935
      %3032 = vst [vmem:[%s253 + $0x1b8] sm:$0xff] %v2936
      %3033 = vst [vmem:[%s253 + $0x1c0] sm:$0xff] %v2937
      %3034 = vst [vmem:[%s253 + $0x1c8] sm:$0xff] %v2938
      %3035 = vst [vmem:[%s253 + $0x1d0] sm:$0xff] %v2939
      %3036 = vst [vmem:[%s253 + $0x1d8] sm:$0xff] %v2940
      %3037 = vst [vmem:[%s253 + $0x1e0] sm:$0xff] %v2941
      %3038 = vst [vmem:[%s253 + $0x1e8] sm:$0xff] %v2942
      %3039 = vst [vmem:[%s253 + $0x1f0] sm:$0xff] %v2943
      %3040 = vst [vmem:[%s253 + $0x1f8] sm:$0xff] %v2944
      %3041 = vst [vmem:[%s253 + $0x200] sm:$0xff] %v2945
      %3042 = vst [vmem:[%s253 + $0x208] sm:$0xff] %v2946
      %3043 = vst [vmem:[%s253 + $0x210] sm:$0xff] %v2947
      %3044 = vst [vmem:[%s253 + $0x218] sm:$0xff] %v2948
      %3045 = vst [vmem:[%s253 + $0x220] sm:$0xff] %v2949
      %3046 = vst [vmem:[%s253 + $0x228] sm:$0xff] %v2950
      %3047 = vst [vmem:[%s253 + $0x230] sm:$0xff] %v2951
      %3048 = vst [vmem:[%s253 + $0x238] sm:$0xff] %v2952
      %3049 = vst [vmem:[%s253 + $0x240] sm:$0xff] %v2953
      %3050 = vst [vmem:[%s253 + $0x248] sm:$0xff] %v2954
      %3051 = vst [vmem:[%s253 + $0x250] sm:$0xff] %v2955
      %3052 = vst [vmem:[%s253 + $0x258] sm:$0xff] %v2956
      %3053 = vst [vmem:[%s253 + $0x260] sm:$0xff] %v2957
      %3054 = vst [vmem:[%s253 + $0x268] sm:$0xff] %v2958
      %3055 = vst [vmem:[%s253 + $0x270] sm:$0xff] %v2959
      %3056 = vst [vmem:[%s253 + $0x278] sm:$0xff] %v2960
      %3057 = vst [vmem:[%s253 + $0x280] sm:$0xff] %v2961
      %3058 = vst [vmem:[%s253 + $0x288] sm:$0xff] %v2962
      %3059 = vst [vmem:[%s253 + $0x290] sm:$0xff] %v2963
      %3060 = vst [vmem:[%s253 + $0x298] sm:$0xff] %v2964
      %3061 = vst [vmem:[%s253 + $0x2a0] sm:$0xff] %v2965
      %3062 = vst [vmem:[%s253 + $0x2a8] sm:$0xff] %v2966
      %3063 = vst [vmem:[%s253 + $0x2b0] sm:$0xff] %v2967
      %3064 = vst [vmem:[%s253 + $0x2b8] sm:$0xff] %v2968
      %3065 = vst [vmem:[%s253 + $0x2c0] sm:$0xff] %v2969
      %3066 = vst [vmem:[%s253 + $0x2c8] sm:$0xff] %v2970
      %3067 = vst [vmem:[%s253 + $0x2d0] sm:$0xff] %v2971
      %3068 = vst [vmem:[%s253 + $0x2d8] sm:$0xff] %v2972
      %3069 = vst [vmem:[%s253 + $0x2e0] sm:$0xff] %v2973
      %3070 = vst [vmem:[%s253 + $0x2e8] sm:$0xff] %v2974
      %3071 = vst [vmem:[%s253 + $0x2f0] sm:$0xff] %v2975
      %3072 = vst [vmem:[%s253 + $0x2f8] sm:$0xff] %v2976
      %s3073 = smul.u32 96, %s17
      %p3074 = scmp.lt.s32.totalorder %s3073, 191
      %s3075 = scalar_select %p3074, %s3073, 191
      %s3076 = smul.addr %s3075, 8
      %s3077 = scalar_lea.vmem %s6, %s3076
      // Predicated region
      $region45: #{fixmatch_forward.2} parent=43 // pred_check
        %p3078 = pneg %p166
      $region46: #{fixmatch_forward.2} parent=43 // pred_check_branch
        %3080 = sbr.rel (%p3078) target = $region48
      $region47: #{fixmatch_forward.2} parent=43 // pred_region
        %s3081 = smul.u32 96, %s17
      $region48: #{fixmatch_forward.2} parent=43 // pred_fallthru
        _
    $region44: #{fixmatch_forward.2} parent=5 // pred_fallthru
      _
    %p3082 = scmp.le.s32.totalorder 2, %s12
    // Predicated region
    $region49: #{fixmatch_forward.2} parent=5 // pred_check
      %p3083 = pneg %p3082
    $region50: #{fixmatch_forward.2} parent=5 // pred_check_branch
      %3085 = sbr.rel (%p3083) target = $region52
    $region51: #{fixmatch_forward.2} parent=5 // pred_region
      %s3086 = ssub.s32 %s12, 2
      // Predicated region
      $region53: #{fixmatch_forward.2} parent=51 // pred_check
        %p3087 = pneg %p172
      $region54: #{fixmatch_forward.2} parent=51 // pred_check_branch
        %3089 = sbr.rel (%p3087) target = $region56
      $region55: #{fixmatch_forward.2} parent=51 // pred_region
        %s3090 = smul.u32 96, %s18
        %p3091 = scmp.lt.s32.totalorder %s3090, 191
        %s3092 = scalar_select %p3091, %s3090, 191
        %s3093 = smul.addr %s3092, 8
        %s3094 = scalar_lea.vmem %s6, %s3093
      $region56: #{fixmatch_forward.2} parent=51 // pred_fallthru
        _
    $region52: #{fixmatch_forward.2} parent=5 // pred_fallthru
      _
  $region6: #{fixmatch_forward.2} parent=0 // loop_footer
    %s16 = sadd.s32 1, %s12
  $region7: #{fixmatch_forward.2} parent=0 // loop_footer_branch
    %11 = sbr.rel target = $region3
  $region8: #{fixmatch_forward.2} parent=0 // loop_exit
    _

</llo_original>
